<compile_context>
chip_gen: v6e
topology: v6e:2x2x1
jax: 0.10.0
libtpu: 0.0.40
codegen_flags: <defaults>
</compile_context>

<pallas_src>
import functools

import jax
import jax.numpy as jnp
from jax.experimental import pallas as pl
from jax.experimental.pallas import tpu as pltpu


# ----------------------------------------------------------------------------
# Helpers
# ----------------------------------------------------------------------------
def _layer_norm(x, gamma, beta, eps=1e-6):
    mean = jnp.mean(x, axis=-1, keepdims=True)
    var = jnp.mean((x - mean) ** 2, axis=-1, keepdims=True)
    return (x - mean) * jax.lax.rsqrt(var + eps) * gamma + beta


# ----------------------------------------------------------------------------
# Pallas kernel: one decoder layer step for one block of batch elements.
# Grid = (batch_blocks, layer); the running activation is carried across the
# layer axis inside out_ref (resident output block).
# ----------------------------------------------------------------------------
def decoder_kernel(
    trg_ref, enc_ref,
    wq_ref, wk_ref, wv_ref, wo_ref, ln1g_ref, ln1b_ref,
    w1_ref, w2_ref, ln2g_ref, ln2b_ref,
    out_ref,
    h1_scr,
    *, n_head, n_layers,
):
    layer = pl.program_id(1)

    # Initialize the layer-carry (held in out_ref) with the decoder input.
    @pl.when(layer == 0)
    def _():
        out_ref[...] = trg_ref[...].astype(out_ref.dtype)

    bb, Lq, D = out_ref.shape
    Lk = enc_ref.shape[1]
    d_k = D // n_head
    scale = 1.0 / (d_k ** 0.5)
    M = bb * Lq

    # Flatten the batch block for all dense matmuls -> (bb*L, D) slabs.
    x = out_ref[...].astype(jnp.float32).reshape(M, D)         # layer carry
    e = enc_ref[...].astype(jnp.float32).reshape(bb * Lk, D)

    # --- multi-head cross attention ------------------------------------------
    # Full-width QKV projections on the flattened slab (one big MXU matmul
    # each instead of per-element / per-head thin matmuls).
    q = jnp.dot(x, wq_ref[...], preferred_element_type=jnp.float32) * scale
    k = jnp.dot(e, wk_ref[...], preferred_element_type=jnp.float32)
    v = jnp.dot(e, wv_ref[...], preferred_element_type=jnp.float32)

    # Per (batch element, head) attention.  Head contexts are concatenated
    # back into a (M, D) context and projected by Wo ONCE.
    # TODO(synk): for long Lk, block over Lk flash-style (online softmax) and
    #             use lax.fori_loop to bound live ranges.
    ctx_rows = []
    for b in range(bb):
        rq = slice(b * Lq, (b + 1) * Lq)
        rk = slice(b * Lk, (b + 1) * Lk)
        head_ctx = []
        for h in range(n_head):
            cs = slice(h * d_k, (h + 1) * d_k)
            s = jax.lax.dot_general(
                q[rq, cs], k[rk, cs], (((1,), (1,)), ((), ())),
                preferred_element_type=jnp.float32)            # (Lq, Lk)
            s = s - jnp.max(s, axis=-1, keepdims=True)
            p = jnp.exp(s)
            p = p / jnp.sum(p, axis=-1, keepdims=True)         # exact softmax
            head_ctx.append(
                jnp.dot(p, v[rk, cs], preferred_element_type=jnp.float32))
        ctx_rows.append(jnp.concatenate(head_ctx, axis=-1))     # (Lq, D)
    ctx = jnp.concatenate(ctx_rows, axis=0)                     # (M, D)

    # Single output projection for the whole block.
    attn = jnp.dot(ctx, wo_ref[...], preferred_element_type=jnp.float32)
    y = _layer_norm(attn + x, ln1g_ref[...], ln1b_ref[...])

    # --- position-wise feed forward ------------------------------------------
    h1 = jnp.dot(y, w1_ref[...], preferred_element_type=jnp.float32)
    is_last = layer == n_layers - 1

    # Gate the activation: Tanh only on the final layer, ReLU otherwise
    # (no tanh computed-and-discarded on every layer).
    @pl.when(is_last)
    def _():
        h1_scr[...] = jnp.tanh(h1)

    @pl.when(jnp.logical_not(is_last))
    def _():
        h1_scr[...] = jnp.maximum(h1, 0.0)

    h2 = jnp.dot(h1_scr[...], w2_ref[...], preferred_element_type=jnp.float32)
    z = _layer_norm(h2 + y, ln2g_ref[...], ln2b_ref[...])

    # out_ref doubles as the layer carry; HBM writeback happens only when the
    # batch-block index changes (once per batch block).
    out_ref[...] = z.reshape(bb, Lq, D).astype(out_ref.dtype)


# ----------------------------------------------------------------------------
# Wrapper: one pallas_call for the whole decoder stack
# ----------------------------------------------------------------------------
def decoder_pallas(trg_seq, enc_output, stacked, n_head, *,
                   block_b=None, vmem_limit_bytes=None):
    B, Lq, D = trg_seq.shape
    _, Lk, _ = enc_output.shape
    n_layers = stacked["wq"].shape[0]
    d_inner = stacked["w1"].shape[-1]
    assert D % n_head == 0

    if block_b is None:
        # Biggest block that still leaves >= 2 parallel batch blocks
        # (keeps both v7x TensorCores busy); falls back to 1 for odd B.
        block_b = max(B // 2, 1) if B % 2 == 0 else 1
    assert B % block_b == 0

    kern = functools.partial(decoder_kernel, n_head=n_head, n_layers=n_layers)

    # activations: block indexed by batch block, resident across the layer axis
    act_spec = lambda L: pl.BlockSpec((block_b, L, D), lambda b, l: (b, 0, 0))
    # weights: stacked over layers, block indexed by the layer grid axis
    w_spec = lambda r, c: pl.BlockSpec((pl.Squeezed(), r, c),
                                       lambda b, l: (l, 0, 0))

    cp_kwargs = dict(dimension_semantics=("parallel", "arbitrary"))
    if vmem_limit_bytes is not None:
        cp_kwargs["vmem_limit_bytes"] = vmem_limit_bytes

    return pl.pallas_call(
        kern,
        out_shape=jax.ShapeDtypeStruct((B, Lq, D), trg_seq.dtype),
        grid=(B // block_b, n_layers),
        in_specs=[
            act_spec(Lq),               # trg
            act_spec(Lk),               # enc
            w_spec(D, D),               # wq
            w_spec(D, D),               # wk
            w_spec(D, D),               # wv
            w_spec(D, D),               # wo
            w_spec(1, D),               # ln1 gamma
            w_spec(1, D),               # ln1 beta
            w_spec(D, d_inner),         # ffn w1
            w_spec(d_inner, D),         # ffn w2
            w_spec(1, D),               # ln2 gamma
            w_spec(1, D),               # ln2 beta
        ],
        out_specs=act_spec(Lq),
        scratch_shapes=[pltpu.VMEM((block_b * Lq, d_inner), jnp.float32)],
        compiler_params=pltpu.CompilerParams(**cp_kwargs),
    )(trg_seq, enc_output, stacked["wq"], stacked["wk"], stacked["wv"],
      stacked["wo"], stacked["ln1g"], stacked["ln1b"], stacked["w1"],
      stacked["w2"], stacked["ln2g"], stacked["ln2b"])


# ----------------------------------------------------------------------------
# Pure-JAX reference (same math) for correctness check
# ----------------------------------------------------------------------------
def _ref_layer(x, e, p, act_name, n_head):
    B, Lq, D = x.shape
    d_k = D // n_head
    scale = 1.0 / (d_k ** 0.5)
    q = (x @ p["wq"]).reshape(B, Lq, n_head, d_k).transpose(0, 2, 1, 3) * scale
    k = (e @ p["wk"]).reshape(B, -1, n_head, d_k).transpose(0, 2, 1, 3)
    v = (e @ p["wv"]).reshape(B, -1, n_head, d_k).transpose(0, 2, 1, 3)
    s = jnp.einsum("bhqd,bhkd->bhqk", q, k)
    a = jax.nn.softmax(s, axis=-1)
    o = jnp.einsum("bhqk,bhkd->bhqd", a, v).transpose(0, 2, 1, 3).reshape(B, Lq, D)
    y = _layer_norm(o @ p["wo"] + x, p["ln1g"][0], p["ln1b"][0])
    h1 = y @ p["w1"]
    h1 = jnp.tanh(h1) if act_name == "tanh" else jnp.maximum(h1, 0.0)
    return _layer_norm(h1 @ p["w2"] + y, p["ln2g"][0], p["ln2b"][0])


def decoder_ref(trg, enc, layer_params, n_head):
    out = trg
    n_layers = len(layer_params)
    for i, p in enumerate(layer_params):
        act = "tanh" if i == n_layers - 1 else "relu"
        out = _ref_layer(out, enc, p, act, n_head)
    return out


# ----------------------------------------------------------------------------
# Main
# ----------------------------------------------------------------------------
if __name__ == "__main__":
    # Small shapes consistent with the module's forward; d_model=128 keeps the
    # lane axis dense (no masked partial stores).
    B, Lq, Lk = 4, 8, 8
    d_model, n_head, d_inner, n_layers = 128, 8, 256, 2

    key = jax.random.PRNGKey(0)
    key, k_trg, k_enc = jax.random.split(key, 3)
    trg_seq = jax.random.normal(k_trg, (B, Lq, d_model), jnp.float32)
    enc_output = jax.random.normal(k_enc, (B, Lk, d_model), jnp.float32)

    def init_layer(key):
        ks = jax.random.split(key, 6)
        s = 0.1
        return {
            "wq": s * jax.random.normal(ks[0], (d_model, d_model), jnp.float32),
            "wk": s * jax.random.normal(ks[1], (d_model, d_model), jnp.float32),
            "wv": s * jax.random.normal(ks[2], (d_model, d_model), jnp.float32),
            "wo": s * jax.random.normal(ks[3], (d_model, d_model), jnp.float32),
            "ln1g": jnp.ones((1, d_model), jnp.float32),
            "ln1b": jnp.zeros((1, d_model), jnp.float32),
            "w1": s * jax.random.normal(ks[4], (d_model, d_inner), jnp.float32),
            "w2": s * jax.random.normal(ks[5], (d_inner, d_model), jnp.float32),
            "ln2g": jnp.ones((1, d_model), jnp.float32),
            "ln2b": jnp.zeros((1, d_model), jnp.float32),
        }

    layer_keys = jax.random.split(key, n_layers)
    layer_params = [init_layer(k) for k in layer_keys]

    # Stack per-layer parameters along a leading layer axis for the fused call.
    stacked = {name: jnp.stack([p[name] for p in layer_params])
               for name in layer_params[0]}

    out = decoder_pallas(trg_seq, enc_output, stacked, n_head, block_b=2)
    out = jax.block_until_ready(out)

    ref = decoder_ref(trg_seq, enc_output, layer_params, n_head)
    assert out.shape == (B, Lq, d_model)
    assert jnp.allclose(out, ref, atol=2e-3, rtol=2e-3), \
        f"max err {jnp.max(jnp.abs(out - ref))}"

    print("KERNEL_OK")
</pallas_src>

<mosaic_0001>
module attributes {stable_mosaic.version = 11 : i64} {
  func.func @decoder_kernel(%arg0: i32, %arg1: i32, %arg2: memref<2x8x128xf32, #tpu.memory_space<vmem>>, %arg3: memref<2x8x128xf32, #tpu.memory_space<vmem>>, %arg4: memref<1x128x128xf32, #tpu.memory_space<vmem>>, %arg5: memref<1x128x128xf32, #tpu.memory_space<vmem>>, %arg6: memref<1x128x128xf32, #tpu.memory_space<vmem>>, %arg7: memref<1x128x128xf32, #tpu.memory_space<vmem>>, %arg8: memref<1x1x128xf32, #tpu.memory_space<vmem>>, %arg9: memref<1x1x128xf32, #tpu.memory_space<vmem>>, %arg10: memref<1x128x256xf32, #tpu.memory_space<vmem>>, %arg11: memref<1x256x128xf32, #tpu.memory_space<vmem>>, %arg12: memref<1x1x128xf32, #tpu.memory_space<vmem>>, %arg13: memref<1x1x128xf32, #tpu.memory_space<vmem>>, %arg14: memref<2x8x128xf32, #tpu.memory_space<vmem>>, %arg15: memref<16x256xf32, #tpu.memory_space<vmem>>) attributes {dimension_semantics = [#tpu.dimension_semantics<parallel>, #tpu.dimension_semantics<arbitrary>], iteration_bounds = array<i64: 2, 2>, scalar_prefetch = 0 : i64, scratch_operands = 1 : i64, tpu.core_type = #tpu.core_type<tc>, window_params = [{transform_indices = @transform_0, window_bounds = array<i64: 2, 8, 128>}, {transform_indices = @transform_1, window_bounds = array<i64: 2, 8, 128>}, {transform_indices = @transform_2, window_bounds = array<i64: 1, 128, 128>}, {transform_indices = @transform_3, window_bounds = array<i64: 1, 128, 128>}, {transform_indices = @transform_4, window_bounds = array<i64: 1, 128, 128>}, {transform_indices = @transform_5, window_bounds = array<i64: 1, 128, 128>}, {transform_indices = @transform_6, window_bounds = array<i64: 1, 1, 128>}, {transform_indices = @transform_7, window_bounds = array<i64: 1, 1, 128>}, {transform_indices = @transform_8, window_bounds = array<i64: 1, 128, 256>}, {transform_indices = @transform_9, window_bounds = array<i64: 1, 256, 128>}, {transform_indices = @transform_10, window_bounds = array<i64: 1, 1, 128>}, {transform_indices = @transform_11, window_bounds = array<i64: 1, 1, 128>}, {transform_indices = @transform_12, window_bounds = array<i64: 2, 8, 128>}]} {
    %c0_i32 = arith.constant 0 : i32
    %0 = arith.cmpi eq, %arg1, %c0_i32 : i32
    %1 = arith.extui %0 : i1 to i32
    %c0_i32_0 = arith.constant 0 : i32
    %2 = arith.cmpi ne, %1, %c0_i32_0 : i32
    scf.if %2 {
      %c0_123 = arith.constant 0 : index
      %c0_124 = arith.constant 0 : index
      %c0_125 = arith.constant 0 : index
      %317 = vector.load %arg2[%c0_123, %c0_124, %c0_125] : memref<2x8x128xf32, #tpu.memory_space<vmem>>, vector<2x8x128xf32>
      %c0_126 = arith.constant 0 : index
      %c0_127 = arith.constant 0 : index
      %c0_128 = arith.constant 0 : index
      %318 = vector.load %arg14[%c0_126, %c0_127, %c0_128] : memref<2x8x128xf32, #tpu.memory_space<vmem>>, vector<2x8x128xf32>
      tpu.vector_store %arg14[%c0_126, %c0_127, %c0_128], %317 {strides = array<i32>} : memref<2x8x128xf32, #tpu.memory_space<vmem>>, vector<2x8x128xf32>,
    } else {
    }
    %c0 = arith.constant 0 : index
    %c0_1 = arith.constant 0 : index
    %c0_2 = arith.constant 0 : index
    %3 = vector.load %arg14[%c0, %c0_1, %c0_2] : memref<2x8x128xf32, #tpu.memory_space<vmem>>, vector<2x8x128xf32>
    %4 = vector.shape_cast %3 : vector<2x8x128xf32> to vector<16x128xf32>
    %c0_3 = arith.constant 0 : index
    %c0_4 = arith.constant 0 : index
    %c0_5 = arith.constant 0 : index
    %5 = vector.load %arg3[%c0_3, %c0_4, %c0_5] : memref<2x8x128xf32, #tpu.memory_space<vmem>>, vector<2x8x128xf32>
    %6 = vector.shape_cast %5 : vector<2x8x128xf32> to vector<16x128xf32>
    %c0_6 = arith.constant 0 : index
    %c0_7 = arith.constant 0 : index
    %c0_8 = arith.constant 0 : index
    %7 = vector.load %arg4[%c0_6, %c0_7, %c0_8] : memref<1x128x128xf32, #tpu.memory_space<vmem>>, vector<1x128x128xf32>
    %8 = vector.shape_cast %7 : vector<1x128x128xf32> to vector<128x128xf32>
    %cst = arith.constant dense<0.000000e+00> : vector<16x128xf32>
    %9 = tpu.matmul %4, %8, %cst {dimension_numbers = #tpu.dot_dimension_numbers<[1], [0], [0], [1], [0, 0, 1, 1], [], []>} : vector<16x128xf32>, vector<128x128xf32>, vector<16x128xf32> -> vector<16x128xf32>
    %cst_9 = arith.constant 2.500000e-01 : f32
    %10 = vector.broadcast %cst_9 : f32 to vector<16x128xf32>
    %11 = arith.mulf %9, %10 : vector<16x128xf32>
    %c0_10 = arith.constant 0 : index
    %c0_11 = arith.constant 0 : index
    %c0_12 = arith.constant 0 : index
    %12 = vector.load %arg5[%c0_10, %c0_11, %c0_12] : memref<1x128x128xf32, #tpu.memory_space<vmem>>, vector<1x128x128xf32>
    %13 = vector.shape_cast %12 : vector<1x128x128xf32> to vector<128x128xf32>
    %cst_13 = arith.constant dense<0.000000e+00> : vector<16x128xf32>
    %14 = tpu.matmul %6, %13, %cst_13 {dimension_numbers = #tpu.dot_dimension_numbers<[1], [0], [0], [1], [0, 0, 1, 1], [], []>} : vector<16x128xf32>, vector<128x128xf32>, vector<16x128xf32> -> vector<16x128xf32>
    %c0_14 = arith.constant 0 : index
    %c0_15 = arith.constant 0 : index
    %c0_16 = arith.constant 0 : index
    %15 = vector.load %arg6[%c0_14, %c0_15, %c0_16] : memref<1x128x128xf32, #tpu.memory_space<vmem>>, vector<1x128x128xf32>
    %16 = vector.shape_cast %15 : vector<1x128x128xf32> to vector<128x128xf32>
    %cst_17 = arith.constant dense<0.000000e+00> : vector<16x128xf32>
    %17 = tpu.matmul %6, %16, %cst_17 {dimension_numbers = #tpu.dot_dimension_numbers<[1], [0], [0], [1], [0, 0, 1, 1], [], []>} : vector<16x128xf32>, vector<128x128xf32>, vector<16x128xf32> -> vector<16x128xf32>
    %18 = vector.extract_strided_slice %11 {offsets = [0, 0], sizes = [8, 16], strides = [1, 1]} : vector<16x128xf32> to vector<8x16xf32>
    %19 = vector.extract_strided_slice %14 {offsets = [0, 0], sizes = [8, 16], strides = [1, 1]} : vector<16x128xf32> to vector<8x16xf32>
    %cst_18 = arith.constant dense<0.000000e+00> : vector<8x8xf32>
    %20 = tpu.matmul %18, %19, %cst_18 {dimension_numbers = #tpu.dot_dimension_numbers<[1], [1], [0], [0], [0, 0, 1, 0], [], []>} : vector<8x16xf32>, vector<8x16xf32>, vector<8x8xf32> -> vector<8x8xf32>
    %cst_19 = arith.constant dense<0xFF800000> : vector<8xf32>
    %21 = vector.multi_reduction <maximumf>, %20, %cst_19 [1] : vector<8x8xf32> to vector<8xf32>
    %22 = vector.shape_cast %21 : vector<8xf32> to vector<8x1xf32>
    %23 = vector.broadcast %22 : vector<8x1xf32> to vector<8x8xf32>
    %24 = arith.subf %20, %23 : vector<8x8xf32>
    %25 = math.exp %24 : vector<8x8xf32>
    %cst_20 = arith.constant dense<0.000000e+00> : vector<8xf32>
    %26 = vector.multi_reduction <add>, %25, %cst_20 [1] : vector<8x8xf32> to vector<8xf32>
    %27 = vector.shape_cast %26 : vector<8xf32> to vector<8x1xf32>
    %28 = vector.broadcast %27 : vector<8x1xf32> to vector<8x8xf32>
    %29 = arith.divf %25, %28 : vector<8x8xf32>
    %30 = vector.extract_strided_slice %17 {offsets = [0, 0], sizes = [8, 16], strides = [1, 1]} : vector<16x128xf32> to vector<8x16xf32>
    %cst_21 = arith.constant dense<0.000000e+00> : vector<8x16xf32>
    %31 = tpu.matmul %29, %30, %cst_21 {dimension_numbers = #tpu.dot_dimension_numbers<[1], [0], [0], [1], [0, 0, 1, 1], [], []>} : vector<8x8xf32>, vector<8x16xf32>, vector<8x16xf32> -> vector<8x16xf32>
    %32 = vector.extract_strided_slice %11 {offsets = [0, 16], sizes = [8, 16], strides = [1, 1]} : vector<16x128xf32> to vector<8x16xf32>
    %33 = vector.extract_strided_slice %14 {offsets = [0, 16], sizes = [8, 16], strides = [1, 1]} : vector<16x128xf32> to vector<8x16xf32>
    %cst_22 = arith.constant dense<0.000000e+00> : vector<8x8xf32>
    %34 = tpu.matmul %32, %33, %cst_22 {dimension_numbers = #tpu.dot_dimension_numbers<[1], [1], [0], [0], [0, 0, 1, 0], [], []>} : vector<8x16xf32>, vector<8x16xf32>, vector<8x8xf32> -> vector<8x8xf32>
    %cst_23 = arith.constant dense<0xFF800000> : vector<8xf32>
    %35 = vector.multi_reduction <maximumf>, %34, %cst_23 [1] : vector<8x8xf32> to vector<8xf32>
    %36 = vector.shape_cast %35 : vector<8xf32> to vector<8x1xf32>
    %37 = vector.broadcast %36 : vector<8x1xf32> to vector<8x8xf32>
    %38 = arith.subf %34, %37 : vector<8x8xf32>
    %39 = math.exp %38 : vector<8x8xf32>
    %cst_24 = arith.constant dense<0.000000e+00> : vector<8xf32>
    %40 = vector.multi_reduction <add>, %39, %cst_24 [1] : vector<8x8xf32> to vector<8xf32>
    %41 = vector.shape_cast %40 : vector<8xf32> to vector<8x1xf32>
    %42 = vector.broadcast %41 : vector<8x1xf32> to vector<8x8xf32>
    %43 = arith.divf %39, %42 : vector<8x8xf32>
    %44 = vector.extract_strided_slice %17 {offsets = [0, 16], sizes = [8, 16], strides = [1, 1]} : vector<16x128xf32> to vector<8x16xf32>
    %cst_25 = arith.constant dense<0.000000e+00> : vector<8x16xf32>
    %45 = tpu.matmul %43, %44, %cst_25 {dimension_numbers = #tpu.dot_dimension_numbers<[1], [0], [0], [1], [0, 0, 1, 1], [], []>} : vector<8x8xf32>, vector<8x16xf32>, vector<8x16xf32> -> vector<8x16xf32>
    %46 = vector.extract_strided_slice %11 {offsets = [0, 32], sizes = [8, 16], strides = [1, 1]} : vector<16x128xf32> to vector<8x16xf32>
    %47 = vector.extract_strided_slice %14 {offsets = [0, 32], sizes = [8, 16], strides = [1, 1]} : vector<16x128xf32> to vector<8x16xf32>
    %cst_26 = arith.constant dense<0.000000e+00> : vector<8x8xf32>
    %48 = tpu.matmul %46, %47, %cst_26 {dimension_numbers = #tpu.dot_dimension_numbers<[1], [1], [0], [0], [0, 0, 1, 0], [], []>} : vector<8x16xf32>, vector<8x16xf32>, vector<8x8xf32> -> vector<8x8xf32>
    %cst_27 = arith.constant dense<0xFF800000> : vector<8xf32>
    %49 = vector.multi_reduction <maximumf>, %48, %cst_27 [1] : vector<8x8xf32> to vector<8xf32>
    %50 = vector.shape_cast %49 : vector<8xf32> to vector<8x1xf32>
    %51 = vector.broadcast %50 : vector<8x1xf32> to vector<8x8xf32>
    %52 = arith.subf %48, %51 : vector<8x8xf32>
    %53 = math.exp %52 : vector<8x8xf32>
    %cst_28 = arith.constant dense<0.000000e+00> : vector<8xf32>
    %54 = vector.multi_reduction <add>, %53, %cst_28 [1] : vector<8x8xf32> to vector<8xf32>
    %55 = vector.shape_cast %54 : vector<8xf32> to vector<8x1xf32>
    %56 = vector.broadcast %55 : vector<8x1xf32> to vector<8x8xf32>
    %57 = arith.divf %53, %56 : vector<8x8xf32>
    %58 = vector.extract_strided_slice %17 {offsets = [0, 32], sizes = [8, 16], strides = [1, 1]} : vector<16x128xf32> to vector<8x16xf32>
    %cst_29 = arith.constant dense<0.000000e+00> : vector<8x16xf32>
    %59 = tpu.matmul %57, %58, %cst_29 {dimension_numbers = #tpu.dot_dimension_numbers<[1], [0], [0], [1], [0, 0, 1, 1], [], []>} : vector<8x8xf32>, vector<8x16xf32>, vector<8x16xf32> -> vector<8x16xf32>
    %60 = vector.extract_strided_slice %11 {offsets = [0, 48], sizes = [8, 16], strides = [1, 1]} : vector<16x128xf32> to vector<8x16xf32>
    %61 = vector.extract_strided_slice %14 {offsets = [0, 48], sizes = [8, 16], strides = [1, 1]} : vector<16x128xf32> to vector<8x16xf32>
    %cst_30 = arith.constant dense<0.000000e+00> : vector<8x8xf32>
    %62 = tpu.matmul %60, %61, %cst_30 {dimension_numbers = #tpu.dot_dimension_numbers<[1], [1], [0], [0], [0, 0, 1, 0], [], []>} : vector<8x16xf32>, vector<8x16xf32>, vector<8x8xf32> -> vector<8x8xf32>
    %cst_31 = arith.constant dense<0xFF800000> : vector<8xf32>
    %63 = vector.multi_reduction <maximumf>, %62, %cst_31 [1] : vector<8x8xf32> to vector<8xf32>
    %64 = vector.shape_cast %63 : vector<8xf32> to vector<8x1xf32>
    %65 = vector.broadcast %64 : vector<8x1xf32> to vector<8x8xf32>
    %66 = arith.subf %62, %65 : vector<8x8xf32>
    %67 = math.exp %66 : vector<8x8xf32>
    %cst_32 = arith.constant dense<0.000000e+00> : vector<8xf32>
    %68 = vector.multi_reduction <add>, %67, %cst_32 [1] : vector<8x8xf32> to vector<8xf32>
    %69 = vector.shape_cast %68 : vector<8xf32> to vector<8x1xf32>
    %70 = vector.broadcast %69 : vector<8x1xf32> to vector<8x8xf32>
    %71 = arith.divf %67, %70 : vector<8x8xf32>
    %72 = vector.extract_strided_slice %17 {offsets = [0, 48], sizes = [8, 16], strides = [1, 1]} : vector<16x128xf32> to vector<8x16xf32>
    %cst_33 = arith.constant dense<0.000000e+00> : vector<8x16xf32>
    %73 = tpu.matmul %71, %72, %cst_33 {dimension_numbers = #tpu.dot_dimension_numbers<[1], [0], [0], [1], [0, 0, 1, 1], [], []>} : vector<8x8xf32>, vector<8x16xf32>, vector<8x16xf32> -> vector<8x16xf32>
    %74 = vector.extract_strided_slice %11 {offsets = [0, 64], sizes = [8, 16], strides = [1, 1]} : vector<16x128xf32> to vector<8x16xf32>
    %75 = vector.extract_strided_slice %14 {offsets = [0, 64], sizes = [8, 16], strides = [1, 1]} : vector<16x128xf32> to vector<8x16xf32>
    %cst_34 = arith.constant dense<0.000000e+00> : vector<8x8xf32>
    %76 = tpu.matmul %74, %75, %cst_34 {dimension_numbers = #tpu.dot_dimension_numbers<[1], [1], [0], [0], [0, 0, 1, 0], [], []>} : vector<8x16xf32>, vector<8x16xf32>, vector<8x8xf32> -> vector<8x8xf32>
    %cst_35 = arith.constant dense<0xFF800000> : vector<8xf32>
    %77 = vector.multi_reduction <maximumf>, %76, %cst_35 [1] : vector<8x8xf32> to vector<8xf32>
    %78 = vector.shape_cast %77 : vector<8xf32> to vector<8x1xf32>
    %79 = vector.broadcast %78 : vector<8x1xf32> to vector<8x8xf32>
    %80 = arith.subf %76, %79 : vector<8x8xf32>
    %81 = math.exp %80 : vector<8x8xf32>
    %cst_36 = arith.constant dense<0.000000e+00> : vector<8xf32>
    %82 = vector.multi_reduction <add>, %81, %cst_36 [1] : vector<8x8xf32> to vector<8xf32>
    %83 = vector.shape_cast %82 : vector<8xf32> to vector<8x1xf32>
    %84 = vector.broadcast %83 : vector<8x1xf32> to vector<8x8xf32>
    %85 = arith.divf %81, %84 : vector<8x8xf32>
    %86 = vector.extract_strided_slice %17 {offsets = [0, 64], sizes = [8, 16], strides = [1, 1]} : vector<16x128xf32> to vector<8x16xf32>
    %cst_37 = arith.constant dense<0.000000e+00> : vector<8x16xf32>
    %87 = tpu.matmul %85, %86, %cst_37 {dimension_numbers = #tpu.dot_dimension_numbers<[1], [0], [0], [1], [0, 0, 1, 1], [], []>} : vector<8x8xf32>, vector<8x16xf32>, vector<8x16xf32> -> vector<8x16xf32>
    %88 = vector.extract_strided_slice %11 {offsets = [0, 80], sizes = [8, 16], strides = [1, 1]} : vector<16x128xf32> to vector<8x16xf32>
    %89 = vector.extract_strided_slice %14 {offsets = [0, 80], sizes = [8, 16], strides = [1, 1]} : vector<16x128xf32> to vector<8x16xf32>
    %cst_38 = arith.constant dense<0.000000e+00> : vector<8x8xf32>
    %90 = tpu.matmul %88, %89, %cst_38 {dimension_numbers = #tpu.dot_dimension_numbers<[1], [1], [0], [0], [0, 0, 1, 0], [], []>} : vector<8x16xf32>, vector<8x16xf32>, vector<8x8xf32> -> vector<8x8xf32>
    %cst_39 = arith.constant dense<0xFF800000> : vector<8xf32>
    %91 = vector.multi_reduction <maximumf>, %90, %cst_39 [1] : vector<8x8xf32> to vector<8xf32>
    %92 = vector.shape_cast %91 : vector<8xf32> to vector<8x1xf32>
    %93 = vector.broadcast %92 : vector<8x1xf32> to vector<8x8xf32>
    %94 = arith.subf %90, %93 : vector<8x8xf32>
    %95 = math.exp %94 : vector<8x8xf32>
    %cst_40 = arith.constant dense<0.000000e+00> : vector<8xf32>
    %96 = vector.multi_reduction <add>, %95, %cst_40 [1] : vector<8x8xf32> to vector<8xf32>
    %97 = vector.shape_cast %96 : vector<8xf32> to vector<8x1xf32>
    %98 = vector.broadcast %97 : vector<8x1xf32> to vector<8x8xf32>
    %99 = arith.divf %95, %98 : vector<8x8xf32>
    %100 = vector.extract_strided_slice %17 {offsets = [0, 80], sizes = [8, 16], strides = [1, 1]} : vector<16x128xf32> to vector<8x16xf32>
    %cst_41 = arith.constant dense<0.000000e+00> : vector<8x16xf32>
    %101 = tpu.matmul %99, %100, %cst_41 {dimension_numbers = #tpu.dot_dimension_numbers<[1], [0], [0], [1], [0, 0, 1, 1], [], []>} : vector<8x8xf32>, vector<8x16xf32>, vector<8x16xf32> -> vector<8x16xf32>
    %102 = vector.extract_strided_slice %11 {offsets = [0, 96], sizes = [8, 16], strides = [1, 1]} : vector<16x128xf32> to vector<8x16xf32>
    %103 = vector.extract_strided_slice %14 {offsets = [0, 96], sizes = [8, 16], strides = [1, 1]} : vector<16x128xf32> to vector<8x16xf32>
    %cst_42 = arith.constant dense<0.000000e+00> : vector<8x8xf32>
    %104 = tpu.matmul %102, %103, %cst_42 {dimension_numbers = #tpu.dot_dimension_numbers<[1], [1], [0], [0], [0, 0, 1, 0], [], []>} : vector<8x16xf32>, vector<8x16xf32>, vector<8x8xf32> -> vector<8x8xf32>
    %cst_43 = arith.constant dense<0xFF800000> : vector<8xf32>
    %105 = vector.multi_reduction <maximumf>, %104, %cst_43 [1] : vector<8x8xf32> to vector<8xf32>
    %106 = vector.shape_cast %105 : vector<8xf32> to vector<8x1xf32>
    %107 = vector.broadcast %106 : vector<8x1xf32> to vector<8x8xf32>
    %108 = arith.subf %104, %107 : vector<8x8xf32>
    %109 = math.exp %108 : vector<8x8xf32>
    %cst_44 = arith.constant dense<0.000000e+00> : vector<8xf32>
    %110 = vector.multi_reduction <add>, %109, %cst_44 [1] : vector<8x8xf32> to vector<8xf32>
    %111 = vector.shape_cast %110 : vector<8xf32> to vector<8x1xf32>
    %112 = vector.broadcast %111 : vector<8x1xf32> to vector<8x8xf32>
    %113 = arith.divf %109, %112 : vector<8x8xf32>
    %114 = vector.extract_strided_slice %17 {offsets = [0, 96], sizes = [8, 16], strides = [1, 1]} : vector<16x128xf32> to vector<8x16xf32>
    %cst_45 = arith.constant dense<0.000000e+00> : vector<8x16xf32>
    %115 = tpu.matmul %113, %114, %cst_45 {dimension_numbers = #tpu.dot_dimension_numbers<[1], [0], [0], [1], [0, 0, 1, 1], [], []>} : vector<8x8xf32>, vector<8x16xf32>, vector<8x16xf32> -> vector<8x16xf32>
    %116 = vector.extract_strided_slice %11 {offsets = [0, 112], sizes = [8, 16], strides = [1, 1]} : vector<16x128xf32> to vector<8x16xf32>
    %117 = vector.extract_strided_slice %14 {offsets = [0, 112], sizes = [8, 16], strides = [1, 1]} : vector<16x128xf32> to vector<8x16xf32>
    %cst_46 = arith.constant dense<0.000000e+00> : vector<8x8xf32>
    %118 = tpu.matmul %116, %117, %cst_46 {dimension_numbers = #tpu.dot_dimension_numbers<[1], [1], [0], [0], [0, 0, 1, 0], [], []>} : vector<8x16xf32>, vector<8x16xf32>, vector<8x8xf32> -> vector<8x8xf32>
    %cst_47 = arith.constant dense<0xFF800000> : vector<8xf32>
    %119 = vector.multi_reduction <maximumf>, %118, %cst_47 [1] : vector<8x8xf32> to vector<8xf32>
    %120 = vector.shape_cast %119 : vector<8xf32> to vector<8x1xf32>
    %121 = vector.broadcast %120 : vector<8x1xf32> to vector<8x8xf32>
    %122 = arith.subf %118, %121 : vector<8x8xf32>
    %123 = math.exp %122 : vector<8x8xf32>
    %cst_48 = arith.constant dense<0.000000e+00> : vector<8xf32>
    %124 = vector.multi_reduction <add>, %123, %cst_48 [1] : vector<8x8xf32> to vector<8xf32>
    %125 = vector.shape_cast %124 : vector<8xf32> to vector<8x1xf32>
    %126 = vector.broadcast %125 : vector<8x1xf32> to vector<8x8xf32>
    %127 = arith.divf %123, %126 : vector<8x8xf32>
    %128 = vector.extract_strided_slice %17 {offsets = [0, 112], sizes = [8, 16], strides = [1, 1]} : vector<16x128xf32> to vector<8x16xf32>
    %cst_49 = arith.constant dense<0.000000e+00> : vector<8x16xf32>
    %129 = tpu.matmul %127, %128, %cst_49 {dimension_numbers = #tpu.dot_dimension_numbers<[1], [0], [0], [1], [0, 0, 1, 1], [], []>} : vector<8x8xf32>, vector<8x16xf32>, vector<8x16xf32> -> vector<8x16xf32>
    %130 = tpu.concatenate %31, %45, %59, %73, %87, %101, %115, %129 in 1 : vector<8x16xf32>, vector<8x16xf32>, vector<8x16xf32>, vector<8x16xf32>, vector<8x16xf32>, vector<8x16xf32>, vector<8x16xf32>, vector<8x16xf32> -> vector<8x128xf32>
    %131 = vector.extract_strided_slice %11 {offsets = [8, 0], sizes = [8, 16], strides = [1, 1]} : vector<16x128xf32> to vector<8x16xf32>
    %132 = vector.extract_strided_slice %14 {offsets = [8, 0], sizes = [8, 16], strides = [1, 1]} : vector<16x128xf32> to vector<8x16xf32>
    %cst_50 = arith.constant dense<0.000000e+00> : vector<8x8xf32>
    %133 = tpu.matmul %131, %132, %cst_50 {dimension_numbers = #tpu.dot_dimension_numbers<[1], [1], [0], [0], [0, 0, 1, 0], [], []>} : vector<8x16xf32>, vector<8x16xf32>, vector<8x8xf32> -> vector<8x8xf32>
    %cst_51 = arith.constant dense<0xFF800000> : vector<8xf32>
    %134 = vector.multi_reduction <maximumf>, %133, %cst_51 [1] : vector<8x8xf32> to vector<8xf32>
    %135 = vector.shape_cast %134 : vector<8xf32> to vector<8x1xf32>
    %136 = vector.broadcast %135 : vector<8x1xf32> to vector<8x8xf32>
    %137 = arith.subf %133, %136 : vector<8x8xf32>
    %138 = math.exp %137 : vector<8x8xf32>
    %cst_52 = arith.constant dense<0.000000e+00> : vector<8xf32>
    %139 = vector.multi_reduction <add>, %138, %cst_52 [1] : vector<8x8xf32> to vector<8xf32>
    %140 = vector.shape_cast %139 : vector<8xf32> to vector<8x1xf32>
    %141 = vector.broadcast %140 : vector<8x1xf32> to vector<8x8xf32>
    %142 = arith.divf %138, %141 : vector<8x8xf32>
    %143 = vector.extract_strided_slice %17 {offsets = [8, 0], sizes = [8, 16], strides = [1, 1]} : vector<16x128xf32> to vector<8x16xf32>
    %cst_53 = arith.constant dense<0.000000e+00> : vector<8x16xf32>
    %144 = tpu.matmul %142, %143, %cst_53 {dimension_numbers = #tpu.dot_dimension_numbers<[1], [0], [0], [1], [0, 0, 1, 1], [], []>} : vector<8x8xf32>, vector<8x16xf32>, vector<8x16xf32> -> vector<8x16xf32>
    %145 = vector.extract_strided_slice %11 {offsets = [8, 16], sizes = [8, 16], strides = [1, 1]} : vector<16x128xf32> to vector<8x16xf32>
    %146 = vector.extract_strided_slice %14 {offsets = [8, 16], sizes = [8, 16], strides = [1, 1]} : vector<16x128xf32> to vector<8x16xf32>
    %cst_54 = arith.constant dense<0.000000e+00> : vector<8x8xf32>
    %147 = tpu.matmul %145, %146, %cst_54 {dimension_numbers = #tpu.dot_dimension_numbers<[1], [1], [0], [0], [0, 0, 1, 0], [], []>} : vector<8x16xf32>, vector<8x16xf32>, vector<8x8xf32> -> vector<8x8xf32>
    %cst_55 = arith.constant dense<0xFF800000> : vector<8xf32>
    %148 = vector.multi_reduction <maximumf>, %147, %cst_55 [1] : vector<8x8xf32> to vector<8xf32>
    %149 = vector.shape_cast %148 : vector<8xf32> to vector<8x1xf32>
    %150 = vector.broadcast %149 : vector<8x1xf32> to vector<8x8xf32>
    %151 = arith.subf %147, %150 : vector<8x8xf32>
    %152 = math.exp %151 : vector<8x8xf32>
    %cst_56 = arith.constant dense<0.000000e+00> : vector<8xf32>
    %153 = vector.multi_reduction <add>, %152, %cst_56 [1] : vector<8x8xf32> to vector<8xf32>
    %154 = vector.shape_cast %153 : vector<8xf32> to vector<8x1xf32>
    %155 = vector.broadcast %154 : vector<8x1xf32> to vector<8x8xf32>
    %156 = arith.divf %152, %155 : vector<8x8xf32>
    %157 = vector.extract_strided_slice %17 {offsets = [8, 16], sizes = [8, 16], strides = [1, 1]} : vector<16x128xf32> to vector<8x16xf32>
    %cst_57 = arith.constant dense<0.000000e+00> : vector<8x16xf32>
    %158 = tpu.matmul %156, %157, %cst_57 {dimension_numbers = #tpu.dot_dimension_numbers<[1], [0], [0], [1], [0, 0, 1, 1], [], []>} : vector<8x8xf32>, vector<8x16xf32>, vector<8x16xf32> -> vector<8x16xf32>
    %159 = vector.extract_strided_slice %11 {offsets = [8, 32], sizes = [8, 16], strides = [1, 1]} : vector<16x128xf32> to vector<8x16xf32>
    %160 = vector.extract_strided_slice %14 {offsets = [8, 32], sizes = [8, 16], strides = [1, 1]} : vector<16x128xf32> to vector<8x16xf32>
    %cst_58 = arith.constant dense<0.000000e+00> : vector<8x8xf32>
    %161 = tpu.matmul %159, %160, %cst_58 {dimension_numbers = #tpu.dot_dimension_numbers<[1], [1], [0], [0], [0, 0, 1, 0], [], []>} : vector<8x16xf32>, vector<8x16xf32>, vector<8x8xf32> -> vector<8x8xf32>
    %cst_59 = arith.constant dense<0xFF800000> : vector<8xf32>
    %162 = vector.multi_reduction <maximumf>, %161, %cst_59 [1] : vector<8x8xf32> to vector<8xf32>
    %163 = vector.shape_cast %162 : vector<8xf32> to vector<8x1xf32>
    %164 = vector.broadcast %163 : vector<8x1xf32> to vector<8x8xf32>
    %165 = arith.subf %161, %164 : vector<8x8xf32>
    %166 = math.exp %165 : vector<8x8xf32>
    %cst_60 = arith.constant dense<0.000000e+00> : vector<8xf32>
    %167 = vector.multi_reduction <add>, %166, %cst_60 [1] : vector<8x8xf32> to vector<8xf32>
    %168 = vector.shape_cast %167 : vector<8xf32> to vector<8x1xf32>
    %169 = vector.broadcast %168 : vector<8x1xf32> to vector<8x8xf32>
    %170 = arith.divf %166, %169 : vector<8x8xf32>
    %171 = vector.extract_strided_slice %17 {offsets = [8, 32], sizes = [8, 16], strides = [1, 1]} : vector<16x128xf32> to vector<8x16xf32>
    %cst_61 = arith.constant dense<0.000000e+00> : vector<8x16xf32>
    %172 = tpu.matmul %170, %171, %cst_61 {dimension_numbers = #tpu.dot_dimension_numbers<[1], [0], [0], [1], [0, 0, 1, 1], [], []>} : vector<8x8xf32>, vector<8x16xf32>, vector<8x16xf32> -> vector<8x16xf32>
    %173 = vector.extract_strided_slice %11 {offsets = [8, 48], sizes = [8, 16], strides = [1, 1]} : vector<16x128xf32> to vector<8x16xf32>
    %174 = vector.extract_strided_slice %14 {offsets = [8, 48], sizes = [8, 16], strides = [1, 1]} : vector<16x128xf32> to vector<8x16xf32>
    %cst_62 = arith.constant dense<0.000000e+00> : vector<8x8xf32>
    %175 = tpu.matmul %173, %174, %cst_62 {dimension_numbers = #tpu.dot_dimension_numbers<[1], [1], [0], [0], [0, 0, 1, 0], [], []>} : vector<8x16xf32>, vector<8x16xf32>, vector<8x8xf32> -> vector<8x8xf32>
    %cst_63 = arith.constant dense<0xFF800000> : vector<8xf32>
    %176 = vector.multi_reduction <maximumf>, %175, %cst_63 [1] : vector<8x8xf32> to vector<8xf32>
    %177 = vector.shape_cast %176 : vector<8xf32> to vector<8x1xf32>
    %178 = vector.broadcast %177 : vector<8x1xf32> to vector<8x8xf32>
    %179 = arith.subf %175, %178 : vector<8x8xf32>
    %180 = math.exp %179 : vector<8x8xf32>
    %cst_64 = arith.constant dense<0.000000e+00> : vector<8xf32>
    %181 = vector.multi_reduction <add>, %180, %cst_64 [1] : vector<8x8xf32> to vector<8xf32>
    %182 = vector.shape_cast %181 : vector<8xf32> to vector<8x1xf32>
    %183 = vector.broadcast %182 : vector<8x1xf32> to vector<8x8xf32>
    %184 = arith.divf %180, %183 : vector<8x8xf32>
    %185 = vector.extract_strided_slice %17 {offsets = [8, 48], sizes = [8, 16], strides = [1, 1]} : vector<16x128xf32> to vector<8x16xf32>
    %cst_65 = arith.constant dense<0.000000e+00> : vector<8x16xf32>
    %186 = tpu.matmul %184, %185, %cst_65 {dimension_numbers = #tpu.dot_dimension_numbers<[1], [0], [0], [1], [0, 0, 1, 1], [], []>} : vector<8x8xf32>, vector<8x16xf32>, vector<8x16xf32> -> vector<8x16xf32>
    %187 = vector.extract_strided_slice %11 {offsets = [8, 64], sizes = [8, 16], strides = [1, 1]} : vector<16x128xf32> to vector<8x16xf32>
    %188 = vector.extract_strided_slice %14 {offsets = [8, 64], sizes = [8, 16], strides = [1, 1]} : vector<16x128xf32> to vector<8x16xf32>
    %cst_66 = arith.constant dense<0.000000e+00> : vector<8x8xf32>
    %189 = tpu.matmul %187, %188, %cst_66 {dimension_numbers = #tpu.dot_dimension_numbers<[1], [1], [0], [0], [0, 0, 1, 0], [], []>} : vector<8x16xf32>, vector<8x16xf32>, vector<8x8xf32> -> vector<8x8xf32>
    %cst_67 = arith.constant dense<0xFF800000> : vector<8xf32>
    %190 = vector.multi_reduction <maximumf>, %189, %cst_67 [1] : vector<8x8xf32> to vector<8xf32>
    %191 = vector.shape_cast %190 : vector<8xf32> to vector<8x1xf32>
    %192 = vector.broadcast %191 : vector<8x1xf32> to vector<8x8xf32>
    %193 = arith.subf %189, %192 : vector<8x8xf32>
    %194 = math.exp %193 : vector<8x8xf32>
    %cst_68 = arith.constant dense<0.000000e+00> : vector<8xf32>
    %195 = vector.multi_reduction <add>, %194, %cst_68 [1] : vector<8x8xf32> to vector<8xf32>
    %196 = vector.shape_cast %195 : vector<8xf32> to vector<8x1xf32>
    %197 = vector.broadcast %196 : vector<8x1xf32> to vector<8x8xf32>
    %198 = arith.divf %194, %197 : vector<8x8xf32>
    %199 = vector.extract_strided_slice %17 {offsets = [8, 64], sizes = [8, 16], strides = [1, 1]} : vector<16x128xf32> to vector<8x16xf32>
    %cst_69 = arith.constant dense<0.000000e+00> : vector<8x16xf32>
    %200 = tpu.matmul %198, %199, %cst_69 {dimension_numbers = #tpu.dot_dimension_numbers<[1], [0], [0], [1], [0, 0, 1, 1], [], []>} : vector<8x8xf32>, vector<8x16xf32>, vector<8x16xf32> -> vector<8x16xf32>
    %201 = vector.extract_strided_slice %11 {offsets = [8, 80], sizes = [8, 16], strides = [1, 1]} : vector<16x128xf32> to vector<8x16xf32>
    %202 = vector.extract_strided_slice %14 {offsets = [8, 80], sizes = [8, 16], strides = [1, 1]} : vector<16x128xf32> to vector<8x16xf32>
    %cst_70 = arith.constant dense<0.000000e+00> : vector<8x8xf32>
    %203 = tpu.matmul %201, %202, %cst_70 {dimension_numbers = #tpu.dot_dimension_numbers<[1], [1], [0], [0], [0, 0, 1, 0], [], []>} : vector<8x16xf32>, vector<8x16xf32>, vector<8x8xf32> -> vector<8x8xf32>
    %cst_71 = arith.constant dense<0xFF800000> : vector<8xf32>
    %204 = vector.multi_reduction <maximumf>, %203, %cst_71 [1] : vector<8x8xf32> to vector<8xf32>
    %205 = vector.shape_cast %204 : vector<8xf32> to vector<8x1xf32>
    %206 = vector.broadcast %205 : vector<8x1xf32> to vector<8x8xf32>
    %207 = arith.subf %203, %206 : vector<8x8xf32>
    %208 = math.exp %207 : vector<8x8xf32>
    %cst_72 = arith.constant dense<0.000000e+00> : vector<8xf32>
    %209 = vector.multi_reduction <add>, %208, %cst_72 [1] : vector<8x8xf32> to vector<8xf32>
    %210 = vector.shape_cast %209 : vector<8xf32> to vector<8x1xf32>
    %211 = vector.broadcast %210 : vector<8x1xf32> to vector<8x8xf32>
    %212 = arith.divf %208, %211 : vector<8x8xf32>
    %213 = vector.extract_strided_slice %17 {offsets = [8, 80], sizes = [8, 16], strides = [1, 1]} : vector<16x128xf32> to vector<8x16xf32>
    %cst_73 = arith.constant dense<0.000000e+00> : vector<8x16xf32>
    %214 = tpu.matmul %212, %213, %cst_73 {dimension_numbers = #tpu.dot_dimension_numbers<[1], [0], [0], [1], [0, 0, 1, 1], [], []>} : vector<8x8xf32>, vector<8x16xf32>, vector<8x16xf32> -> vector<8x16xf32>
    %215 = vector.extract_strided_slice %11 {offsets = [8, 96], sizes = [8, 16], strides = [1, 1]} : vector<16x128xf32> to vector<8x16xf32>
    %216 = vector.extract_strided_slice %14 {offsets = [8, 96], sizes = [8, 16], strides = [1, 1]} : vector<16x128xf32> to vector<8x16xf32>
    %cst_74 = arith.constant dense<0.000000e+00> : vector<8x8xf32>
    %217 = tpu.matmul %215, %216, %cst_74 {dimension_numbers = #tpu.dot_dimension_numbers<[1], [1], [0], [0], [0, 0, 1, 0], [], []>} : vector<8x16xf32>, vector<8x16xf32>, vector<8x8xf32> -> vector<8x8xf32>
    %cst_75 = arith.constant dense<0xFF800000> : vector<8xf32>
    %218 = vector.multi_reduction <maximumf>, %217, %cst_75 [1] : vector<8x8xf32> to vector<8xf32>
    %219 = vector.shape_cast %218 : vector<8xf32> to vector<8x1xf32>
    %220 = vector.broadcast %219 : vector<8x1xf32> to vector<8x8xf32>
    %221 = arith.subf %217, %220 : vector<8x8xf32>
    %222 = math.exp %221 : vector<8x8xf32>
    %cst_76 = arith.constant dense<0.000000e+00> : vector<8xf32>
    %223 = vector.multi_reduction <add>, %222, %cst_76 [1] : vector<8x8xf32> to vector<8xf32>
    %224 = vector.shape_cast %223 : vector<8xf32> to vector<8x1xf32>
    %225 = vector.broadcast %224 : vector<8x1xf32> to vector<8x8xf32>
    %226 = arith.divf %222, %225 : vector<8x8xf32>
    %227 = vector.extract_strided_slice %17 {offsets = [8, 96], sizes = [8, 16], strides = [1, 1]} : vector<16x128xf32> to vector<8x16xf32>
    %cst_77 = arith.constant dense<0.000000e+00> : vector<8x16xf32>
    %228 = tpu.matmul %226, %227, %cst_77 {dimension_numbers = #tpu.dot_dimension_numbers<[1], [0], [0], [1], [0, 0, 1, 1], [], []>} : vector<8x8xf32>, vector<8x16xf32>, vector<8x16xf32> -> vector<8x16xf32>
    %229 = vector.extract_strided_slice %11 {offsets = [8, 112], sizes = [8, 16], strides = [1, 1]} : vector<16x128xf32> to vector<8x16xf32>
    %230 = vector.extract_strided_slice %14 {offsets = [8, 112], sizes = [8, 16], strides = [1, 1]} : vector<16x128xf32> to vector<8x16xf32>
    %cst_78 = arith.constant dense<0.000000e+00> : vector<8x8xf32>
    %231 = tpu.matmul %229, %230, %cst_78 {dimension_numbers = #tpu.dot_dimension_numbers<[1], [1], [0], [0], [0, 0, 1, 0], [], []>} : vector<8x16xf32>, vector<8x16xf32>, vector<8x8xf32> -> vector<8x8xf32>
    %cst_79 = arith.constant dense<0xFF800000> : vector<8xf32>
    %232 = vector.multi_reduction <maximumf>, %231, %cst_79 [1] : vector<8x8xf32> to vector<8xf32>
    %233 = vector.shape_cast %232 : vector<8xf32> to vector<8x1xf32>
    %234 = vector.broadcast %233 : vector<8x1xf32> to vector<8x8xf32>
    %235 = arith.subf %231, %234 : vector<8x8xf32>
    %236 = math.exp %235 : vector<8x8xf32>
    %cst_80 = arith.constant dense<0.000000e+00> : vector<8xf32>
    %237 = vector.multi_reduction <add>, %236, %cst_80 [1] : vector<8x8xf32> to vector<8xf32>
    %238 = vector.shape_cast %237 : vector<8xf32> to vector<8x1xf32>
    %239 = vector.broadcast %238 : vector<8x1xf32> to vector<8x8xf32>
    %240 = arith.divf %236, %239 : vector<8x8xf32>
    %241 = vector.extract_strided_slice %17 {offsets = [8, 112], sizes = [8, 16], strides = [1, 1]} : vector<16x128xf32> to vector<8x16xf32>
    %cst_81 = arith.constant dense<0.000000e+00> : vector<8x16xf32>
    %242 = tpu.matmul %240, %241, %cst_81 {dimension_numbers = #tpu.dot_dimension_numbers<[1], [0], [0], [1], [0, 0, 1, 1], [], []>} : vector<8x8xf32>, vector<8x16xf32>, vector<8x16xf32> -> vector<8x16xf32>
    %243 = tpu.concatenate %144, %158, %172, %186, %200, %214, %228, %242 in 1 : vector<8x16xf32>, vector<8x16xf32>, vector<8x16xf32>, vector<8x16xf32>, vector<8x16xf32>, vector<8x16xf32>, vector<8x16xf32>, vector<8x16xf32> -> vector<8x128xf32>
    %244 = tpu.concatenate %130, %243 in 0 : vector<8x128xf32>, vector<8x128xf32> -> vector<16x128xf32>
    %c0_82 = arith.constant 0 : index
    %c0_83 = arith.constant 0 : index
    %c0_84 = arith.constant 0 : index
    %245 = vector.load %arg7[%c0_82, %c0_83, %c0_84] : memref<1x128x128xf32, #tpu.memory_space<vmem>>, vector<1x128x128xf32>
    %246 = vector.shape_cast %245 : vector<1x128x128xf32> to vector<128x128xf32>
    %cst_85 = arith.constant dense<0.000000e+00> : vector<16x128xf32>
    %247 = tpu.matmul %244, %246, %cst_85 {dimension_numbers = #tpu.dot_dimension_numbers<[1], [0], [0], [1], [0, 0, 1, 1], [], []>} : vector<16x128xf32>, vector<128x128xf32>, vector<16x128xf32> -> vector<16x128xf32>
    %248 = arith.addf %247, %4 : vector<16x128xf32>
    %c0_86 = arith.constant 0 : index
    %c0_87 = arith.constant 0 : index
    %c0_88 = arith.constant 0 : index
    %249 = vector.load %arg8[%c0_86, %c0_87, %c0_88] : memref<1x1x128xf32, #tpu.memory_space<vmem>>, vector<1x1x128xf32>
    %250 = vector.shape_cast %249 : vector<1x1x128xf32> to vector<1x128xf32>
    %c0_89 = arith.constant 0 : index
    %c0_90 = arith.constant 0 : index
    %c0_91 = arith.constant 0 : index
    %251 = vector.load %arg9[%c0_89, %c0_90, %c0_91] : memref<1x1x128xf32, #tpu.memory_space<vmem>>, vector<1x1x128xf32>
    %252 = vector.shape_cast %251 : vector<1x1x128xf32> to vector<1x128xf32>
    %cst_92 = arith.constant dense<0.000000e+00> : vector<16xf32>
    %253 = vector.multi_reduction <add>, %248, %cst_92 [1] : vector<16x128xf32> to vector<16xf32>
    %254 = vector.shape_cast %253 : vector<16xf32> to vector<16x1xf32>
    %cst_93 = arith.constant 1.280000e+02 : f32
    %255 = vector.broadcast %cst_93 : f32 to vector<16x1xf32>
    %256 = arith.divf %254, %255 : vector<16x1xf32>
    %257 = vector.broadcast %256 : vector<16x1xf32> to vector<16x128xf32>
    %258 = arith.subf %248, %257 : vector<16x128xf32>
    %259 = arith.mulf %258, %258 : vector<16x128xf32>
    %cst_94 = arith.constant dense<0.000000e+00> : vector<16xf32>
    %260 = vector.multi_reduction <add>, %259, %cst_94 [1] : vector<16x128xf32> to vector<16xf32>
    %261 = vector.shape_cast %260 : vector<16xf32> to vector<16x1xf32>
    %cst_95 = arith.constant 1.280000e+02 : f32
    %262 = vector.broadcast %cst_95 : f32 to vector<16x1xf32>
    %263 = arith.divf %261, %262 : vector<16x1xf32>
    %264 = vector.broadcast %256 : vector<16x1xf32> to vector<16x128xf32>
    %265 = arith.subf %248, %264 : vector<16x128xf32>
    %cst_96 = arith.constant 9.99999997E-7 : f32
    %266 = vector.broadcast %cst_96 : f32 to vector<16x1xf32>
    %267 = arith.addf %263, %266 : vector<16x1xf32>
    %268 = math.rsqrt %267 : vector<16x1xf32>
    %269 = vector.broadcast %268 : vector<16x1xf32> to vector<16x128xf32>
    %270 = arith.mulf %265, %269 : vector<16x128xf32>
    %271 = vector.broadcast %250 : vector<1x128xf32> to vector<16x128xf32>
    %272 = arith.mulf %270, %271 : vector<16x128xf32>
    %273 = vector.broadcast %252 : vector<1x128xf32> to vector<16x128xf32>
    %274 = arith.addf %272, %273 : vector<16x128xf32>
    %c0_97 = arith.constant 0 : index
    %c0_98 = arith.constant 0 : index
    %c0_99 = arith.constant 0 : index
    %275 = vector.load %arg10[%c0_97, %c0_98, %c0_99] : memref<1x128x256xf32, #tpu.memory_space<vmem>>, vector<1x128x256xf32>
    %276 = vector.shape_cast %275 : vector<1x128x256xf32> to vector<128x256xf32>
    %cst_100 = arith.constant dense<0.000000e+00> : vector<16x256xf32>
    %277 = tpu.matmul %274, %276, %cst_100 {dimension_numbers = #tpu.dot_dimension_numbers<[1], [0], [0], [1], [0, 0, 1, 1], [], []>} : vector<16x128xf32>, vector<128x256xf32>, vector<16x256xf32> -> vector<16x256xf32>
    %c1_i32 = arith.constant 1 : i32
    %278 = arith.cmpi eq, %arg1, %c1_i32 : i32
    %279 = arith.extui %278 : i1 to i32
    %c0_i32_101 = arith.constant 0 : i32
    %280 = arith.cmpi ne, %279, %c0_i32_101 : i32
    scf.if %280 {
      %317 = math.tanh %277 : vector<16x256xf32>
      %c0_123 = arith.constant 0 : index
      %c0_124 = arith.constant 0 : index
      %318 = vector.load %arg15[%c0_123, %c0_124] : memref<16x256xf32, #tpu.memory_space<vmem>>, vector<16x256xf32>
      tpu.vector_store %arg15[%c0_123, %c0_124], %317 {strides = array<i32>} : memref<16x256xf32, #tpu.memory_space<vmem>>, vector<16x256xf32>,
    } else {
    }
    %true = arith.constant true
    %281 = arith.xori %278, %true : i1
    %282 = arith.extui %281 : i1 to i32
    %c0_i32_102 = arith.constant 0 : i32
    %283 = arith.cmpi ne, %282, %c0_i32_102 : i32
    scf.if %283 {
      %cst_123 = arith.constant 0.000000e+00 : f32
      %317 = vector.broadcast %cst_123 : f32 to vector<16x256xf32>
      %318 = arith.maximumf %277, %317 : vector<16x256xf32>
      %c0_124 = arith.constant 0 : index
      %c0_125 = arith.constant 0 : index
      %319 = vector.load %arg15[%c0_124, %c0_125] : memref<16x256xf32, #tpu.memory_space<vmem>>, vector<16x256xf32>
      tpu.vector_store %arg15[%c0_124, %c0_125], %318 {strides = array<i32>} : memref<16x256xf32, #tpu.memory_space<vmem>>, vector<16x256xf32>,
    } else {
    }
    %c0_103 = arith.constant 0 : index
    %c0_104 = arith.constant 0 : index
    %284 = vector.load %arg15[%c0_103, %c0_104] : memref<16x256xf32, #tpu.memory_space<vmem>>, vector<16x256xf32>
    %c0_105 = arith.constant 0 : index
    %c0_106 = arith.constant 0 : index
    %c0_107 = arith.constant 0 : index
    %285 = vector.load %arg11[%c0_105, %c0_106, %c0_107] : memref<1x256x128xf32, #tpu.memory_space<vmem>>, vector<1x256x128xf32>
    %286 = vector.shape_cast %285 : vector<1x256x128xf32> to vector<256x128xf32>
    %cst_108 = arith.constant dense<0.000000e+00> : vector<16x128xf32>
    %287 = tpu.matmul %284, %286, %cst_108 {dimension_numbers = #tpu.dot_dimension_numbers<[1], [0], [0], [1], [0, 0, 1, 1], [], []>} : vector<16x256xf32>, vector<256x128xf32>, vector<16x128xf32> -> vector<16x128xf32>
    %288 = arith.addf %287, %274 : vector<16x128xf32>
    %c0_109 = arith.constant 0 : index
    %c0_110 = arith.constant 0 : index
    %c0_111 = arith.constant 0 : index
    %289 = vector.load %arg12[%c0_109, %c0_110, %c0_111] : memref<1x1x128xf32, #tpu.memory_space<vmem>>, vector<1x1x128xf32>
    %290 = vector.shape_cast %289 : vector<1x1x128xf32> to vector<1x128xf32>
    %c0_112 = arith.constant 0 : index
    %c0_113 = arith.constant 0 : index
    %c0_114 = arith.constant 0 : index
    %291 = vector.load %arg13[%c0_112, %c0_113, %c0_114] : memref<1x1x128xf32, #tpu.memory_space<vmem>>, vector<1x1x128xf32>
    %292 = vector.shape_cast %291 : vector<1x1x128xf32> to vector<1x128xf32>
    %cst_115 = arith.constant dense<0.000000e+00> : vector<16xf32>
    %293 = vector.multi_reduction <add>, %288, %cst_115 [1] : vector<16x128xf32> to vector<16xf32>
    %294 = vector.shape_cast %293 : vector<16xf32> to vector<16x1xf32>
    %cst_116 = arith.constant 1.280000e+02 : f32
    %295 = vector.broadcast %cst_116 : f32 to vector<16x1xf32>
    %296 = arith.divf %294, %295 : vector<16x1xf32>
    %297 = vector.broadcast %296 : vector<16x1xf32> to vector<16x128xf32>
    %298 = arith.subf %288, %297 : vector<16x128xf32>
    %299 = arith.mulf %298, %298 : vector<16x128xf32>
    %cst_117 = arith.constant dense<0.000000e+00> : vector<16xf32>
    %300 = vector.multi_reduction <add>, %299, %cst_117 [1] : vector<16x128xf32> to vector<16xf32>
    %301 = vector.shape_cast %300 : vector<16xf32> to vector<16x1xf32>
    %cst_118 = arith.constant 1.280000e+02 : f32
    %302 = vector.broadcast %cst_118 : f32 to vector<16x1xf32>
    %303 = arith.divf %301, %302 : vector<16x1xf32>
    %304 = vector.broadcast %296 : vector<16x1xf32> to vector<16x128xf32>
    %305 = arith.subf %288, %304 : vector<16x128xf32>
    %cst_119 = arith.constant 9.99999997E-7 : f32
    %306 = vector.broadcast %cst_119 : f32 to vector<16x1xf32>
    %307 = arith.addf %303, %306 : vector<16x1xf32>
    %308 = math.rsqrt %307 : vector<16x1xf32>
    %309 = vector.broadcast %308 : vector<16x1xf32> to vector<16x128xf32>
    %310 = arith.mulf %305, %309 : vector<16x128xf32>
    %311 = vector.broadcast %290 : vector<1x128xf32> to vector<16x128xf32>
    %312 = arith.mulf %310, %311 : vector<16x128xf32>
    %313 = vector.broadcast %292 : vector<1x128xf32> to vector<16x128xf32>
    %314 = arith.addf %312, %313 : vector<16x128xf32>
    %315 = vector.shape_cast %314 : vector<16x128xf32> to vector<2x8x128xf32>
    %c0_120 = arith.constant 0 : index
    %c0_121 = arith.constant 0 : index
    %c0_122 = arith.constant 0 : index
    %316 = vector.load %arg14[%c0_120, %c0_121, %c0_122] : memref<2x8x128xf32, #tpu.memory_space<vmem>>, vector<2x8x128xf32>
    tpu.vector_store %arg14[%c0_120, %c0_121, %c0_122], %315 {strides = array<i32>} : memref<2x8x128xf32, #tpu.memory_space<vmem>>, vector<2x8x128xf32>,
    return
  }
  func.func @transform_0(%arg0: i32, %arg1: i32) -> (i32, i32, i32) {
    %c0_i32 = arith.constant 0 : i32
    %c0_i32_0 = arith.constant 0 : i32
    %c0_i32_1 = arith.constant 0 : i32
    return %arg0, %c0_i32, %c0_i32_0 : i32, i32, i32
  }
  func.func @transform_1(%arg0: i32, %arg1: i32) -> (i32, i32, i32) {
    %c0_i32 = arith.constant 0 : i32
    %c0_i32_0 = arith.constant 0 : i32
    %c0_i32_1 = arith.constant 0 : i32
    return %arg0, %c0_i32, %c0_i32_0 : i32, i32, i32
  }
  func.func @transform_2(%arg0: i32, %arg1: i32) -> (i32, i32, i32) {
    %c0_i32 = arith.constant 0 : i32
    %c0_i32_0 = arith.constant 0 : i32
    %c0_i32_1 = arith.constant 0 : i32
    return %arg1, %c0_i32, %c0_i32_0 : i32, i32, i32
  }
  func.func @transform_3(%arg0: i32, %arg1: i32) -> (i32, i32, i32) {
    %c0_i32 = arith.constant 0 : i32
    %c0_i32_0 = arith.constant 0 : i32
    %c0_i32_1 = arith.constant 0 : i32
    return %arg1, %c0_i32, %c0_i32_0 : i32, i32, i32
  }
  func.func @transform_4(%arg0: i32, %arg1: i32) -> (i32, i32, i32) {
    %c0_i32 = arith.constant 0 : i32
    %c0_i32_0 = arith.constant 0 : i32
    %c0_i32_1 = arith.constant 0 : i32
    return %arg1, %c0_i32, %c0_i32_0 : i32, i32, i32
  }
  func.func @transform_5(%arg0: i32, %arg1: i32) -> (i32, i32, i32) {
    %c0_i32 = arith.constant 0 : i32
    %c0_i32_0 = arith.constant 0 : i32
    %c0_i32_1 = arith.constant 0 : i32
    return %arg1, %c0_i32, %c0_i32_0 : i32, i32, i32
  }
  func.func @transform_6(%arg0: i32, %arg1: i32) -> (i32, i32, i32) {
    %c0_i32 = arith.constant 0 : i32
    %c0_i32_0 = arith.constant 0 : i32
    %c0_i32_1 = arith.constant 0 : i32
    return %arg1, %c0_i32, %c0_i32_0 : i32, i32, i32
  }
  func.func @transform_7(%arg0: i32, %arg1: i32) -> (i32, i32, i32) {
    %c0_i32 = arith.constant 0 : i32
    %c0_i32_0 = arith.constant 0 : i32
    %c0_i32_1 = arith.constant 0 : i32
    return %arg1, %c0_i32, %c0_i32_0 : i32, i32, i32
  }
  func.func @transform_8(%arg0: i32, %arg1: i32) -> (i32, i32, i32) {
    %c0_i32 = arith.constant 0 : i32
    %c0_i32_0 = arith.constant 0 : i32
    %c0_i32_1 = arith.constant 0 : i32
    return %arg1, %c0_i32, %c0_i32_0 : i32, i32, i32
  }
  func.func @transform_9(%arg0: i32, %arg1: i32) -> (i32, i32, i32) {
    %c0_i32 = arith.constant 0 : i32
    %c0_i32_0 = arith.constant 0 : i32
    %c0_i32_1 = arith.constant 0 : i32
    return %arg1, %c0_i32, %c0_i32_0 : i32, i32, i32
  }
  func.func @transform_10(%arg0: i32, %arg1: i32) -> (i32, i32, i32) {
    %c0_i32 = arith.constant 0 : i32
    %c0_i32_0 = arith.constant 0 : i32
    %c0_i32_1 = arith.constant 0 : i32
    return %arg1, %c0_i32, %c0_i32_0 : i32, i32, i32
  }
  func.func @transform_11(%arg0: i32, %arg1: i32) -> (i32, i32, i32) {
    %c0_i32 = arith.constant 0 : i32
    %c0_i32_0 = arith.constant 0 : i32
    %c0_i32_1 = arith.constant 0 : i32
    return %arg1, %c0_i32, %c0_i32_0 : i32, i32, i32
  }
  func.func @transform_12(%arg0: i32, %arg1: i32) -> (i32, i32, i32) {
    %c0_i32 = arith.constant 0 : i32
    %c0_i32_0 = arith.constant 0 : i32
    %c0_i32_1 = arith.constant 0 : i32
    return %arg0, %c0_i32, %c0_i32_0 : i32, i32, i32
  }
}

</mosaic_0001>

<llo_original>
// kernel: tpu_custom_call.1
$region0: #{tpu_custom_call.1}
  #allocation0 [shape = 'u32[]', space=smem, size = 0x4, offset = 0x4, fixed_abs, tag = 'smem constant byte address 0x4 - core index']
  #allocation1 [shape = 'u32[144,128]{1,0:T(1,128)}', space=vmem, size = 0x12000, scoped, tag = 'internal scratch']
  #allocation2 [shape = 'f32[16,256]{1,0:T(8,128)}', space=vmem, size = 0x4000, scoped, tag = 'scratch operand']
  %s0 = inlined_call_operand.hbm [shape: f32[4,8,128], index: 0, kind: input, shape index: {}]
  %s1 = inlined_call_operand.hbm [shape: f32[4,8,128], index: 1, kind: input, shape index: {}]
  %s2 = inlined_call_operand.hbm [shape: f32[2,128,128], index: 2, kind: input, shape index: {}]
  %s3 = inlined_call_operand.hbm [shape: f32[2,128,128], index: 3, kind: input, shape index: {}]
  %s4 = inlined_call_operand.hbm [shape: f32[2,128,128], index: 4, kind: input, shape index: {}]
  %s5 = inlined_call_operand.hbm [shape: f32[2,128,128], index: 5, kind: input, shape index: {}]
  %s6 = inlined_call_operand.vmem [shape: f32[2,1,128], index: 6, kind: input, shape index: {}]
  %s7 = inlined_call_operand.vmem [shape: f32[2,1,128], index: 7, kind: input, shape index: {}]
  %s8 = inlined_call_operand.hbm [shape: f32[2,128,256], index: 8, kind: input, shape index: {}]
  %s9 = inlined_call_operand.hbm [shape: f32[2,256,128], index: 9, kind: input, shape index: {}]
  %s10 = inlined_call_operand.vmem [shape: f32[2,1,128], index: 10, kind: input, shape index: {}]
  %s11 = inlined_call_operand.vmem [shape: f32[2,1,128], index: 11, kind: input, shape index: {}]
  %s12 = inlined_call_operand.hbm [shape: f32[4,8,128], index: 12, kind: output, shape index: {}]
  %s13 = sld [smem:[#allocation0]]
  $region125: #{tpu_custom_call.1} parent=0
    _
  %s15 = ssub.s32 1, %s13
  %s16 = scalar_select 0, %s15, %s13
  $region1: #{tpu_custom_call.1} parent=0
    #allocation3 [shape = 'u8[16384]{0}', space=vmem, size = 0x4000, scoped, tag = 'input window, operand 0']
    #allocation4 [shape = 's32[2]{0}', space=sflag, size = 0x8, scoped, tag = 'scoped memory for tpu_custom_call.1']
    #allocation5 [shape = 's32[2]{0}', space=sflag, size = 0x8, scoped, tag = 'scoped memory for tpu_custom_call.1']
    #allocation6 [shape = 'u8[16384]{0}', space=vmem, size = 0x4000, scoped, tag = 'input window, operand 1']
    #allocation7 [shape = 's32[2]{0}', space=sflag, size = 0x8, scoped, tag = 'scoped memory for tpu_custom_call.1']
    #allocation8 [shape = 'u8[131072]{0}', space=vmem, size = 0x20000, scoped, tag = 'input window, operand 2']
    #allocation9 [shape = 'u8[131072]{0}', space=vmem, size = 0x20000, scoped, tag = 'input window, operand 3']
    #allocation10 [shape = 's32[2]{0}', space=sflag, size = 0x8, scoped, tag = 'scoped memory for tpu_custom_call.1']
    #allocation11 [shape = 'u8[131072]{0}', space=vmem, size = 0x20000, scoped, tag = 'input window, operand 4']
    #allocation12 [shape = 'u8[131072]{0}', space=vmem, size = 0x20000, scoped, tag = 'input window, operand 5']
    #allocation13 [shape = 's32[2]{0}', space=sflag, size = 0x8, scoped, tag = 'scoped memory for tpu_custom_call.1']
    #allocation14 [shape = 'u8[262144]{0}', space=vmem, size = 0x40000, scoped, tag = 'input window, operand 8']
    #allocation15 [shape = 'u8[262144]{0}', space=vmem, size = 0x40000, scoped, tag = 'input window, operand 9']
    #allocation16 [shape = 's32[2]{0}', space=sflag, size = 0x8, scoped, tag = 'scoped memory for tpu_custom_call.1']
    #allocation17 [shape = 'u8[16384]{0}', space=vmem, size = 0x4000, scoped, tag = 'output window, operand 0']
    %17 = vsyncpa [#allocation4], 0
    %s18 = scalar_lea.sflag [#allocation4], 1
    %19 = vsyncpa %s18, 0
    %20 = vsyncpa [#allocation7], 0
    %s21 = scalar_lea.sflag [#allocation7], 1
    %22 = vsyncpa %s21, 0
    %23 = vsyncpa [#allocation10], 0
    %s24 = scalar_lea.sflag [#allocation10], 1
    %25 = vsyncpa %s24, 0
    %26 = vsyncpa [#allocation13], 0
    %s27 = scalar_lea.sflag [#allocation13], 1
    %28 = vsyncpa %s27, 0
    %29 = vsyncpa [#allocation16], 0
    %s30 = scalar_lea.sflag [#allocation16], 1
    %31 = vsyncpa %s30, 0
    %32 = vsyncpa [#allocation5], 0
    %s33 = scalar_lea.sflag [#allocation5], 1
    %34 = vsyncpa %s33, 0
    loop: start=0, step=1, limit=6
    $region2: #{tpu_custom_call.1} parent=1 // loop_pre_header
      _
    $region3: #{tpu_custom_call.1} parent=1 // loop_header
      %s36 = sphi 0, %s40
      %p37 = scmp.ge.s32.totalorder %s36, 6
      %s43 = sphi 0, %s55
      %s44 = sphi 0, %s51
      %s45 = sphi 0, %s43
      %s46 = sphi 0, %s44
      %s47 = sphi 0, %s45
      %s48 = sphi 0, %s46
      %s58 = sphi 0, %s60
      %s61 = sphi 0, %s58
      %s62 = sphi 0, %s61
      %s78 = sphi 0, %s62
      %s84 = sphi 0, %s86
      %s87 = sphi 0, %s84
      %s88 = sphi 0, %s87
      %s104 = sphi 0, %s88
      %s110 = sphi 0, %s112
      %s113 = sphi 0, %s110
      %s114 = sphi 0, %s113
      %s130 = sphi 0, %s114
      %s136 = sphi 0, %s138
      %s139 = sphi 0, %s136
      %s140 = sphi 0, %s139
      %s156 = sphi 0, %s140
      %s162 = sphi 0, %s164
      %s165 = sphi 0, %s162
      %s166 = sphi 0, %s165
      %s182 = sphi 0, %s166
      %s188 = sphi 0, %s190
      %s191 = sphi 0, %s188
      %s192 = sphi 0, %s191
      %s208 = sphi 0, %s192
      %s214 = sphi 0, %s216
      %s217 = sphi 0, %s214
      %s218 = sphi 0, %s217
      %s234 = sphi 0, %s218
      %s240 = sphi 0, %s242
      %s243 = sphi 0, %s240
      %s244 = sphi 0, %s243
      %s260 = sphi 0, %s244
      %s266 = sphi 0, %s268
      %s269 = sphi 0, %s266
      %s270 = sphi 0, %s269
      %s286 = sphi 0, %s270
      %s292 = sphi 0, %s294
      %s295 = sphi 0, %s292
      %s296 = sphi 0, %s295
      %s312 = sphi 0, %s296
      %s318 = sphi 0, %s320
      %s321 = sphi 0, %s318
      %s322 = sphi 0, %s321
      %s338 = sphi 0, %s322
      %s344 = sphi 0, %s346
      %s347 = sphi 0, %s344
      %s348 = sphi 0, %s347
      %s364 = sphi 0, %s348
      %s370 = sphi 0, %s372
      %s373 = sphi 0, %s370
      %s374 = sphi 0, %s373
      %s390 = sphi 0, %s374
    $region4: #{tpu_custom_call.1} parent=1 // loop_header_branch
      %39 = sbr.rel (%p37) target = $region8
    $region5: #{tpu_custom_call.1} parent=1 // loop_body
      %s41 = ssub.s32 %s36, 1
      %s42 = ssub.s32 %s36, 2
      %s49 = sadd.s32 1, %s44
      %p50 = scmp.ge.s32.totalorder %s49, 2
      %s51 = scalar_select %p50, 0, %s49
      %s52 = sadd.s32 1, %s43
      %s53 = scalar_select %p50, %s52, %s43
      %p54 = scmp.ge.s32.totalorder %s53, 2
      %s55 = scalar_select %p54, 0, %s53
      %s56 = ssub.s32 %s43, %s55
      %p57 = scmp.eq.s32.totalorder %s56, 0
      %s59 = sadd.s32 %s58, 1
      %s60 = scalar_select %p57, %s58, %s59
      %p63 = pneg %p57
      %p64 = scmp.eq.s32.totalorder %s36, 3
      %p65 = por %p63, %p64
      %p66 = scmp.ne.s32.totalorder %s58, %s61
      %p67 = scmp.eq.s32.totalorder %s36, 0
      %p68 = por %p66, %p67
      %p69 = scmp.ne.s32.totalorder %s58, %s61
      %p70 = scmp.eq.s32.totalorder %s41, 3
      %p71 = por %p69, %p70
      %p72 = scmp.ne.s32.totalorder %s61, %s62
      %p73 = scmp.eq.s32.totalorder %s41, 0
      %p74 = por %p72, %p73
      %p75 = scmp.ne.s32.totalorder %s61, %s62
      %p76 = scmp.eq.s32.totalorder %s42, 3
      %p77 = por %p75, %p76
      %p79 = scmp.ne.s32.totalorder %s62, %s78
      %p80 = scmp.eq.s32.totalorder %s42, 0
      %p81 = por %p79, %p80
      %s82 = ssub.s32 %s43, %s55
      %p83 = scmp.eq.s32.totalorder %s82, 0
      %s85 = sadd.s32 %s84, 1
      %s86 = scalar_select %p83, %s84, %s85
      %p89 = pneg %p83
      %p90 = scmp.eq.s32.totalorder %s36, 3
      %p91 = por %p89, %p90
      %p92 = scmp.ne.s32.totalorder %s84, %s87
      %p93 = scmp.eq.s32.totalorder %s36, 0
      %p94 = por %p92, %p93
      %p95 = scmp.ne.s32.totalorder %s84, %s87
      %p96 = scmp.eq.s32.totalorder %s41, 3
      %p97 = por %p95, %p96
      %p98 = scmp.ne.s32.totalorder %s87, %s88
      %p99 = scmp.eq.s32.totalorder %s41, 0
      %p100 = por %p98, %p99
      %p101 = scmp.ne.s32.totalorder %s87, %s88
      %p102 = scmp.eq.s32.totalorder %s42, 3
      %p103 = por %p101, %p102
      %p105 = scmp.ne.s32.totalorder %s88, %s104
      %p106 = scmp.eq.s32.totalorder %s42, 0
      %p107 = por %p105, %p106
      %s108 = ssub.s32 %s44, %s51
      %p109 = scmp.eq.s32.totalorder %s108, 0
      %s111 = sadd.s32 %s110, 1
      %s112 = scalar_select %p109, %s110, %s111
      %p115 = pneg %p109
      %p116 = scmp.eq.s32.totalorder %s36, 3
      %p117 = por %p115, %p116
      %p118 = scmp.ne.s32.totalorder %s110, %s113
      %p119 = scmp.eq.s32.totalorder %s36, 0
      %p120 = por %p118, %p119
      %p121 = scmp.ne.s32.totalorder %s110, %s113
      %p122 = scmp.eq.s32.totalorder %s41, 3
      %p123 = por %p121, %p122
      %p124 = scmp.ne.s32.totalorder %s113, %s114
      %p125 = scmp.eq.s32.totalorder %s41, 0
      %p126 = por %p124, %p125
      %p127 = scmp.ne.s32.totalorder %s113, %s114
      %p128 = scmp.eq.s32.totalorder %s42, 3
      %p129 = por %p127, %p128
      %p131 = scmp.ne.s32.totalorder %s114, %s130
      %p132 = scmp.eq.s32.totalorder %s42, 0
      %p133 = por %p131, %p132
      %s134 = ssub.s32 %s44, %s51
      %p135 = scmp.eq.s32.totalorder %s134, 0
      %s137 = sadd.s32 %s136, 1
      %s138 = scalar_select %p135, %s136, %s137
      %p141 = pneg %p135
      %p142 = scmp.eq.s32.totalorder %s36, 3
      %p143 = por %p141, %p142
      %p144 = scmp.ne.s32.totalorder %s136, %s139
      %p145 = scmp.eq.s32.totalorder %s36, 0
      %p146 = por %p144, %p145
      %p147 = scmp.ne.s32.totalorder %s136, %s139
      %p148 = scmp.eq.s32.totalorder %s41, 3
      %p149 = por %p147, %p148
      %p150 = scmp.ne.s32.totalorder %s139, %s140
      %p151 = scmp.eq.s32.totalorder %s41, 0
      %p152 = por %p150, %p151
      %p153 = scmp.ne.s32.totalorder %s139, %s140
      %p154 = scmp.eq.s32.totalorder %s42, 3
      %p155 = por %p153, %p154
      %p157 = scmp.ne.s32.totalorder %s140, %s156
      %p158 = scmp.eq.s32.totalorder %s42, 0
      %p159 = por %p157, %p158
      %s160 = ssub.s32 %s44, %s51
      %p161 = scmp.eq.s32.totalorder %s160, 0
      %s163 = sadd.s32 %s162, 1
      %s164 = scalar_select %p161, %s162, %s163
      %p167 = pneg %p161
      %p168 = scmp.eq.s32.totalorder %s36, 3
      %p169 = por %p167, %p168
      %p170 = scmp.ne.s32.totalorder %s162, %s165
      %p171 = scmp.eq.s32.totalorder %s36, 0
      %p172 = por %p170, %p171
      %p173 = scmp.ne.s32.totalorder %s162, %s165
      %p174 = scmp.eq.s32.totalorder %s41, 3
      %p175 = por %p173, %p174
      %p176 = scmp.ne.s32.totalorder %s165, %s166
      %p177 = scmp.eq.s32.totalorder %s41, 0
      %p178 = por %p176, %p177
      %p179 = scmp.ne.s32.totalorder %s165, %s166
      %p180 = scmp.eq.s32.totalorder %s42, 3
      %p181 = por %p179, %p180
      %p183 = scmp.ne.s32.totalorder %s166, %s182
      %p184 = scmp.eq.s32.totalorder %s42, 0
      %p185 = por %p183, %p184
      %s186 = ssub.s32 %s44, %s51
      %p187 = scmp.eq.s32.totalorder %s186, 0
      %s189 = sadd.s32 %s188, 1
      %s190 = scalar_select %p187, %s188, %s189
      %p193 = pneg %p187
      %p194 = scmp.eq.s32.totalorder %s36, 3
      %p195 = por %p193, %p194
      %p196 = scmp.ne.s32.totalorder %s188, %s191
      %p197 = scmp.eq.s32.totalorder %s36, 0
      %p198 = por %p196, %p197
      %p199 = scmp.ne.s32.totalorder %s188, %s191
      %p200 = scmp.eq.s32.totalorder %s41, 3
      %p201 = por %p199, %p200
      %p202 = scmp.ne.s32.totalorder %s191, %s192
      %p203 = scmp.eq.s32.totalorder %s41, 0
      %p204 = por %p202, %p203
      %p205 = scmp.ne.s32.totalorder %s191, %s192
      %p206 = scmp.eq.s32.totalorder %s42, 3
      %p207 = por %p205, %p206
      %p209 = scmp.ne.s32.totalorder %s192, %s208
      %p210 = scmp.eq.s32.totalorder %s42, 0
      %p211 = por %p209, %p210
      %s212 = ssub.s32 %s44, %s51
      %p213 = scmp.eq.s32.totalorder %s212, 0
      %s215 = sadd.s32 %s214, 1
      %s216 = scalar_select %p213, %s214, %s215
      %p219 = pneg %p213
      %p220 = scmp.eq.s32.totalorder %s36, 3
      %p221 = por %p219, %p220
      %p222 = scmp.ne.s32.totalorder %s214, %s217
      %p223 = scmp.eq.s32.totalorder %s36, 0
      %p224 = por %p222, %p223
      %p225 = scmp.ne.s32.totalorder %s214, %s217
      %p226 = scmp.eq.s32.totalorder %s41, 3
      %p227 = por %p225, %p226
      %p228 = scmp.ne.s32.totalorder %s217, %s218
      %p229 = scmp.eq.s32.totalorder %s41, 0
      %p230 = por %p228, %p229
      %p231 = scmp.ne.s32.totalorder %s217, %s218
      %p232 = scmp.eq.s32.totalorder %s42, 3
      %p233 = por %p231, %p232
      %p235 = scmp.ne.s32.totalorder %s218, %s234
      %p236 = scmp.eq.s32.totalorder %s42, 0
      %p237 = por %p235, %p236
      %s238 = ssub.s32 %s44, %s51
      %p239 = scmp.eq.s32.totalorder %s238, 0
      %s241 = sadd.s32 %s240, 1
      %s242 = scalar_select %p239, %s240, %s241
      %p245 = pneg %p239
      %p246 = scmp.eq.s32.totalorder %s36, 3
      %p247 = por %p245, %p246
      %p248 = scmp.ne.s32.totalorder %s240, %s243
      %p249 = scmp.eq.s32.totalorder %s36, 0
      %p250 = por %p248, %p249
      %p251 = scmp.ne.s32.totalorder %s240, %s243
      %p252 = scmp.eq.s32.totalorder %s41, 3
      %p253 = por %p251, %p252
      %p254 = scmp.ne.s32.totalorder %s243, %s244
      %p255 = scmp.eq.s32.totalorder %s41, 0
      %p256 = por %p254, %p255
      %p257 = scmp.ne.s32.totalorder %s243, %s244
      %p258 = scmp.eq.s32.totalorder %s42, 3
      %p259 = por %p257, %p258
      %p261 = scmp.ne.s32.totalorder %s244, %s260
      %p262 = scmp.eq.s32.totalorder %s42, 0
      %p263 = por %p261, %p262
      %s264 = ssub.s32 %s44, %s51
      %p265 = scmp.eq.s32.totalorder %s264, 0
      %s267 = sadd.s32 %s266, 1
      %s268 = scalar_select %p265, %s266, %s267
      %p271 = pneg %p265
      %p272 = scmp.eq.s32.totalorder %s36, 3
      %p273 = por %p271, %p272
      %p274 = scmp.ne.s32.totalorder %s266, %s269
      %p275 = scmp.eq.s32.totalorder %s36, 0
      %p276 = por %p274, %p275
      %p277 = scmp.ne.s32.totalorder %s266, %s269
      %p278 = scmp.eq.s32.totalorder %s41, 3
      %p279 = por %p277, %p278
      %p280 = scmp.ne.s32.totalorder %s269, %s270
      %p281 = scmp.eq.s32.totalorder %s41, 0
      %p282 = por %p280, %p281
      %p283 = scmp.ne.s32.totalorder %s269, %s270
      %p284 = scmp.eq.s32.totalorder %s42, 3
      %p285 = por %p283, %p284
      %p287 = scmp.ne.s32.totalorder %s270, %s286
      %p288 = scmp.eq.s32.totalorder %s42, 0
      %p289 = por %p287, %p288
      %s290 = ssub.s32 %s44, %s51
      %p291 = scmp.eq.s32.totalorder %s290, 0
      %s293 = sadd.s32 %s292, 1
      %s294 = scalar_select %p291, %s292, %s293
      %p297 = pneg %p291
      %p298 = scmp.eq.s32.totalorder %s36, 3
      %p299 = por %p297, %p298
      %p300 = scmp.ne.s32.totalorder %s292, %s295
      %p301 = scmp.eq.s32.totalorder %s36, 0
      %p302 = por %p300, %p301
      %p303 = scmp.ne.s32.totalorder %s292, %s295
      %p304 = scmp.eq.s32.totalorder %s41, 3
      %p305 = por %p303, %p304
      %p306 = scmp.ne.s32.totalorder %s295, %s296
      %p307 = scmp.eq.s32.totalorder %s41, 0
      %p308 = por %p306, %p307
      %p309 = scmp.ne.s32.totalorder %s295, %s296
      %p310 = scmp.eq.s32.totalorder %s42, 3
      %p311 = por %p309, %p310
      %p313 = scmp.ne.s32.totalorder %s296, %s312
      %p314 = scmp.eq.s32.totalorder %s42, 0
      %p315 = por %p313, %p314
      %s316 = ssub.s32 %s44, %s51
      %p317 = scmp.eq.s32.totalorder %s316, 0
      %s319 = sadd.s32 %s318, 1
      %s320 = scalar_select %p317, %s318, %s319
      %p323 = pneg %p317
      %p324 = scmp.eq.s32.totalorder %s36, 3
      %p325 = por %p323, %p324
      %p326 = scmp.ne.s32.totalorder %s318, %s321
      %p327 = scmp.eq.s32.totalorder %s36, 0
      %p328 = por %p326, %p327
      %p329 = scmp.ne.s32.totalorder %s318, %s321
      %p330 = scmp.eq.s32.totalorder %s41, 3
      %p331 = por %p329, %p330
      %p332 = scmp.ne.s32.totalorder %s321, %s322
      %p333 = scmp.eq.s32.totalorder %s41, 0
      %p334 = por %p332, %p333
      %p335 = scmp.ne.s32.totalorder %s321, %s322
      %p336 = scmp.eq.s32.totalorder %s42, 3
      %p337 = por %p335, %p336
      %p339 = scmp.ne.s32.totalorder %s322, %s338
      %p340 = scmp.eq.s32.totalorder %s42, 0
      %p341 = por %p339, %p340
      %s342 = ssub.s32 %s44, %s51
      %p343 = scmp.eq.s32.totalorder %s342, 0
      %s345 = sadd.s32 %s344, 1
      %s346 = scalar_select %p343, %s344, %s345
      %p349 = pneg %p343
      %p350 = scmp.eq.s32.totalorder %s36, 3
      %p351 = por %p349, %p350
      %p352 = scmp.ne.s32.totalorder %s344, %s347
      %p353 = scmp.eq.s32.totalorder %s36, 0
      %p354 = por %p352, %p353
      %p355 = scmp.ne.s32.totalorder %s344, %s347
      %p356 = scmp.eq.s32.totalorder %s41, 3
      %p357 = por %p355, %p356
      %p358 = scmp.ne.s32.totalorder %s347, %s348
      %p359 = scmp.eq.s32.totalorder %s41, 0
      %p360 = por %p358, %p359
      %p361 = scmp.ne.s32.totalorder %s347, %s348
      %p362 = scmp.eq.s32.totalorder %s42, 3
      %p363 = por %p361, %p362
      %p365 = scmp.ne.s32.totalorder %s348, %s364
      %p366 = scmp.eq.s32.totalorder %s42, 0
      %p367 = por %p365, %p366
      %s368 = ssub.s32 %s43, %s55
      %p369 = scmp.eq.s32.totalorder %s368, 0
      %s371 = sadd.s32 %s370, 1
      %s372 = scalar_select %p369, %s370, %s371
      %p375 = pneg %p369
      %p376 = scmp.eq.s32.totalorder %s36, 3
      %p377 = por %p375, %p376
      %p378 = scmp.ne.s32.totalorder %s370, %s373
      %p379 = scmp.eq.s32.totalorder %s36, 0
      %p380 = por %p378, %p379
      %p381 = scmp.ne.s32.totalorder %s370, %s373
      %p382 = scmp.eq.s32.totalorder %s41, 3
      %p383 = por %p381, %p382
      %p384 = scmp.ne.s32.totalorder %s373, %s374
      %p385 = scmp.eq.s32.totalorder %s41, 0
      %p386 = por %p384, %p385
      %p387 = scmp.ne.s32.totalorder %s373, %s374
      %p388 = scmp.eq.s32.totalorder %s42, 3
      %p389 = por %p387, %p388
      %p391 = scmp.ne.s32.totalorder %s374, %s390
      %p392 = scmp.eq.s32.totalorder %s42, 0
      %p393 = por %p391, %p392
      %p394 = scmp.le.s32.totalorder 1, %s36
      %p395 = scmp.lt.s32.totalorder %s36, 5
      %p396 = pnand %p394, %p395
      %p397 = pneg %p396
      // Predicated region
      $region9: #{tpu_custom_call.1} parent=5 // pred_check
        _
      $region10: #{tpu_custom_call.1} parent=5 // pred_check_branch
        %399 = sbr.rel (%p396) target = $region12
      $region11: #{tpu_custom_call.1} parent=5 // pred_region
        %s400 = ssub.s32 %s36, 1
      $region12: #{tpu_custom_call.1} parent=5 // pred_fallthru
        _
      %p401 = scmp.lt.s32.totalorder %s36, 4
      // Predicated region
      $region13: #{tpu_custom_call.1} parent=5 // pred_check
        %p402 = pneg %p401
      $region14: #{tpu_custom_call.1} parent=5 // pred_check_branch
        %404 = sbr.rel (%p402) target = $region16
      $region15: #{tpu_custom_call.1} parent=5 // pred_region
        // Predicated region
        $region17: #{tpu_custom_call.1} parent=15 // pred_check
          %p405 = pneg %p68
        $region18: #{tpu_custom_call.1} parent=15 // pred_check_branch
          %407 = sbr.rel (%p405) target = $region20
        $region19: #{tpu_custom_call.1} parent=15 // pred_region
          %s408 = sand.u32 %s58, 1
          %s409 = scalar_lea.sflag [#allocation4], %s408
          %s410 = sand.u32 %s58, 1
          %s411 = smul.addr %s410, 16
          %s412 = scalar_lea.vmem [#allocation3], %s411
          %s413 = smul.u32 2, %s43
          %s415 = ssub.s32 256, 256
          %416 = vsyncadd %s409, %s415
          %s417 = smul.addr %s413, 128
          %s418 = scalar_lea.hbm %s0, %s417
          %s419 = sshll.u32 %s412, 4
          %s420 = int_to_ptr.vmem [resolvable:$true] %s419
          %425 = dma.hbm_to_vmem [thread:$0]  %s418, 256, %s420, %s409, 128, 128, 8
        $region20: #{tpu_custom_call.1} parent=15 // pred_fallthru
          _
        // Predicated region
        $region21: #{tpu_custom_call.1} parent=15 // pred_check
          %p426 = pneg %p94
        $region22: #{tpu_custom_call.1} parent=15 // pred_check_branch
          %428 = sbr.rel (%p426) target = $region24
        $region23: #{tpu_custom_call.1} parent=15 // pred_region
          %s429 = sand.u32 %s36, 1
          %s430 = scalar_lea.sflag [#allocation7], %s429
          %s431 = sand.u32 %s84, 1
          %s432 = smul.addr %s431, 16
          %s433 = scalar_lea.vmem [#allocation6], %s432
          %s434 = smul.u32 2, %s43
          %s436 = ssub.s32 256, 256
          %437 = vsyncadd %s430, %s436
          %s438 = smul.addr %s434, 128
          %s439 = scalar_lea.hbm %s1, %s438
          %s440 = sshll.u32 %s433, 4
          %s441 = int_to_ptr.vmem [resolvable:$true] %s440
          %446 = dma.hbm_to_vmem [thread:$0]  %s439, 256, %s441, %s430, 128, 128, 8
        $region24: #{tpu_custom_call.1} parent=15 // pred_fallthru
          _
        // Predicated region
        $region25: #{tpu_custom_call.1} parent=15 // pred_check
          %p447 = pneg %p120
        $region26: #{tpu_custom_call.1} parent=15 // pred_check_branch
          %449 = sbr.rel (%p447) target = $region28
        $region27: #{tpu_custom_call.1} parent=15 // pred_region
          %s450 = sand.u32 %s36, 1
          %s451 = scalar_lea.sflag [#allocation7], %s450
          %s452 = sand.u32 %s110, 1
          %s453 = smul.addr %s452, 128
          %s454 = scalar_lea.vmem [#allocation8], %s453
          %s456 = ssub.s32 2048, 2048
          %457 = vsyncadd %s451, %s456
          %s458 = smul.addr %s44, 16
          %s459 = smul.addr %s458, 128
          %s460 = scalar_lea.hbm %s2, %s459
          %s461 = sshll.u32 %s454, 4
          %s462 = int_to_ptr.vmem [resolvable:$true] %s461
          %467 = dma.hbm_to_vmem [thread:$0]  %s460, 2048, %s462, %s451, 128, 128, 8
        $region28: #{tpu_custom_call.1} parent=15 // pred_fallthru
          _
        // Predicated region
        $region29: #{tpu_custom_call.1} parent=15 // pred_check
          %p468 = pneg %p146
        $region30: #{tpu_custom_call.1} parent=15 // pred_check_branch
          %470 = sbr.rel (%p468) target = $region32
        $region31: #{tpu_custom_call.1} parent=15 // pred_region
          %s471 = sand.u32 %s36, 1
          %s472 = scalar_lea.sflag [#allocation10], %s471
          %s473 = sand.u32 %s136, 1
          %s474 = smul.addr %s473, 128
          %s475 = scalar_lea.vmem [#allocation9], %s474
          %s477 = ssub.s32 2048, 2048
          %478 = vsyncadd %s472, %s477
          %s479 = smul.addr %s44, 16
          %s480 = smul.addr %s479, 128
          %s481 = scalar_lea.hbm %s3, %s480
          %s482 = sshll.u32 %s475, 4
          %s483 = int_to_ptr.vmem [resolvable:$true] %s482
          %488 = dma.hbm_to_vmem [thread:$0]  %s481, 2048, %s483, %s472, 128, 128, 8
        $region32: #{tpu_custom_call.1} parent=15 // pred_fallthru
          _
        // Predicated region
        $region33: #{tpu_custom_call.1} parent=15 // pred_check
          %p489 = pneg %p172
        $region34: #{tpu_custom_call.1} parent=15 // pred_check_branch
          %491 = sbr.rel (%p489) target = $region36
        $region35: #{tpu_custom_call.1} parent=15 // pred_region
          %s492 = sand.u32 %s36, 1
          %s493 = scalar_lea.sflag [#allocation10], %s492
          %s494 = sand.u32 %s162, 1
          %s495 = smul.addr %s494, 128
          %s496 = scalar_lea.vmem [#allocation11], %s495
          %s498 = ssub.s32 2048, 2048
          %499 = vsyncadd %s493, %s498
          %s500 = smul.addr %s44, 16
          %s501 = smul.addr %s500, 128
          %s502 = scalar_lea.hbm %s4, %s501
          %s503 = sshll.u32 %s496, 4
          %s504 = int_to_ptr.vmem [resolvable:$true] %s503
          %509 = dma.hbm_to_vmem [thread:$0]  %s502, 2048, %s504, %s493, 128, 128, 8
        $region36: #{tpu_custom_call.1} parent=15 // pred_fallthru
          _
        // Predicated region
        $region37: #{tpu_custom_call.1} parent=15 // pred_check
          %p510 = pneg %p198
        $region38: #{tpu_custom_call.1} parent=15 // pred_check_branch
          %512 = sbr.rel (%p510) target = $region40
        $region39: #{tpu_custom_call.1} parent=15 // pred_region
          %s513 = sand.u32 %s36, 1
          %s514 = scalar_lea.sflag [#allocation13], %s513
          %s515 = sand.u32 %s188, 1
          %s516 = smul.addr %s515, 128
          %s517 = scalar_lea.vmem [#allocation12], %s516
          %s519 = ssub.s32 2048, 2048
          %520 = vsyncadd %s514, %s519
          %s521 = smul.addr %s44, 16
          %s522 = smul.addr %s521, 128
          %s523 = scalar_lea.hbm %s5, %s522
          %s524 = sshll.u32 %s517, 4
          %s525 = int_to_ptr.vmem [resolvable:$true] %s524
          %530 = dma.hbm_to_vmem [thread:$0]  %s523, 2048, %s525, %s514, 128, 128, 8
        $region40: #{tpu_custom_call.1} parent=15 // pred_fallthru
          _
        // Predicated region
        $region41: #{tpu_custom_call.1} parent=15 // pred_check
          %p531 = pneg %p224
        $region42: #{tpu_custom_call.1} parent=15 // pred_check_branch
          %533 = sbr.rel (%p531) target = $region44
        $region43: #{tpu_custom_call.1} parent=15 // pred_region
          %p534 = scmp.lt.s32.totalorder %s44, 1
          %s535 = scalar_select %p534, %s44, 1
          %s536 = scalar_lea.vmem %s6, %s535
        $region44: #{tpu_custom_call.1} parent=15 // pred_fallthru
          _
        // Predicated region
        $region45: #{tpu_custom_call.1} parent=15 // pred_check
          %p537 = pneg %p250
        $region46: #{tpu_custom_call.1} parent=15 // pred_check_branch
          %539 = sbr.rel (%p537) target = $region48
        $region47: #{tpu_custom_call.1} parent=15 // pred_region
          %p540 = scmp.lt.s32.totalorder %s44, 1
          %s541 = scalar_select %p540, %s44, 1
          %s542 = scalar_lea.vmem %s7, %s541
        $region48: #{tpu_custom_call.1} parent=15 // pred_fallthru
          _
        // Predicated region
        $region49: #{tpu_custom_call.1} parent=15 // pred_check
          %p543 = pneg %p276
        $region50: #{tpu_custom_call.1} parent=15 // pred_check_branch
          %545 = sbr.rel (%p543) target = $region52
        $region51: #{tpu_custom_call.1} parent=15 // pred_region
          %s546 = sand.u32 %s36, 1
          %s547 = scalar_lea.sflag [#allocation13], %s546
          %s548 = sand.u32 %s266, 1
          %s549 = smul.addr %s548, 256
          %s550 = scalar_lea.vmem [#allocation14], %s549
          %s552 = ssub.s32 4096, 4096
          %553 = vsyncadd %s547, %s552
          %s554 = smul.addr %s44, 32
          %s555 = smul.addr %s554, 128
          %s556 = scalar_lea.hbm %s8, %s555
          %s557 = sshll.u32 %s550, 4
          %s558 = int_to_ptr.vmem [resolvable:$true] %s557
          %563 = dma.hbm_to_vmem [thread:$0]  %s556, 4096, %s558, %s547, 256, 256, 16
        $region52: #{tpu_custom_call.1} parent=15 // pred_fallthru
          _
        // Predicated region
        $region53: #{tpu_custom_call.1} parent=15 // pred_check
          %p564 = pneg %p302
        $region54: #{tpu_custom_call.1} parent=15 // pred_check_branch
          %566 = sbr.rel (%p564) target = $region56
        $region55: #{tpu_custom_call.1} parent=15 // pred_region
          %s567 = sand.u32 %s292, 1
          %s568 = scalar_lea.sflag [#allocation16], %s567
          %s569 = sand.u32 %s292, 1
          %s570 = smul.addr %s569, 256
          %s571 = scalar_lea.vmem [#allocation15], %s570
          %s573 = ssub.s32 4096, 4096
          %574 = vsyncadd %s568, %s573
          %s575 = smul.addr %s44, 32
          %s576 = smul.addr %s575, 128
          %s577 = scalar_lea.hbm %s9, %s576
          %s578 = sshll.u32 %s571, 4
          %s579 = int_to_ptr.vmem [resolvable:$true] %s578
          %584 = dma.hbm_to_vmem [thread:$0]  %s577, 4096, %s579, %s568, 128, 128, 8
        $region56: #{tpu_custom_call.1} parent=15 // pred_fallthru
          _
        // Predicated region
        $region57: #{tpu_custom_call.1} parent=15 // pred_check
          %p585 = pneg %p328
        $region58: #{tpu_custom_call.1} parent=15 // pred_check_branch
          %587 = sbr.rel (%p585) target = $region60
        $region59: #{tpu_custom_call.1} parent=15 // pred_region
          %p588 = scmp.lt.s32.totalorder %s44, 1
          %s589 = scalar_select %p588, %s44, 1
          %s590 = scalar_lea.vmem %s10, %s589
        $region60: #{tpu_custom_call.1} parent=15 // pred_fallthru
          _
        // Predicated region
        $region61: #{tpu_custom_call.1} parent=15 // pred_check
          %p591 = pneg %p354
        $region62: #{tpu_custom_call.1} parent=15 // pred_check_branch
          %593 = sbr.rel (%p591) target = $region64
        $region63: #{tpu_custom_call.1} parent=15 // pred_region
          %p594 = scmp.lt.s32.totalorder %s44, 1
          %s595 = scalar_select %p594, %s44, 1
          %s596 = scalar_lea.vmem %s11, %s595
        $region64: #{tpu_custom_call.1} parent=15 // pred_fallthru
          _
      $region16: #{tpu_custom_call.1} parent=5 // pred_fallthru
        _
      %p597 = scmp.le.s32.totalorder 1, %s36
      %p598 = scmp.lt.s32.totalorder %s36, 5
      %p599 = pnand %p597, %p598
      %p600 = pneg %p599
      // Predicated region
      $region65: #{tpu_custom_call.1} parent=5 // pred_check
        _
      $region66: #{tpu_custom_call.1} parent=5 // pred_check_branch
        %602 = sbr.rel (%p599) target = $region68
      $region67: #{tpu_custom_call.1} parent=5 // pred_region
        %s603 = ssub.s32 %s36, 1
        %s604 = sand.u32 %s61, 1
        %s605 = scalar_lea.sflag [#allocation4], %s604
        %s606 = sand.u32 %s61, 1
        %s607 = smul.addr %s606, 16
        %s608 = scalar_lea.vmem [#allocation3], %s607
        // Predicated region
        $region69: #{tpu_custom_call.1} parent=67 // pred_check
          %p609 = pneg %p74
        $region70: #{tpu_custom_call.1} parent=67 // pred_check_branch
          %611 = sbr.rel (%p609) target = $region72
        $region71: #{tpu_custom_call.1} parent=67 // pred_region
          %612 = dma.done %s605, 256
        $region72: #{tpu_custom_call.1} parent=67 // pred_fallthru
          _
        %s613 = sand.u32 %s41, 1
        %s614 = scalar_lea.sflag [#allocation7], %s613
        %s615 = sand.u32 %s87, 1
        %s616 = smul.addr %s615, 16
        %s617 = scalar_lea.vmem [#allocation6], %s616
        // Predicated region
        $region73: #{tpu_custom_call.1} parent=67 // pred_check
          %p618 = pneg %p100
        $region74: #{tpu_custom_call.1} parent=67 // pred_check_branch
          %620 = sbr.rel (%p618) target = $region76
        $region75: #{tpu_custom_call.1} parent=67 // pred_region
          %621 = dma.done %s614, 256
        $region76: #{tpu_custom_call.1} parent=67 // pred_fallthru
          _
        %s622 = sand.u32 %s41, 1
        %s623 = scalar_lea.sflag [#allocation7], %s622
        %s624 = sand.u32 %s113, 1
        %s625 = smul.addr %s624, 128
        %s626 = scalar_lea.vmem [#allocation8], %s625
        // Predicated region
        $region77: #{tpu_custom_call.1} parent=67 // pred_check
          %p627 = pneg %p126
        $region78: #{tpu_custom_call.1} parent=67 // pred_check_branch
          %629 = sbr.rel (%p627) target = $region80
        $region79: #{tpu_custom_call.1} parent=67 // pred_region
          %630 = dma.done %s623, 2048
        $region80: #{tpu_custom_call.1} parent=67 // pred_fallthru
          _
        %s631 = sand.u32 %s41, 1
        %s632 = scalar_lea.sflag [#allocation10], %s631
        %s633 = sand.u32 %s139, 1
        %s634 = smul.addr %s633, 128
        %s635 = scalar_lea.vmem [#allocation9], %s634
        // Predicated region
        $region81: #{tpu_custom_call.1} parent=67 // pred_check
          %p636 = pneg %p152
        $region82: #{tpu_custom_call.1} parent=67 // pred_check_branch
          %638 = sbr.rel (%p636) target = $region84
        $region83: #{tpu_custom_call.1} parent=67 // pred_region
          %639 = dma.done %s632, 2048
        $region84: #{tpu_custom_call.1} parent=67 // pred_fallthru
          _
        %s640 = sand.u32 %s41, 1
        %s641 = scalar_lea.sflag [#allocation10], %s640
        %s642 = sand.u32 %s165, 1
        %s643 = smul.addr %s642, 128
        %s644 = scalar_lea.vmem [#allocation11], %s643
        // Predicated region
        $region85: #{tpu_custom_call.1} parent=67 // pred_check
          %p645 = pneg %p178
        $region86: #{tpu_custom_call.1} parent=67 // pred_check_branch
          %647 = sbr.rel (%p645) target = $region88
        $region87: #{tpu_custom_call.1} parent=67 // pred_region
          %648 = dma.done %s641, 2048
        $region88: #{tpu_custom_call.1} parent=67 // pred_fallthru
          _
        %s649 = sand.u32 %s41, 1
        %s650 = scalar_lea.sflag [#allocation13], %s649
        %s651 = sand.u32 %s191, 1
        %s652 = smul.addr %s651, 128
        %s653 = scalar_lea.vmem [#allocation12], %s652
        // Predicated region
        $region89: #{tpu_custom_call.1} parent=67 // pred_check
          %p654 = pneg %p204
        $region90: #{tpu_custom_call.1} parent=67 // pred_check_branch
          %656 = sbr.rel (%p654) target = $region92
        $region91: #{tpu_custom_call.1} parent=67 // pred_region
          %657 = dma.done %s650, 2048
        $region92: #{tpu_custom_call.1} parent=67 // pred_fallthru
          _
        %s658 = sand.u32 %s41, 1
        %s659 = scalar_lea.sflag [#allocation13], %s658
        %s660 = sand.u32 %s269, 1
        %s661 = smul.addr %s660, 256
        %s662 = scalar_lea.vmem [#allocation14], %s661
        // Predicated region
        $region93: #{tpu_custom_call.1} parent=67 // pred_check
          %p663 = pneg %p282
        $region94: #{tpu_custom_call.1} parent=67 // pred_check_branch
          %665 = sbr.rel (%p663) target = $region96
        $region95: #{tpu_custom_call.1} parent=67 // pred_region
          %666 = dma.done %s659, 4096
        $region96: #{tpu_custom_call.1} parent=67 // pred_fallthru
          _
        %s667 = sand.u32 %s295, 1
        %s668 = scalar_lea.sflag [#allocation16], %s667
        %s669 = sand.u32 %s295, 1
        %s670 = smul.addr %s669, 256
        %s671 = scalar_lea.vmem [#allocation15], %s670
        // Predicated region
        $region97: #{tpu_custom_call.1} parent=67 // pred_check
          %p672 = pneg %p308
        $region98: #{tpu_custom_call.1} parent=67 // pred_check_branch
          %674 = sbr.rel (%p672) target = $region100
        $region99: #{tpu_custom_call.1} parent=67 // pred_region
          %675 = dma.done %s668, 4096
        $region100: #{tpu_custom_call.1} parent=67 // pred_fallthru
          _
        %s676 = sand.u32 %s61, 1
        %s677 = scalar_lea.sflag [#allocation4], %s676
        %s678 = sand.u32 %s61, 1
        %s679 = smul.addr %s678, 16
        %s680 = scalar_lea.vmem [#allocation3], %s679
        %p681 = pneg %p74
        %p682 = pneg %p71
        %s683 = sand.u32 %s41, 1
        %s684 = scalar_lea.sflag [#allocation7], %s683
        %s685 = sand.u32 %s87, 1
        %s686 = smul.addr %s685, 16
        %s687 = scalar_lea.vmem [#allocation6], %s686
        %p688 = pneg %p100
        %p689 = pneg %p97
        %s690 = sand.u32 %s41, 1
        %s691 = scalar_lea.sflag [#allocation7], %s690
        %s692 = sand.u32 %s113, 1
        %s693 = smul.addr %s692, 128
        %s694 = scalar_lea.vmem [#allocation8], %s693
        %p695 = pneg %p126
        %p696 = pneg %p123
        %s697 = sand.u32 %s41, 1
        %s698 = scalar_lea.sflag [#allocation10], %s697
        %s699 = sand.u32 %s139, 1
        %s700 = smul.addr %s699, 128
        %s701 = scalar_lea.vmem [#allocation9], %s700
        %p702 = pneg %p152
        %p703 = pneg %p149
        %s704 = sand.u32 %s41, 1
        %s705 = scalar_lea.sflag [#allocation10], %s704
        %s706 = sand.u32 %s165, 1
        %s707 = smul.addr %s706, 128
        %s708 = scalar_lea.vmem [#allocation11], %s707
        %p709 = pneg %p178
        %p710 = pneg %p175
        %s711 = sand.u32 %s41, 1
        %s712 = scalar_lea.sflag [#allocation13], %s711
        %s713 = sand.u32 %s191, 1
        %s714 = smul.addr %s713, 128
        %s715 = scalar_lea.vmem [#allocation12], %s714
        %p716 = pneg %p204
        %p717 = pneg %p201
        %p718 = scmp.lt.s32.totalorder %s46, 1
        %s719 = scalar_select %p718, %s46, 1
        %s720 = scalar_lea.vmem %s6, %s719
        %p721 = pneg %p230
        %p722 = pneg %p227
        %p723 = scmp.lt.s32.totalorder %s46, 1
        %s724 = scalar_select %p723, %s46, 1
        %s725 = scalar_lea.vmem %s7, %s724
        %p726 = pneg %p256
        %p727 = pneg %p253
        %s728 = sand.u32 %s41, 1
        %s729 = scalar_lea.sflag [#allocation13], %s728
        %s730 = sand.u32 %s269, 1
        %s731 = smul.addr %s730, 256
        %s732 = scalar_lea.vmem [#allocation14], %s731
        %p733 = pneg %p282
        %p734 = pneg %p279
        %s735 = sand.u32 %s295, 1
        %s736 = scalar_lea.sflag [#allocation16], %s735
        %s737 = sand.u32 %s295, 1
        %s738 = smul.addr %s737, 256
        %s739 = scalar_lea.vmem [#allocation15], %s738
        %p740 = pneg %p308
        %p741 = pneg %p305
        %p742 = scmp.lt.s32.totalorder %s46, 1
        %s743 = scalar_select %p742, %s46, 1
        %s744 = scalar_lea.vmem %s10, %s743
        %p745 = pneg %p334
        %p746 = pneg %p331
        %p747 = scmp.lt.s32.totalorder %s46, 1
        %s748 = scalar_select %p747, %s46, 1
        %s749 = scalar_lea.vmem %s11, %s748
        %p750 = pneg %p360
        %p751 = pneg %p357
        %p752 = pneg %p386
        %p753 = pneg %p383
        %s754 = sand.u32 %s373, 1
        %s755 = scalar_lea.sflag [#allocation5], %s754
        %s756 = sand.u32 %s373, 1
        %s757 = smul.addr %s756, 16
        %s758 = scalar_lea.vmem [#allocation17], %s757
        %s759 = smul.u32 2, %s45
        %s760 = smul.u32 2, %s45
        %p761 = scmp.lt.s32.totalorder %s46, 1
        %s762 = scalar_select %p761, %s46, 1
        %s763 = scalar_lea.vmem %s6, %s762
        %p764 = scmp.lt.s32.totalorder %s46, 1
        %s765 = scalar_select %p764, %s46, 1
        %s766 = scalar_lea.vmem %s7, %s765
        %p767 = scmp.lt.s32.totalorder %s46, 1
        %s768 = scalar_select %p767, %s46, 1
        %s769 = scalar_lea.vmem %s10, %s768
        %p770 = scmp.lt.s32.totalorder %s46, 1
        %s771 = scalar_select %p770, %s46, 1
        %s772 = scalar_lea.vmem %s11, %s771
        %s773 = smul.u32 2, %s45
        %p774 = scmp.eq.s32.totalorder %s46, 0
        // Predicated region
        $region101: #{tpu_custom_call.1} parent=67 // pred_check
          %p775 = pneg %p774
        $region102: #{tpu_custom_call.1} parent=67 // pred_check_branch
          %777 = sbr.rel (%p775) target = $region104
        $region103: #{tpu_custom_call.1} parent=67 // pred_region
          %v778 = vld [vmem:[%s608] sm:$0xff]
          %v779 = vld [vmem:[%s608 + $0x8] sm:$0xff]
          %780 = vst [vmem:[%s758] sm:$0xff] %v778
          %781 = vst [vmem:[%s758 + $0x8] sm:$0xff] %v779
        $region104: #{tpu_custom_call.1} parent=67 // pred_fallthru
          _
        %v782 = vld [vmem:[%s758] sm:$0xff]
        %v783 = vld [vmem:[%s758 + $0x8] sm:$0xff]
        %v784 = vld [vmem:[%s617] sm:$0xff]
        %v785 = vld [vmem:[%s617 + $0x8] sm:$0xff]
        %v786 = vld [vmem:[%s626] sm:$0xff]
        %v787 = vld [vmem:[%s626 + $0x8] sm:$0xff]
        %v788 = vld [vmem:[%s626 + $0x10] sm:$0xff]
        %v789 = vld [vmem:[%s626 + $0x18] sm:$0xff]
        %v790 = vld [vmem:[%s626 + $0x20] sm:$0xff]
        %v791 = vld [vmem:[%s626 + $0x28] sm:$0xff]
        %v792 = vld [vmem:[%s626 + $0x30] sm:$0xff]
        %v793 = vld [vmem:[%s626 + $0x38] sm:$0xff]
        %v794 = vld [vmem:[%s626 + $0x40] sm:$0xff]
        %v795 = vld [vmem:[%s626 + $0x48] sm:$0xff]
        %v796 = vld [vmem:[%s626 + $0x50] sm:$0xff]
        %v797 = vld [vmem:[%s626 + $0x58] sm:$0xff]
        %v798 = vld [vmem:[%s626 + $0x60] sm:$0xff]
        %v799 = vld [vmem:[%s626 + $0x68] sm:$0xff]
        %v800 = vld [vmem:[%s626 + $0x70] sm:$0xff]
        %v801 = vld [vmem:[%s626 + $0x78] sm:$0xff]
        %802 = vmatprep.subr.mxu0 0.0
        %803 = vmatpush1.msra.mxu0 %v801
        %804 = vmatprep.subr.mxu0 0.0
        %805 = vmatpush1.msra.mxu0 %v800
        %806 = vmatprep.subr.mxu0 0.0
        %807 = vmatpush1.msra.mxu0 %v799
        %808 = vmatprep.subr.mxu0 0.0
        %809 = vmatpush1.msra.mxu0 %v798
        %810 = vmatprep.subr.mxu0 0.0
        %811 = vmatpush1.msra.mxu0 %v797
        %812 = vmatprep.subr.mxu0 0.0
        %813 = vmatpush1.msra.mxu0 %v796
        %814 = vmatprep.subr.mxu0 0.0
        %815 = vmatpush1.msra.mxu0 %v795
        %816 = vmatprep.subr.mxu0 0.0
        %817 = vmatpush1.msra.mxu0 %v794
        %818 = vmatprep.subr.mxu0 0.0
        %819 = vmatpush1.msra.mxu0 %v793
        %820 = vmatprep.subr.mxu0 0.0
        %821 = vmatpush1.msra.mxu0 %v792
        %822 = vmatprep.subr.mxu0 0.0
        %823 = vmatpush1.msra.mxu0 %v791
        %824 = vmatprep.subr.mxu0 0.0
        %825 = vmatpush1.msra.mxu0 %v790
        %826 = vmatprep.subr.mxu0 0.0
        %827 = vmatpush1.msra.mxu0 %v789
        %828 = vmatprep.subr.mxu0 0.0
        %829 = vmatpush1.msra.mxu0 %v788
        %830 = vmatprep.subr.mxu0 0.0
        %831 = vmatpush1.msra.mxu0 %v787
        %832 = vmatprep.subr.mxu0 0.0
        %833 = vmatpush1.msra.mxu0 %v786
        %834 = vmatprep.subr.mxu0 0.0
        %835 = vmatpush2.msra.mxu0 0.0
        %836 = vmatprep.subr.mxu0 0.0
        %837 = vmatpush2.msra.mxu0 0.0
        %838 = vmatprep.subr.mxu0 0.0
        %839 = vmatpush2.msra.mxu0 0.0
        %840 = vmatprep.subr.mxu0 0.0
        %841 = vmatpush2.msra.mxu0 0.0
        %842 = vmatprep.subr.mxu0 0.0
        %843 = vmatpush2.msra.mxu0 0.0
        %844 = vmatprep.subr.mxu0 0.0
        %845 = vmatpush2.msra.mxu0 0.0
        %846 = vmatprep.subr.mxu0 0.0
        %847 = vmatpush2.msra.mxu0 0.0
        %848 = vmatprep.subr.mxu0 0.0
        %849 = vmatpush2.msra.mxu0 0.0
        %850 = vmatprep.subr.mxu0 0.0
        %851 = vmatpush2.msra.mxu0 0.0
        %852 = vmatprep.subr.mxu0 0.0
        %853 = vmatpush2.msra.mxu0 0.0
        %854 = vmatprep.subr.mxu0 0.0
        %855 = vmatpush2.msra.mxu0 0.0
        %856 = vmatprep.subr.mxu0 0.0
        %857 = vmatpush2.msra.mxu0 0.0
        %858 = vmatprep.subr.mxu0 0.0
        %859 = vmatpush2.msra.mxu0 0.0
        %860 = vmatprep.subr.mxu0 0.0
        %861 = vmatpush2.msra.mxu0 0.0
        %862 = vmatprep.subr.mxu0 0.0
        %863 = vmatpush2.msra.mxu0 0.0
        %864 = vmatprep.subr.mxu0 0.0
        %865 = vmatpush2.msra.mxu0 0.0
        %866 = vmatprep.mubr.f32.mxu0 0.0
        %867 = vmatmul.mubr.f32.gmra.mxu0 %v782
        %v868 = vpop.f32.mrf.mxu0
        %v869 = vadd.f32 0.0, %v868
        %v870 = vpop.f32.mrf.mxu0
        %871 = vmatprep.mubr.f32.mxu0 0.0
        %872 = vmatmul.mubr.f32.gmra.mxu0 %v783
        %v873 = vpop.f32.mrf.mxu0
        %v874 = vadd.f32 0.0, %v873
        %v875 = vpop.f32.mrf.mxu0
        %876 = vdwg.mxu0
        %v877 = vmul.f32 %v869, 0.25
        %v878 = vmul.f32 %v874, 0.25
        %v879 = vld [vmem:[%s635] sm:$0xff]
        %v880 = vld [vmem:[%s635 + $0x8] sm:$0xff]
        %v881 = vld [vmem:[%s635 + $0x10] sm:$0xff]
        %v882 = vld [vmem:[%s635 + $0x18] sm:$0xff]
        %v883 = vld [vmem:[%s635 + $0x20] sm:$0xff]
        %v884 = vld [vmem:[%s635 + $0x28] sm:$0xff]
        %v885 = vld [vmem:[%s635 + $0x30] sm:$0xff]
        %v886 = vld [vmem:[%s635 + $0x38] sm:$0xff]
        %v887 = vld [vmem:[%s635 + $0x40] sm:$0xff]
        %v888 = vld [vmem:[%s635 + $0x48] sm:$0xff]
        %v889 = vld [vmem:[%s635 + $0x50] sm:$0xff]
        %v890 = vld [vmem:[%s635 + $0x58] sm:$0xff]
        %v891 = vld [vmem:[%s635 + $0x60] sm:$0xff]
        %v892 = vld [vmem:[%s635 + $0x68] sm:$0xff]
        %v893 = vld [vmem:[%s635 + $0x70] sm:$0xff]
        %v894 = vld [vmem:[%s635 + $0x78] sm:$0xff]
        %895 = vmatprep.subr.mxu0 0.0
        %896 = vmatpush1.msra.mxu0 %v894
        %897 = vmatprep.subr.mxu0 0.0
        %898 = vmatpush1.msra.mxu0 %v893
        %899 = vmatprep.subr.mxu0 0.0
        %900 = vmatpush1.msra.mxu0 %v892
        %901 = vmatprep.subr.mxu0 0.0
        %902 = vmatpush1.msra.mxu0 %v891
        %903 = vmatprep.subr.mxu0 0.0
        %904 = vmatpush1.msra.mxu0 %v890
        %905 = vmatprep.subr.mxu0 0.0
        %906 = vmatpush1.msra.mxu0 %v889
        %907 = vmatprep.subr.mxu0 0.0
        %908 = vmatpush1.msra.mxu0 %v888
        %909 = vmatprep.subr.mxu0 0.0
        %910 = vmatpush1.msra.mxu0 %v887
        %911 = vmatprep.subr.mxu0 0.0
        %912 = vmatpush1.msra.mxu0 %v886
        %913 = vmatprep.subr.mxu0 0.0
        %914 = vmatpush1.msra.mxu0 %v885
        %915 = vmatprep.subr.mxu0 0.0
        %916 = vmatpush1.msra.mxu0 %v884
        %917 = vmatprep.subr.mxu0 0.0
        %918 = vmatpush1.msra.mxu0 %v883
        %919 = vmatprep.subr.mxu0 0.0
        %920 = vmatpush1.msra.mxu0 %v882
        %921 = vmatprep.subr.mxu0 0.0
        %922 = vmatpush1.msra.mxu0 %v881
        %923 = vmatprep.subr.mxu0 0.0
        %924 = vmatpush1.msra.mxu0 %v880
        %925 = vmatprep.subr.mxu0 0.0
        %926 = vmatpush1.msra.mxu0 %v879
        %927 = vmatprep.subr.mxu0 0.0
        %928 = vmatpush2.msra.mxu0 0.0
        %929 = vmatprep.subr.mxu0 0.0
        %930 = vmatpush2.msra.mxu0 0.0
        %931 = vmatprep.subr.mxu0 0.0
        %932 = vmatpush2.msra.mxu0 0.0
        %933 = vmatprep.subr.mxu0 0.0
        %934 = vmatpush2.msra.mxu0 0.0
        %935 = vmatprep.subr.mxu0 0.0
        %936 = vmatpush2.msra.mxu0 0.0
        %937 = vmatprep.subr.mxu0 0.0
        %938 = vmatpush2.msra.mxu0 0.0
        %939 = vmatprep.subr.mxu0 0.0
        %940 = vmatpush2.msra.mxu0 0.0
        %941 = vmatprep.subr.mxu0 0.0
        %942 = vmatpush2.msra.mxu0 0.0
        %943 = vmatprep.subr.mxu0 0.0
        %944 = vmatpush2.msra.mxu0 0.0
        %945 = vmatprep.subr.mxu0 0.0
        %946 = vmatpush2.msra.mxu0 0.0
        %947 = vmatprep.subr.mxu0 0.0
        %948 = vmatpush2.msra.mxu0 0.0
        %949 = vmatprep.subr.mxu0 0.0
        %950 = vmatpush2.msra.mxu0 0.0
        %951 = vmatprep.subr.mxu0 0.0
        %952 = vmatpush2.msra.mxu0 0.0
        %953 = vmatprep.subr.mxu0 0.0
        %954 = vmatpush2.msra.mxu0 0.0
        %955 = vmatprep.subr.mxu0 0.0
        %956 = vmatpush2.msra.mxu0 0.0
        %957 = vmatprep.subr.mxu0 0.0
        %958 = vmatpush2.msra.mxu0 0.0
        %959 = vmatprep.mubr.f32.mxu0 0.0
        %960 = vmatmul.mubr.f32.gmra.mxu0 %v784
        %v961 = vpop.f32.mrf.mxu0
        %v962 = vadd.f32 0.0, %v961
        %v963 = vpop.f32.mrf.mxu0
        %964 = vmatprep.mubr.f32.mxu0 0.0
        %965 = vmatmul.mubr.f32.gmra.mxu0 %v785
        %v966 = vpop.f32.mrf.mxu0
        %v967 = vadd.f32 0.0, %v966
        %v968 = vpop.f32.mrf.mxu0
        %969 = vdwg.mxu0
        %v970 = vld [vmem:[%s644] sm:$0xff]
        %v971 = vld [vmem:[%s644 + $0x8] sm:$0xff]
        %v972 = vld [vmem:[%s644 + $0x10] sm:$0xff]
        %v973 = vld [vmem:[%s644 + $0x18] sm:$0xff]
        %v974 = vld [vmem:[%s644 + $0x20] sm:$0xff]
        %v975 = vld [vmem:[%s644 + $0x28] sm:$0xff]
        %v976 = vld [vmem:[%s644 + $0x30] sm:$0xff]
        %v977 = vld [vmem:[%s644 + $0x38] sm:$0xff]
        %v978 = vld [vmem:[%s644 + $0x40] sm:$0xff]
        %v979 = vld [vmem:[%s644 + $0x48] sm:$0xff]
        %v980 = vld [vmem:[%s644 + $0x50] sm:$0xff]
        %v981 = vld [vmem:[%s644 + $0x58] sm:$0xff]
        %v982 = vld [vmem:[%s644 + $0x60] sm:$0xff]
        %v983 = vld [vmem:[%s644 + $0x68] sm:$0xff]
        %v984 = vld [vmem:[%s644 + $0x70] sm:$0xff]
        %v985 = vld [vmem:[%s644 + $0x78] sm:$0xff]
        %986 = vmatprep.subr.mxu0 0.0
        %987 = vmatpush1.msra.mxu0 %v985
        %988 = vmatprep.subr.mxu0 0.0
        %989 = vmatpush1.msra.mxu0 %v984
        %990 = vmatprep.subr.mxu0 0.0
        %991 = vmatpush1.msra.mxu0 %v983
        %992 = vmatprep.subr.mxu0 0.0
        %993 = vmatpush1.msra.mxu0 %v982
        %994 = vmatprep.subr.mxu0 0.0
        %995 = vmatpush1.msra.mxu0 %v981
        %996 = vmatprep.subr.mxu0 0.0
        %997 = vmatpush1.msra.mxu0 %v980
        %998 = vmatprep.subr.mxu0 0.0
        %999 = vmatpush1.msra.mxu0 %v979
        %1000 = vmatprep.subr.mxu0 0.0
        %1001 = vmatpush1.msra.mxu0 %v978
        %1002 = vmatprep.subr.mxu0 0.0
        %1003 = vmatpush1.msra.mxu0 %v977
        %1004 = vmatprep.subr.mxu0 0.0
        %1005 = vmatpush1.msra.mxu0 %v976
        %1006 = vmatprep.subr.mxu0 0.0
        %1007 = vmatpush1.msra.mxu0 %v975
        %1008 = vmatprep.subr.mxu0 0.0
        %1009 = vmatpush1.msra.mxu0 %v974
        %1010 = vmatprep.subr.mxu0 0.0
        %1011 = vmatpush1.msra.mxu0 %v973
        %1012 = vmatprep.subr.mxu0 0.0
        %1013 = vmatpush1.msra.mxu0 %v972
        %1014 = vmatprep.subr.mxu0 0.0
        %1015 = vmatpush1.msra.mxu0 %v971
        %1016 = vmatprep.subr.mxu0 0.0
        %1017 = vmatpush1.msra.mxu0 %v970
        %1018 = vmatprep.subr.mxu0 0.0
        %1019 = vmatpush2.msra.mxu0 0.0
        %1020 = vmatprep.subr.mxu0 0.0
        %1021 = vmatpush2.msra.mxu0 0.0
        %1022 = vmatprep.subr.mxu0 0.0
        %1023 = vmatpush2.msra.mxu0 0.0
        %1024 = vmatprep.subr.mxu0 0.0
        %1025 = vmatpush2.msra.mxu0 0.0
        %1026 = vmatprep.subr.mxu0 0.0
        %1027 = vmatpush2.msra.mxu0 0.0
        %1028 = vmatprep.subr.mxu0 0.0
        %1029 = vmatpush2.msra.mxu0 0.0
        %1030 = vmatprep.subr.mxu0 0.0
        %1031 = vmatpush2.msra.mxu0 0.0
        %1032 = vmatprep.subr.mxu0 0.0
        %1033 = vmatpush2.msra.mxu0 0.0
        %1034 = vmatprep.subr.mxu0 0.0
        %1035 = vmatpush2.msra.mxu0 0.0
        %1036 = vmatprep.subr.mxu0 0.0
        %1037 = vmatpush2.msra.mxu0 0.0
        %1038 = vmatprep.subr.mxu0 0.0
        %1039 = vmatpush2.msra.mxu0 0.0
        %1040 = vmatprep.subr.mxu0 0.0
        %1041 = vmatpush2.msra.mxu0 0.0
        %1042 = vmatprep.subr.mxu0 0.0
        %1043 = vmatpush2.msra.mxu0 0.0
        %1044 = vmatprep.subr.mxu0 0.0
        %1045 = vmatpush2.msra.mxu0 0.0
        %1046 = vmatprep.subr.mxu0 0.0
        %1047 = vmatpush2.msra.mxu0 0.0
        %1048 = vmatprep.subr.mxu0 0.0
        %1049 = vmatpush2.msra.mxu0 0.0
        %1050 = vmatprep.mubr.f32.mxu0 0.0
        %1051 = vmatmul.mubr.f32.gmra.mxu0 %v784
        %v1052 = vpop.f32.mrf.mxu0
        %v1053 = vadd.f32 0.0, %v1052
        %v1054 = vpop.f32.mrf.mxu0
        %1055 = vmatprep.mubr.f32.mxu0 0.0
        %1056 = vmatmul.mubr.f32.gmra.mxu0 %v785
        %v1057 = vpop.f32.mrf.mxu0
        %v1058 = vadd.f32 0.0, %v1057
        %v1059 = vpop.f32.mrf.mxu0
        %1060 = vdwg.mxu0
        %vm1061 = vcmask 130048
        %v1063 = vsel %vm1061, %v877, 0
        %v1066 = vsel %vm1061, %v962, 0
        %1068 = vmatprep.subr.mxu0 0.0
        %1069 = vmatpush1.xpose.msra.mxu0 0.0
        %1070 = vmatprep.subr.mxu0 0.0
        %1071 = vmatpush1.xpose.msra.mxu0 0.0
        %1072 = vmatprep.subr.mxu0 0.0
        %1073 = vmatpush1.xpose.msra.mxu0 0.0
        %1074 = vmatprep.subr.mxu0 0.0
        %1075 = vmatpush1.xpose.msra.mxu0 0.0
        %1076 = vmatprep.subr.mxu0 0.0
        %1077 = vmatpush1.xpose.msra.mxu0 0.0
        %1078 = vmatprep.subr.mxu0 0.0
        %1079 = vmatpush1.xpose.msra.mxu0 0.0
        %1080 = vmatprep.subr.mxu0 0.0
        %1081 = vmatpush1.xpose.msra.mxu0 0.0
        %1082 = vmatprep.subr.mxu0 0.0
        %1083 = vmatpush1.xpose.msra.mxu0 0.0
        %1084 = vmatprep.subr.mxu0 0.0
        %1085 = vmatpush1.xpose.msra.mxu0 0.0
        %1086 = vmatprep.subr.mxu0 0.0
        %1087 = vmatpush1.xpose.msra.mxu0 0.0
        %1088 = vmatprep.subr.mxu0 0.0
        %1089 = vmatpush1.xpose.msra.mxu0 0.0
        %1090 = vmatprep.subr.mxu0 0.0
        %1091 = vmatpush1.xpose.msra.mxu0 0.0
        %1092 = vmatprep.subr.mxu0 0.0
        %1093 = vmatpush1.xpose.msra.mxu0 0.0
        %1094 = vmatprep.subr.mxu0 0.0
        %1095 = vmatpush1.xpose.msra.mxu0 0.0
        %1096 = vmatprep.subr.mxu0 0.0
        %1097 = vmatpush1.xpose.msra.mxu0 0.0
        %1098 = vmatprep.subr.mxu0 0.0
        %1099 = vmatpush1.xpose.msra.mxu0 %v1066
        %1100 = vmatprep.subr.mxu0 0.0
        %1101 = vmatpush2.xpose.msra.mxu0 0.0
        %1102 = vmatprep.subr.mxu0 0.0
        %1103 = vmatpush2.xpose.msra.mxu0 0.0
        %1104 = vmatprep.subr.mxu0 0.0
        %1105 = vmatpush2.xpose.msra.mxu0 0.0
        %1106 = vmatprep.subr.mxu0 0.0
        %1107 = vmatpush2.xpose.msra.mxu0 0.0
        %1108 = vmatprep.subr.mxu0 0.0
        %1109 = vmatpush2.xpose.msra.mxu0 0.0
        %1110 = vmatprep.subr.mxu0 0.0
        %1111 = vmatpush2.xpose.msra.mxu0 0.0
        %1112 = vmatprep.subr.mxu0 0.0
        %1113 = vmatpush2.xpose.msra.mxu0 0.0
        %1114 = vmatprep.subr.mxu0 0.0
        %1115 = vmatpush2.xpose.msra.mxu0 0.0
        %1116 = vmatprep.subr.mxu0 0.0
        %1117 = vmatpush2.xpose.msra.mxu0 0.0
        %1118 = vmatprep.subr.mxu0 0.0
        %1119 = vmatpush2.xpose.msra.mxu0 0.0
        %1120 = vmatprep.subr.mxu0 0.0
        %1121 = vmatpush2.xpose.msra.mxu0 0.0
        %1122 = vmatprep.subr.mxu0 0.0
        %1123 = vmatpush2.xpose.msra.mxu0 0.0
        %1124 = vmatprep.subr.mxu0 0.0
        %1125 = vmatpush2.xpose.msra.mxu0 0.0
        %1126 = vmatprep.subr.mxu0 0.0
        %1127 = vmatpush2.xpose.msra.mxu0 0.0
        %1128 = vmatprep.subr.mxu0 0.0
        %1129 = vmatpush2.xpose.msra.mxu0 0.0
        %1130 = vmatprep.subr.mxu0 0.0
        %1131 = vmatpush2.xpose.msra.mxu0 0.0
        %1132 = vmatprep.mubr.f32.mxu0 0.0
        %1133 = vmatmul.mubr.f32.gmra.mxu0 %v1063
        %v1134 = vpop.f32.mrf.mxu0
        %v1135 = vadd.f32 0.0, %v1134
        %v1136 = vpop.f32.mrf.mxu0
        %1137 = vdwg.mxu0
        %vm1138 = vcmask 64512
        %v1139 = vsel %vm1138, %v1135, -inf
        %1140 = vmax.xlane.f32.xlu0 %v1139
        %v1141 = vpop.xlane.xlu0 %1140
        %v1142 = vsub.f32 %v1135, %v1141
        %v1143 = vmul.f32 %v1142, 1.442695
        %v1144 = vpow.pop %v1143
        %v1145 = vsel %vm1138, %v1144, 0.0
        %1146 = vadd.xlane.f32.xlu0 %v1145
        %v1147 = vpop.xlane.xlu0 %1146
        %v1148 = vrcp.pop %v1147
        %v1149 = vmul.f32 %v1144, %v1148
        %v1151 = vsel %vm1138, %v1149, 0
        %1153 = vmatprep.subr.mxu0 0.0
        %1154 = vmatpush1.msra.mxu0 0.0
        %1155 = vmatprep.subr.mxu0 0.0
        %1156 = vmatpush1.msra.mxu0 0.0
        %1157 = vmatprep.subr.mxu0 0.0
        %1158 = vmatpush1.msra.mxu0 0.0
        %1159 = vmatprep.subr.mxu0 0.0
        %1160 = vmatpush1.msra.mxu0 0.0
        %1161 = vmatprep.subr.mxu0 0.0
        %1162 = vmatpush1.msra.mxu0 0.0
        %1163 = vmatprep.subr.mxu0 0.0
        %1164 = vmatpush1.msra.mxu0 0.0
        %1165 = vmatprep.subr.mxu0 0.0
        %1166 = vmatpush1.msra.mxu0 0.0
        %1167 = vmatprep.subr.mxu0 0.0
        %1168 = vmatpush1.msra.mxu0 0.0
        %1169 = vmatprep.subr.mxu0 0.0
        %1170 = vmatpush1.msra.mxu0 0.0
        %1171 = vmatprep.subr.mxu0 0.0
        %1172 = vmatpush1.msra.mxu0 0.0
        %1173 = vmatprep.subr.mxu0 0.0
        %1174 = vmatpush1.msra.mxu0 0.0
        %1175 = vmatprep.subr.mxu0 0.0
        %1176 = vmatpush1.msra.mxu0 0.0
        %1177 = vmatprep.subr.mxu0 0.0
        %1178 = vmatpush1.msra.mxu0 0.0
        %1179 = vmatprep.subr.mxu0 0.0
        %1180 = vmatpush1.msra.mxu0 0.0
        %1181 = vmatprep.subr.mxu0 0.0
        %1182 = vmatpush1.msra.mxu0 0.0
        %1183 = vmatprep.subr.mxu0 0.0
        %1184 = vmatpush1.msra.mxu0 %v1053
        %1185 = vmatprep.subr.mxu0 0.0
        %1186 = vmatpush2.msra.mxu0 0.0
        %1187 = vmatprep.subr.mxu0 0.0
        %1188 = vmatpush2.msra.mxu0 0.0
        %1189 = vmatprep.subr.mxu0 0.0
        %1190 = vmatpush2.msra.mxu0 0.0
        %1191 = vmatprep.subr.mxu0 0.0
        %1192 = vmatpush2.msra.mxu0 0.0
        %1193 = vmatprep.subr.mxu0 0.0
        %1194 = vmatpush2.msra.mxu0 0.0
        %1195 = vmatprep.subr.mxu0 0.0
        %1196 = vmatpush2.msra.mxu0 0.0
        %1197 = vmatprep.subr.mxu0 0.0
        %1198 = vmatpush2.msra.mxu0 0.0
        %1199 = vmatprep.subr.mxu0 0.0
        %1200 = vmatpush2.msra.mxu0 0.0
        %1201 = vmatprep.subr.mxu0 0.0
        %1202 = vmatpush2.msra.mxu0 0.0
        %1203 = vmatprep.subr.mxu0 0.0
        %1204 = vmatpush2.msra.mxu0 0.0
        %1205 = vmatprep.subr.mxu0 0.0
        %1206 = vmatpush2.msra.mxu0 0.0
        %1207 = vmatprep.subr.mxu0 0.0
        %1208 = vmatpush2.msra.mxu0 0.0
        %1209 = vmatprep.subr.mxu0 0.0
        %1210 = vmatpush2.msra.mxu0 0.0
        %1211 = vmatprep.subr.mxu0 0.0
        %1212 = vmatpush2.msra.mxu0 0.0
        %1213 = vmatprep.subr.mxu0 0.0
        %1214 = vmatpush2.msra.mxu0 0.0
        %1215 = vmatprep.subr.mxu0 0.0
        %1216 = vmatpush2.msra.mxu0 0.0
        %1217 = vmatprep.mubr.f32.mxu0 0.0
        %1218 = vmatmul.mubr.f32.gmra.mxu0 %v1151
        %v1219 = vpop.f32.mrf.mxu0
        %v1220 = vadd.f32 0.0, %v1219
        %v1221 = vpop.f32.mrf.mxu0
        %1222 = vdwg.mxu0
        %1223 = vrot.lane.b32.xlu0 %v877, 112
        %v1224 = vpop.permute.xlu0 %1223
        %1225 = vrot.lane.b32.xlu0 %v962, 112
        %v1226 = vpop.permute.xlu0 %1225
        %v1227 = vsel %vm1061, %v1224, 0
        %v1229 = vsel %vm1061, %v1226, 0
        %1231 = vmatprep.subr.mxu0 0.0
        %1232 = vmatpush1.xpose.msra.mxu0 0.0
        %1233 = vmatprep.subr.mxu0 0.0
        %1234 = vmatpush1.xpose.msra.mxu0 0.0
        %1235 = vmatprep.subr.mxu0 0.0
        %1236 = vmatpush1.xpose.msra.mxu0 0.0
        %1237 = vmatprep.subr.mxu0 0.0
        %1238 = vmatpush1.xpose.msra.mxu0 0.0
        %1239 = vmatprep.subr.mxu0 0.0
        %1240 = vmatpush1.xpose.msra.mxu0 0.0
        %1241 = vmatprep.subr.mxu0 0.0
        %1242 = vmatpush1.xpose.msra.mxu0 0.0
        %1243 = vmatprep.subr.mxu0 0.0
        %1244 = vmatpush1.xpose.msra.mxu0 0.0
        %1245 = vmatprep.subr.mxu0 0.0
        %1246 = vmatpush1.xpose.msra.mxu0 0.0
        %1247 = vmatprep.subr.mxu0 0.0
        %1248 = vmatpush1.xpose.msra.mxu0 0.0
        %1249 = vmatprep.subr.mxu0 0.0
        %1250 = vmatpush1.xpose.msra.mxu0 0.0
        %1251 = vmatprep.subr.mxu0 0.0
        %1252 = vmatpush1.xpose.msra.mxu0 0.0
        %1253 = vmatprep.subr.mxu0 0.0
        %1254 = vmatpush1.xpose.msra.mxu0 0.0
        %1255 = vmatprep.subr.mxu0 0.0
        %1256 = vmatpush1.xpose.msra.mxu0 0.0
        %1257 = vmatprep.subr.mxu0 0.0
        %1258 = vmatpush1.xpose.msra.mxu0 0.0
        %1259 = vmatprep.subr.mxu0 0.0
        %1260 = vmatpush1.xpose.msra.mxu0 0.0
        %1261 = vmatprep.subr.mxu0 0.0
        %1262 = vmatpush1.xpose.msra.mxu0 %v1229
        %1263 = vmatprep.subr.mxu0 0.0
        %1264 = vmatpush2.xpose.msra.mxu0 0.0
        %1265 = vmatprep.subr.mxu0 0.0
        %1266 = vmatpush2.xpose.msra.mxu0 0.0
        %1267 = vmatprep.subr.mxu0 0.0
        %1268 = vmatpush2.xpose.msra.mxu0 0.0
        %1269 = vmatprep.subr.mxu0 0.0
        %1270 = vmatpush2.xpose.msra.mxu0 0.0
        %1271 = vmatprep.subr.mxu0 0.0
        %1272 = vmatpush2.xpose.msra.mxu0 0.0
        %1273 = vmatprep.subr.mxu0 0.0
        %1274 = vmatpush2.xpose.msra.mxu0 0.0
        %1275 = vmatprep.subr.mxu0 0.0
        %1276 = vmatpush2.xpose.msra.mxu0 0.0
        %1277 = vmatprep.subr.mxu0 0.0
        %1278 = vmatpush2.xpose.msra.mxu0 0.0
        %1279 = vmatprep.subr.mxu0 0.0
        %1280 = vmatpush2.xpose.msra.mxu0 0.0
        %1281 = vmatprep.subr.mxu0 0.0
        %1282 = vmatpush2.xpose.msra.mxu0 0.0
        %1283 = vmatprep.subr.mxu0 0.0
        %1284 = vmatpush2.xpose.msra.mxu0 0.0
        %1285 = vmatprep.subr.mxu0 0.0
        %1286 = vmatpush2.xpose.msra.mxu0 0.0
        %1287 = vmatprep.subr.mxu0 0.0
        %1288 = vmatpush2.xpose.msra.mxu0 0.0
        %1289 = vmatprep.subr.mxu0 0.0
        %1290 = vmatpush2.xpose.msra.mxu0 0.0
        %1291 = vmatprep.subr.mxu0 0.0
        %1292 = vmatpush2.xpose.msra.mxu0 0.0
        %1293 = vmatprep.subr.mxu0 0.0
        %1294 = vmatpush2.xpose.msra.mxu0 0.0
        %1295 = vmatprep.mubr.f32.mxu0 0.0
        %1296 = vmatmul.mubr.f32.gmra.mxu0 %v1227
        %v1297 = vpop.f32.mrf.mxu0
        %v1298 = vadd.f32 0.0, %v1297
        %v1299 = vpop.f32.mrf.mxu0
        %1300 = vdwg.mxu0
        %v1301 = vsel %vm1138, %v1298, -inf
        %1302 = vmax.xlane.f32.xlu0 %v1301
        %v1303 = vpop.xlane.xlu0 %1302
        %v1304 = vsub.f32 %v1298, %v1303
        %v1305 = vmul.f32 %v1304, 1.442695
        %v1306 = vpow.pop %v1305
        %v1307 = vsel %vm1138, %v1306, 0.0
        %1308 = vadd.xlane.f32.xlu0 %v1307
        %v1309 = vpop.xlane.xlu0 %1308
        %v1310 = vrcp.pop %v1309
        %v1311 = vmul.f32 %v1306, %v1310
        %1313 = vrot.lane.b32.xlu0 %v1053, 112
        %v1314 = vpop.permute.xlu0 %1313
        %v1317 = vsel %vm1138, %v1311, 0
        %1319 = vmatprep.subr.mxu0 0.0
        %1320 = vmatpush1.msra.mxu0 0.0
        %1321 = vmatprep.subr.mxu0 0.0
        %1322 = vmatpush1.msra.mxu0 0.0
        %1323 = vmatprep.subr.mxu0 0.0
        %1324 = vmatpush1.msra.mxu0 0.0
        %1325 = vmatprep.subr.mxu0 0.0
        %1326 = vmatpush1.msra.mxu0 0.0
        %1327 = vmatprep.subr.mxu0 0.0
        %1328 = vmatpush1.msra.mxu0 0.0
        %1329 = vmatprep.subr.mxu0 0.0
        %1330 = vmatpush1.msra.mxu0 0.0
        %1331 = vmatprep.subr.mxu0 0.0
        %1332 = vmatpush1.msra.mxu0 0.0
        %1333 = vmatprep.subr.mxu0 0.0
        %1334 = vmatpush1.msra.mxu0 0.0
        %1335 = vmatprep.subr.mxu0 0.0
        %1336 = vmatpush1.msra.mxu0 0.0
        %1337 = vmatprep.subr.mxu0 0.0
        %1338 = vmatpush1.msra.mxu0 0.0
        %1339 = vmatprep.subr.mxu0 0.0
        %1340 = vmatpush1.msra.mxu0 0.0
        %1341 = vmatprep.subr.mxu0 0.0
        %1342 = vmatpush1.msra.mxu0 0.0
        %1343 = vmatprep.subr.mxu0 0.0
        %1344 = vmatpush1.msra.mxu0 0.0
        %1345 = vmatprep.subr.mxu0 0.0
        %1346 = vmatpush1.msra.mxu0 0.0
        %1347 = vmatprep.subr.mxu0 0.0
        %1348 = vmatpush1.msra.mxu0 0.0
        %1349 = vmatprep.subr.mxu0 0.0
        %1350 = vmatpush1.msra.mxu0 %v1314
        %1351 = vmatprep.subr.mxu0 0.0
        %1352 = vmatpush2.msra.mxu0 0.0
        %1353 = vmatprep.subr.mxu0 0.0
        %1354 = vmatpush2.msra.mxu0 0.0
        %1355 = vmatprep.subr.mxu0 0.0
        %1356 = vmatpush2.msra.mxu0 0.0
        %1357 = vmatprep.subr.mxu0 0.0
        %1358 = vmatpush2.msra.mxu0 0.0
        %1359 = vmatprep.subr.mxu0 0.0
        %1360 = vmatpush2.msra.mxu0 0.0
        %1361 = vmatprep.subr.mxu0 0.0
        %1362 = vmatpush2.msra.mxu0 0.0
        %1363 = vmatprep.subr.mxu0 0.0
        %1364 = vmatpush2.msra.mxu0 0.0
        %1365 = vmatprep.subr.mxu0 0.0
        %1366 = vmatpush2.msra.mxu0 0.0
        %1367 = vmatprep.subr.mxu0 0.0
        %1368 = vmatpush2.msra.mxu0 0.0
        %1369 = vmatprep.subr.mxu0 0.0
        %1370 = vmatpush2.msra.mxu0 0.0
        %1371 = vmatprep.subr.mxu0 0.0
        %1372 = vmatpush2.msra.mxu0 0.0
        %1373 = vmatprep.subr.mxu0 0.0
        %1374 = vmatpush2.msra.mxu0 0.0
        %1375 = vmatprep.subr.mxu0 0.0
        %1376 = vmatpush2.msra.mxu0 0.0
        %1377 = vmatprep.subr.mxu0 0.0
        %1378 = vmatpush2.msra.mxu0 0.0
        %1379 = vmatprep.subr.mxu0 0.0
        %1380 = vmatpush2.msra.mxu0 0.0
        %1381 = vmatprep.subr.mxu0 0.0
        %1382 = vmatpush2.msra.mxu0 0.0
        %1383 = vmatprep.mubr.f32.mxu0 0.0
        %1384 = vmatmul.mubr.f32.gmra.mxu0 %v1317
        %v1385 = vpop.f32.mrf.mxu0
        %v1386 = vadd.f32 0.0, %v1385
        %v1387 = vpop.f32.mrf.mxu0
        %1388 = vdwg.mxu0
        %1389 = vrot.lane.b32.xlu0 %v877, 96
        %v1390 = vpop.permute.xlu0 %1389
        %1391 = vrot.lane.b32.xlu0 %v962, 96
        %v1392 = vpop.permute.xlu0 %1391
        %v1393 = vsel %vm1061, %v1390, 0
        %v1395 = vsel %vm1061, %v1392, 0
        %1397 = vmatprep.subr.mxu0 0.0
        %1398 = vmatpush1.xpose.msra.mxu0 0.0
        %1399 = vmatprep.subr.mxu0 0.0
        %1400 = vmatpush1.xpose.msra.mxu0 0.0
        %1401 = vmatprep.subr.mxu0 0.0
        %1402 = vmatpush1.xpose.msra.mxu0 0.0
        %1403 = vmatprep.subr.mxu0 0.0
        %1404 = vmatpush1.xpose.msra.mxu0 0.0
        %1405 = vmatprep.subr.mxu0 0.0
        %1406 = vmatpush1.xpose.msra.mxu0 0.0
        %1407 = vmatprep.subr.mxu0 0.0
        %1408 = vmatpush1.xpose.msra.mxu0 0.0
        %1409 = vmatprep.subr.mxu0 0.0
        %1410 = vmatpush1.xpose.msra.mxu0 0.0
        %1411 = vmatprep.subr.mxu0 0.0
        %1412 = vmatpush1.xpose.msra.mxu0 0.0
        %1413 = vmatprep.subr.mxu0 0.0
        %1414 = vmatpush1.xpose.msra.mxu0 0.0
        %1415 = vmatprep.subr.mxu0 0.0
        %1416 = vmatpush1.xpose.msra.mxu0 0.0
        %1417 = vmatprep.subr.mxu0 0.0
        %1418 = vmatpush1.xpose.msra.mxu0 0.0
        %1419 = vmatprep.subr.mxu0 0.0
        %1420 = vmatpush1.xpose.msra.mxu0 0.0
        %1421 = vmatprep.subr.mxu0 0.0
        %1422 = vmatpush1.xpose.msra.mxu0 0.0
        %1423 = vmatprep.subr.mxu0 0.0
        %1424 = vmatpush1.xpose.msra.mxu0 0.0
        %1425 = vmatprep.subr.mxu0 0.0
        %1426 = vmatpush1.xpose.msra.mxu0 0.0
        %1427 = vmatprep.subr.mxu0 0.0
        %1428 = vmatpush1.xpose.msra.mxu0 %v1395
        %1429 = vmatprep.subr.mxu0 0.0
        %1430 = vmatpush2.xpose.msra.mxu0 0.0
        %1431 = vmatprep.subr.mxu0 0.0
        %1432 = vmatpush2.xpose.msra.mxu0 0.0
        %1433 = vmatprep.subr.mxu0 0.0
        %1434 = vmatpush2.xpose.msra.mxu0 0.0
        %1435 = vmatprep.subr.mxu0 0.0
        %1436 = vmatpush2.xpose.msra.mxu0 0.0
        %1437 = vmatprep.subr.mxu0 0.0
        %1438 = vmatpush2.xpose.msra.mxu0 0.0
        %1439 = vmatprep.subr.mxu0 0.0
        %1440 = vmatpush2.xpose.msra.mxu0 0.0
        %1441 = vmatprep.subr.mxu0 0.0
        %1442 = vmatpush2.xpose.msra.mxu0 0.0
        %1443 = vmatprep.subr.mxu0 0.0
        %1444 = vmatpush2.xpose.msra.mxu0 0.0
        %1445 = vmatprep.subr.mxu0 0.0
        %1446 = vmatpush2.xpose.msra.mxu0 0.0
        %1447 = vmatprep.subr.mxu0 0.0
        %1448 = vmatpush2.xpose.msra.mxu0 0.0
        %1449 = vmatprep.subr.mxu0 0.0
        %1450 = vmatpush2.xpose.msra.mxu0 0.0
        %1451 = vmatprep.subr.mxu0 0.0
        %1452 = vmatpush2.xpose.msra.mxu0 0.0
        %1453 = vmatprep.subr.mxu0 0.0
        %1454 = vmatpush2.xpose.msra.mxu0 0.0
        %1455 = vmatprep.subr.mxu0 0.0
        %1456 = vmatpush2.xpose.msra.mxu0 0.0
        %1457 = vmatprep.subr.mxu0 0.0
        %1458 = vmatpush2.xpose.msra.mxu0 0.0
        %1459 = vmatprep.subr.mxu0 0.0
        %1460 = vmatpush2.xpose.msra.mxu0 0.0
        %1461 = vmatprep.mubr.f32.mxu0 0.0
        %1462 = vmatmul.mubr.f32.gmra.mxu0 %v1393
        %v1463 = vpop.f32.mrf.mxu0
        %v1464 = vadd.f32 0.0, %v1463
        %v1465 = vpop.f32.mrf.mxu0
        %1466 = vdwg.mxu0
        %v1467 = vsel %vm1138, %v1464, -inf
        %1468 = vmax.xlane.f32.xlu0 %v1467
        %v1469 = vpop.xlane.xlu0 %1468
        %v1470 = vsub.f32 %v1464, %v1469
        %v1471 = vmul.f32 %v1470, 1.442695
        %v1472 = vpow.pop %v1471
        %v1473 = vsel %vm1138, %v1472, 0.0
        %1474 = vadd.xlane.f32.xlu0 %v1473
        %v1475 = vpop.xlane.xlu0 %1474
        %v1476 = vrcp.pop %v1475
        %v1477 = vmul.f32 %v1472, %v1476
        %1478 = vrot.lane.b32.xlu0 %v1053, 96
        %v1479 = vpop.permute.xlu0 %1478
        %v1482 = vsel %vm1138, %v1477, 0
        %1484 = vmatprep.subr.mxu0 0.0
        %1485 = vmatpush1.msra.mxu0 0.0
        %1486 = vmatprep.subr.mxu0 0.0
        %1487 = vmatpush1.msra.mxu0 0.0
        %1488 = vmatprep.subr.mxu0 0.0
        %1489 = vmatpush1.msra.mxu0 0.0
        %1490 = vmatprep.subr.mxu0 0.0
        %1491 = vmatpush1.msra.mxu0 0.0
        %1492 = vmatprep.subr.mxu0 0.0
        %1493 = vmatpush1.msra.mxu0 0.0
        %1494 = vmatprep.subr.mxu0 0.0
        %1495 = vmatpush1.msra.mxu0 0.0
        %1496 = vmatprep.subr.mxu0 0.0
        %1497 = vmatpush1.msra.mxu0 0.0
        %1498 = vmatprep.subr.mxu0 0.0
        %1499 = vmatpush1.msra.mxu0 0.0
        %1500 = vmatprep.subr.mxu0 0.0
        %1501 = vmatpush1.msra.mxu0 0.0
        %1502 = vmatprep.subr.mxu0 0.0
        %1503 = vmatpush1.msra.mxu0 0.0
        %1504 = vmatprep.subr.mxu0 0.0
        %1505 = vmatpush1.msra.mxu0 0.0
        %1506 = vmatprep.subr.mxu0 0.0
        %1507 = vmatpush1.msra.mxu0 0.0
        %1508 = vmatprep.subr.mxu0 0.0
        %1509 = vmatpush1.msra.mxu0 0.0
        %1510 = vmatprep.subr.mxu0 0.0
        %1511 = vmatpush1.msra.mxu0 0.0
        %1512 = vmatprep.subr.mxu0 0.0
        %1513 = vmatpush1.msra.mxu0 0.0
        %1514 = vmatprep.subr.mxu0 0.0
        %1515 = vmatpush1.msra.mxu0 %v1479
        %1516 = vmatprep.subr.mxu0 0.0
        %1517 = vmatpush2.msra.mxu0 0.0
        %1518 = vmatprep.subr.mxu0 0.0
        %1519 = vmatpush2.msra.mxu0 0.0
        %1520 = vmatprep.subr.mxu0 0.0
        %1521 = vmatpush2.msra.mxu0 0.0
        %1522 = vmatprep.subr.mxu0 0.0
        %1523 = vmatpush2.msra.mxu0 0.0
        %1524 = vmatprep.subr.mxu0 0.0
        %1525 = vmatpush2.msra.mxu0 0.0
        %1526 = vmatprep.subr.mxu0 0.0
        %1527 = vmatpush2.msra.mxu0 0.0
        %1528 = vmatprep.subr.mxu0 0.0
        %1529 = vmatpush2.msra.mxu0 0.0
        %1530 = vmatprep.subr.mxu0 0.0
        %1531 = vmatpush2.msra.mxu0 0.0
        %1532 = vmatprep.subr.mxu0 0.0
        %1533 = vmatpush2.msra.mxu0 0.0
        %1534 = vmatprep.subr.mxu0 0.0
        %1535 = vmatpush2.msra.mxu0 0.0
        %1536 = vmatprep.subr.mxu0 0.0
        %1537 = vmatpush2.msra.mxu0 0.0
        %1538 = vmatprep.subr.mxu0 0.0
        %1539 = vmatpush2.msra.mxu0 0.0
        %1540 = vmatprep.subr.mxu0 0.0
        %1541 = vmatpush2.msra.mxu0 0.0
        %1542 = vmatprep.subr.mxu0 0.0
        %1543 = vmatpush2.msra.mxu0 0.0
        %1544 = vmatprep.subr.mxu0 0.0
        %1545 = vmatpush2.msra.mxu0 0.0
        %1546 = vmatprep.subr.mxu0 0.0
        %1547 = vmatpush2.msra.mxu0 0.0
        %1548 = vmatprep.mubr.f32.mxu0 0.0
        %1549 = vmatmul.mubr.f32.gmra.mxu0 %v1482
        %v1550 = vpop.f32.mrf.mxu0
        %v1551 = vadd.f32 0.0, %v1550
        %v1552 = vpop.f32.mrf.mxu0
        %1553 = vdwg.mxu0
        %1554 = vrot.lane.b32.xlu0 %v877, 80
        %v1555 = vpop.permute.xlu0 %1554
        %1556 = vrot.lane.b32.xlu0 %v962, 80
        %v1557 = vpop.permute.xlu0 %1556
        %v1558 = vsel %vm1061, %v1555, 0
        %v1560 = vsel %vm1061, %v1557, 0
        %1562 = vmatprep.subr.mxu0 0.0
        %1563 = vmatpush1.xpose.msra.mxu0 0.0
        %1564 = vmatprep.subr.mxu0 0.0
        %1565 = vmatpush1.xpose.msra.mxu0 0.0
        %1566 = vmatprep.subr.mxu0 0.0
        %1567 = vmatpush1.xpose.msra.mxu0 0.0
        %1568 = vmatprep.subr.mxu0 0.0
        %1569 = vmatpush1.xpose.msra.mxu0 0.0
        %1570 = vmatprep.subr.mxu0 0.0
        %1571 = vmatpush1.xpose.msra.mxu0 0.0
        %1572 = vmatprep.subr.mxu0 0.0
        %1573 = vmatpush1.xpose.msra.mxu0 0.0
        %1574 = vmatprep.subr.mxu0 0.0
        %1575 = vmatpush1.xpose.msra.mxu0 0.0
        %1576 = vmatprep.subr.mxu0 0.0
        %1577 = vmatpush1.xpose.msra.mxu0 0.0
        %1578 = vmatprep.subr.mxu0 0.0
        %1579 = vmatpush1.xpose.msra.mxu0 0.0
        %1580 = vmatprep.subr.mxu0 0.0
        %1581 = vmatpush1.xpose.msra.mxu0 0.0
        %1582 = vmatprep.subr.mxu0 0.0
        %1583 = vmatpush1.xpose.msra.mxu0 0.0
        %1584 = vmatprep.subr.mxu0 0.0
        %1585 = vmatpush1.xpose.msra.mxu0 0.0
        %1586 = vmatprep.subr.mxu0 0.0
        %1587 = vmatpush1.xpose.msra.mxu0 0.0
        %1588 = vmatprep.subr.mxu0 0.0
        %1589 = vmatpush1.xpose.msra.mxu0 0.0
        %1590 = vmatprep.subr.mxu0 0.0
        %1591 = vmatpush1.xpose.msra.mxu0 0.0
        %1592 = vmatprep.subr.mxu0 0.0
        %1593 = vmatpush1.xpose.msra.mxu0 %v1560
        %1594 = vmatprep.subr.mxu0 0.0
        %1595 = vmatpush2.xpose.msra.mxu0 0.0
        %1596 = vmatprep.subr.mxu0 0.0
        %1597 = vmatpush2.xpose.msra.mxu0 0.0
        %1598 = vmatprep.subr.mxu0 0.0
        %1599 = vmatpush2.xpose.msra.mxu0 0.0
        %1600 = vmatprep.subr.mxu0 0.0
        %1601 = vmatpush2.xpose.msra.mxu0 0.0
        %1602 = vmatprep.subr.mxu0 0.0
        %1603 = vmatpush2.xpose.msra.mxu0 0.0
        %1604 = vmatprep.subr.mxu0 0.0
        %1605 = vmatpush2.xpose.msra.mxu0 0.0
        %1606 = vmatprep.subr.mxu0 0.0
        %1607 = vmatpush2.xpose.msra.mxu0 0.0
        %1608 = vmatprep.subr.mxu0 0.0
        %1609 = vmatpush2.xpose.msra.mxu0 0.0
        %1610 = vmatprep.subr.mxu0 0.0
        %1611 = vmatpush2.xpose.msra.mxu0 0.0
        %1612 = vmatprep.subr.mxu0 0.0
        %1613 = vmatpush2.xpose.msra.mxu0 0.0
        %1614 = vmatprep.subr.mxu0 0.0
        %1615 = vmatpush2.xpose.msra.mxu0 0.0
        %1616 = vmatprep.subr.mxu0 0.0
        %1617 = vmatpush2.xpose.msra.mxu0 0.0
        %1618 = vmatprep.subr.mxu0 0.0
        %1619 = vmatpush2.xpose.msra.mxu0 0.0
        %1620 = vmatprep.subr.mxu0 0.0
        %1621 = vmatpush2.xpose.msra.mxu0 0.0
        %1622 = vmatprep.subr.mxu0 0.0
        %1623 = vmatpush2.xpose.msra.mxu0 0.0
        %1624 = vmatprep.subr.mxu0 0.0
        %1625 = vmatpush2.xpose.msra.mxu0 0.0
        %1626 = vmatprep.mubr.f32.mxu0 0.0
        %1627 = vmatmul.mubr.f32.gmra.mxu0 %v1558
        %v1628 = vpop.f32.mrf.mxu0
        %v1629 = vadd.f32 0.0, %v1628
        %v1630 = vpop.f32.mrf.mxu0
        %1631 = vdwg.mxu0
        %v1632 = vsel %vm1138, %v1629, -inf
        %1633 = vmax.xlane.f32.xlu0 %v1632
        %v1634 = vpop.xlane.xlu0 %1633
        %v1635 = vsub.f32 %v1629, %v1634
        %v1636 = vmul.f32 %v1635, 1.442695
        %v1637 = vpow.pop %v1636
        %v1638 = vsel %vm1138, %v1637, 0.0
        %1639 = vadd.xlane.f32.xlu0 %v1638
        %v1640 = vpop.xlane.xlu0 %1639
        %v1641 = vrcp.pop %v1640
        %v1642 = vmul.f32 %v1637, %v1641
        %1643 = vrot.lane.b32.xlu0 %v1053, 80
        %v1644 = vpop.permute.xlu0 %1643
        %v1647 = vsel %vm1138, %v1642, 0
        %1649 = vmatprep.subr.mxu0 0.0
        %1650 = vmatpush1.msra.mxu0 0.0
        %1651 = vmatprep.subr.mxu0 0.0
        %1652 = vmatpush1.msra.mxu0 0.0
        %1653 = vmatprep.subr.mxu0 0.0
        %1654 = vmatpush1.msra.mxu0 0.0
        %1655 = vmatprep.subr.mxu0 0.0
        %1656 = vmatpush1.msra.mxu0 0.0
        %1657 = vmatprep.subr.mxu0 0.0
        %1658 = vmatpush1.msra.mxu0 0.0
        %1659 = vmatprep.subr.mxu0 0.0
        %1660 = vmatpush1.msra.mxu0 0.0
        %1661 = vmatprep.subr.mxu0 0.0
        %1662 = vmatpush1.msra.mxu0 0.0
        %1663 = vmatprep.subr.mxu0 0.0
        %1664 = vmatpush1.msra.mxu0 0.0
        %1665 = vmatprep.subr.mxu0 0.0
        %1666 = vmatpush1.msra.mxu0 0.0
        %1667 = vmatprep.subr.mxu0 0.0
        %1668 = vmatpush1.msra.mxu0 0.0
        %1669 = vmatprep.subr.mxu0 0.0
        %1670 = vmatpush1.msra.mxu0 0.0
        %1671 = vmatprep.subr.mxu0 0.0
        %1672 = vmatpush1.msra.mxu0 0.0
        %1673 = vmatprep.subr.mxu0 0.0
        %1674 = vmatpush1.msra.mxu0 0.0
        %1675 = vmatprep.subr.mxu0 0.0
        %1676 = vmatpush1.msra.mxu0 0.0
        %1677 = vmatprep.subr.mxu0 0.0
        %1678 = vmatpush1.msra.mxu0 0.0
        %1679 = vmatprep.subr.mxu0 0.0
        %1680 = vmatpush1.msra.mxu0 %v1644
        %1681 = vmatprep.subr.mxu0 0.0
        %1682 = vmatpush2.msra.mxu0 0.0
        %1683 = vmatprep.subr.mxu0 0.0
        %1684 = vmatpush2.msra.mxu0 0.0
        %1685 = vmatprep.subr.mxu0 0.0
        %1686 = vmatpush2.msra.mxu0 0.0
        %1687 = vmatprep.subr.mxu0 0.0
        %1688 = vmatpush2.msra.mxu0 0.0
        %1689 = vmatprep.subr.mxu0 0.0
        %1690 = vmatpush2.msra.mxu0 0.0
        %1691 = vmatprep.subr.mxu0 0.0
        %1692 = vmatpush2.msra.mxu0 0.0
        %1693 = vmatprep.subr.mxu0 0.0
        %1694 = vmatpush2.msra.mxu0 0.0
        %1695 = vmatprep.subr.mxu0 0.0
        %1696 = vmatpush2.msra.mxu0 0.0
        %1697 = vmatprep.subr.mxu0 0.0
        %1698 = vmatpush2.msra.mxu0 0.0
        %1699 = vmatprep.subr.mxu0 0.0
        %1700 = vmatpush2.msra.mxu0 0.0
        %1701 = vmatprep.subr.mxu0 0.0
        %1702 = vmatpush2.msra.mxu0 0.0
        %1703 = vmatprep.subr.mxu0 0.0
        %1704 = vmatpush2.msra.mxu0 0.0
        %1705 = vmatprep.subr.mxu0 0.0
        %1706 = vmatpush2.msra.mxu0 0.0
        %1707 = vmatprep.subr.mxu0 0.0
        %1708 = vmatpush2.msra.mxu0 0.0
        %1709 = vmatprep.subr.mxu0 0.0
        %1710 = vmatpush2.msra.mxu0 0.0
        %1711 = vmatprep.subr.mxu0 0.0
        %1712 = vmatpush2.msra.mxu0 0.0
        %1713 = vmatprep.mubr.f32.mxu0 0.0
        %1714 = vmatmul.mubr.f32.gmra.mxu0 %v1647
        %v1715 = vpop.f32.mrf.mxu0
        %v1716 = vadd.f32 0.0, %v1715
        %v1717 = vpop.f32.mrf.mxu0
        %1718 = vdwg.mxu0
        %1719 = vrot.lane.b32.xlu0 %v877, 64
        %v1720 = vpop.permute.xlu0 %1719
        %1721 = vrot.lane.b32.xlu0 %v962, 64
        %v1722 = vpop.permute.xlu0 %1721
        %v1723 = vsel %vm1061, %v1720, 0
        %v1725 = vsel %vm1061, %v1722, 0
        %1727 = vmatprep.subr.mxu0 0.0
        %1728 = vmatpush1.xpose.msra.mxu0 0.0
        %1729 = vmatprep.subr.mxu0 0.0
        %1730 = vmatpush1.xpose.msra.mxu0 0.0
        %1731 = vmatprep.subr.mxu0 0.0
        %1732 = vmatpush1.xpose.msra.mxu0 0.0
        %1733 = vmatprep.subr.mxu0 0.0
        %1734 = vmatpush1.xpose.msra.mxu0 0.0
        %1735 = vmatprep.subr.mxu0 0.0
        %1736 = vmatpush1.xpose.msra.mxu0 0.0
        %1737 = vmatprep.subr.mxu0 0.0
        %1738 = vmatpush1.xpose.msra.mxu0 0.0
        %1739 = vmatprep.subr.mxu0 0.0
        %1740 = vmatpush1.xpose.msra.mxu0 0.0
        %1741 = vmatprep.subr.mxu0 0.0
        %1742 = vmatpush1.xpose.msra.mxu0 0.0
        %1743 = vmatprep.subr.mxu0 0.0
        %1744 = vmatpush1.xpose.msra.mxu0 0.0
        %1745 = vmatprep.subr.mxu0 0.0
        %1746 = vmatpush1.xpose.msra.mxu0 0.0
        %1747 = vmatprep.subr.mxu0 0.0
        %1748 = vmatpush1.xpose.msra.mxu0 0.0
        %1749 = vmatprep.subr.mxu0 0.0
        %1750 = vmatpush1.xpose.msra.mxu0 0.0
        %1751 = vmatprep.subr.mxu0 0.0
        %1752 = vmatpush1.xpose.msra.mxu0 0.0
        %1753 = vmatprep.subr.mxu0 0.0
        %1754 = vmatpush1.xpose.msra.mxu0 0.0
        %1755 = vmatprep.subr.mxu0 0.0
        %1756 = vmatpush1.xpose.msra.mxu0 0.0
        %1757 = vmatprep.subr.mxu0 0.0
        %1758 = vmatpush1.xpose.msra.mxu0 %v1725
        %1759 = vmatprep.subr.mxu0 0.0
        %1760 = vmatpush2.xpose.msra.mxu0 0.0
        %1761 = vmatprep.subr.mxu0 0.0
        %1762 = vmatpush2.xpose.msra.mxu0 0.0
        %1763 = vmatprep.subr.mxu0 0.0
        %1764 = vmatpush2.xpose.msra.mxu0 0.0
        %1765 = vmatprep.subr.mxu0 0.0
        %1766 = vmatpush2.xpose.msra.mxu0 0.0
        %1767 = vmatprep.subr.mxu0 0.0
        %1768 = vmatpush2.xpose.msra.mxu0 0.0
        %1769 = vmatprep.subr.mxu0 0.0
        %1770 = vmatpush2.xpose.msra.mxu0 0.0
        %1771 = vmatprep.subr.mxu0 0.0
        %1772 = vmatpush2.xpose.msra.mxu0 0.0
        %1773 = vmatprep.subr.mxu0 0.0
        %1774 = vmatpush2.xpose.msra.mxu0 0.0
        %1775 = vmatprep.subr.mxu0 0.0
        %1776 = vmatpush2.xpose.msra.mxu0 0.0
        %1777 = vmatprep.subr.mxu0 0.0
        %1778 = vmatpush2.xpose.msra.mxu0 0.0
        %1779 = vmatprep.subr.mxu0 0.0
        %1780 = vmatpush2.xpose.msra.mxu0 0.0
        %1781 = vmatprep.subr.mxu0 0.0
        %1782 = vmatpush2.xpose.msra.mxu0 0.0
        %1783 = vmatprep.subr.mxu0 0.0
        %1784 = vmatpush2.xpose.msra.mxu0 0.0
        %1785 = vmatprep.subr.mxu0 0.0
        %1786 = vmatpush2.xpose.msra.mxu0 0.0
        %1787 = vmatprep.subr.mxu0 0.0
        %1788 = vmatpush2.xpose.msra.mxu0 0.0
        %1789 = vmatprep.subr.mxu0 0.0
        %1790 = vmatpush2.xpose.msra.mxu0 0.0
        %1791 = vmatprep.mubr.f32.mxu0 0.0
        %1792 = vmatmul.mubr.f32.gmra.mxu0 %v1723
        %v1793 = vpop.f32.mrf.mxu0
        %v1794 = vadd.f32 0.0, %v1793
        %v1795 = vpop.f32.mrf.mxu0
        %1796 = vdwg.mxu0
        %v1797 = vsel %vm1138, %v1794, -inf
        %1798 = vmax.xlane.f32.xlu0 %v1797
        %v1799 = vpop.xlane.xlu0 %1798
        %v1800 = vsub.f32 %v1794, %v1799
        %v1801 = vmul.f32 %v1800, 1.442695
        %v1802 = vpow.pop %v1801
        %v1803 = vsel %vm1138, %v1802, 0.0
        %1804 = vadd.xlane.f32.xlu0 %v1803
        %v1805 = vpop.xlane.xlu0 %1804
        %v1806 = vrcp.pop %v1805
        %v1807 = vmul.f32 %v1802, %v1806
        %1808 = vrot.lane.b32.xlu0 %v1053, 64
        %v1809 = vpop.permute.xlu0 %1808
        %v1812 = vsel %vm1138, %v1807, 0
        %1814 = vmatprep.subr.mxu0 0.0
        %1815 = vmatpush1.msra.mxu0 0.0
        %1816 = vmatprep.subr.mxu0 0.0
        %1817 = vmatpush1.msra.mxu0 0.0
        %1818 = vmatprep.subr.mxu0 0.0
        %1819 = vmatpush1.msra.mxu0 0.0
        %1820 = vmatprep.subr.mxu0 0.0
        %1821 = vmatpush1.msra.mxu0 0.0
        %1822 = vmatprep.subr.mxu0 0.0
        %1823 = vmatpush1.msra.mxu0 0.0
        %1824 = vmatprep.subr.mxu0 0.0
        %1825 = vmatpush1.msra.mxu0 0.0
        %1826 = vmatprep.subr.mxu0 0.0
        %1827 = vmatpush1.msra.mxu0 0.0
        %1828 = vmatprep.subr.mxu0 0.0
        %1829 = vmatpush1.msra.mxu0 0.0
        %1830 = vmatprep.subr.mxu0 0.0
        %1831 = vmatpush1.msra.mxu0 0.0
        %1832 = vmatprep.subr.mxu0 0.0
        %1833 = vmatpush1.msra.mxu0 0.0
        %1834 = vmatprep.subr.mxu0 0.0
        %1835 = vmatpush1.msra.mxu0 0.0
        %1836 = vmatprep.subr.mxu0 0.0
        %1837 = vmatpush1.msra.mxu0 0.0
        %1838 = vmatprep.subr.mxu0 0.0
        %1839 = vmatpush1.msra.mxu0 0.0
        %1840 = vmatprep.subr.mxu0 0.0
        %1841 = vmatpush1.msra.mxu0 0.0
        %1842 = vmatprep.subr.mxu0 0.0
        %1843 = vmatpush1.msra.mxu0 0.0
        %1844 = vmatprep.subr.mxu0 0.0
        %1845 = vmatpush1.msra.mxu0 %v1809
        %1846 = vmatprep.subr.mxu0 0.0
        %1847 = vmatpush2.msra.mxu0 0.0
        %1848 = vmatprep.subr.mxu0 0.0
        %1849 = vmatpush2.msra.mxu0 0.0
        %1850 = vmatprep.subr.mxu0 0.0
        %1851 = vmatpush2.msra.mxu0 0.0
        %1852 = vmatprep.subr.mxu0 0.0
        %1853 = vmatpush2.msra.mxu0 0.0
        %1854 = vmatprep.subr.mxu0 0.0
        %1855 = vmatpush2.msra.mxu0 0.0
        %1856 = vmatprep.subr.mxu0 0.0
        %1857 = vmatpush2.msra.mxu0 0.0
        %1858 = vmatprep.subr.mxu0 0.0
        %1859 = vmatpush2.msra.mxu0 0.0
        %1860 = vmatprep.subr.mxu0 0.0
        %1861 = vmatpush2.msra.mxu0 0.0
        %1862 = vmatprep.subr.mxu0 0.0
        %1863 = vmatpush2.msra.mxu0 0.0
        %1864 = vmatprep.subr.mxu0 0.0
        %1865 = vmatpush2.msra.mxu0 0.0
        %1866 = vmatprep.subr.mxu0 0.0
        %1867 = vmatpush2.msra.mxu0 0.0
        %1868 = vmatprep.subr.mxu0 0.0
        %1869 = vmatpush2.msra.mxu0 0.0
        %1870 = vmatprep.subr.mxu0 0.0
        %1871 = vmatpush2.msra.mxu0 0.0
        %1872 = vmatprep.subr.mxu0 0.0
        %1873 = vmatpush2.msra.mxu0 0.0
        %1874 = vmatprep.subr.mxu0 0.0
        %1875 = vmatpush2.msra.mxu0 0.0
        %1876 = vmatprep.subr.mxu0 0.0
        %1877 = vmatpush2.msra.mxu0 0.0
        %1878 = vmatprep.mubr.f32.mxu0 0.0
        %1879 = vmatmul.mubr.f32.gmra.mxu0 %v1812
        %v1880 = vpop.f32.mrf.mxu0
        %v1881 = vadd.f32 0.0, %v1880
        %v1882 = vpop.f32.mrf.mxu0
        %1883 = vdwg.mxu0
        %1884 = vrot.lane.b32.xlu0 %v877, 48
        %v1885 = vpop.permute.xlu0 %1884
        %1886 = vrot.lane.b32.xlu0 %v962, 48
        %v1887 = vpop.permute.xlu0 %1886
        %v1888 = vsel %vm1061, %v1885, 0
        %v1890 = vsel %vm1061, %v1887, 0
        %1892 = vmatprep.subr.mxu0 0.0
        %1893 = vmatpush1.xpose.msra.mxu0 0.0
        %1894 = vmatprep.subr.mxu0 0.0
        %1895 = vmatpush1.xpose.msra.mxu0 0.0
        %1896 = vmatprep.subr.mxu0 0.0
        %1897 = vmatpush1.xpose.msra.mxu0 0.0
        %1898 = vmatprep.subr.mxu0 0.0
        %1899 = vmatpush1.xpose.msra.mxu0 0.0
        %1900 = vmatprep.subr.mxu0 0.0
        %1901 = vmatpush1.xpose.msra.mxu0 0.0
        %1902 = vmatprep.subr.mxu0 0.0
        %1903 = vmatpush1.xpose.msra.mxu0 0.0
        %1904 = vmatprep.subr.mxu0 0.0
        %1905 = vmatpush1.xpose.msra.mxu0 0.0
        %1906 = vmatprep.subr.mxu0 0.0
        %1907 = vmatpush1.xpose.msra.mxu0 0.0
        %1908 = vmatprep.subr.mxu0 0.0
        %1909 = vmatpush1.xpose.msra.mxu0 0.0
        %1910 = vmatprep.subr.mxu0 0.0
        %1911 = vmatpush1.xpose.msra.mxu0 0.0
        %1912 = vmatprep.subr.mxu0 0.0
        %1913 = vmatpush1.xpose.msra.mxu0 0.0
        %1914 = vmatprep.subr.mxu0 0.0
        %1915 = vmatpush1.xpose.msra.mxu0 0.0
        %1916 = vmatprep.subr.mxu0 0.0
        %1917 = vmatpush1.xpose.msra.mxu0 0.0
        %1918 = vmatprep.subr.mxu0 0.0
        %1919 = vmatpush1.xpose.msra.mxu0 0.0
        %1920 = vmatprep.subr.mxu0 0.0
        %1921 = vmatpush1.xpose.msra.mxu0 0.0
        %1922 = vmatprep.subr.mxu0 0.0
        %1923 = vmatpush1.xpose.msra.mxu0 %v1890
        %1924 = vmatprep.subr.mxu0 0.0
        %1925 = vmatpush2.xpose.msra.mxu0 0.0
        %1926 = vmatprep.subr.mxu0 0.0
        %1927 = vmatpush2.xpose.msra.mxu0 0.0
        %1928 = vmatprep.subr.mxu0 0.0
        %1929 = vmatpush2.xpose.msra.mxu0 0.0
        %1930 = vmatprep.subr.mxu0 0.0
        %1931 = vmatpush2.xpose.msra.mxu0 0.0
        %1932 = vmatprep.subr.mxu0 0.0
        %1933 = vmatpush2.xpose.msra.mxu0 0.0
        %1934 = vmatprep.subr.mxu0 0.0
        %1935 = vmatpush2.xpose.msra.mxu0 0.0
        %1936 = vmatprep.subr.mxu0 0.0
        %1937 = vmatpush2.xpose.msra.mxu0 0.0
        %1938 = vmatprep.subr.mxu0 0.0
        %1939 = vmatpush2.xpose.msra.mxu0 0.0
        %1940 = vmatprep.subr.mxu0 0.0
        %1941 = vmatpush2.xpose.msra.mxu0 0.0
        %1942 = vmatprep.subr.mxu0 0.0
        %1943 = vmatpush2.xpose.msra.mxu0 0.0
        %1944 = vmatprep.subr.mxu0 0.0
        %1945 = vmatpush2.xpose.msra.mxu0 0.0
        %1946 = vmatprep.subr.mxu0 0.0
        %1947 = vmatpush2.xpose.msra.mxu0 0.0
        %1948 = vmatprep.subr.mxu0 0.0
        %1949 = vmatpush2.xpose.msra.mxu0 0.0
        %1950 = vmatprep.subr.mxu0 0.0
        %1951 = vmatpush2.xpose.msra.mxu0 0.0
        %1952 = vmatprep.subr.mxu0 0.0
        %1953 = vmatpush2.xpose.msra.mxu0 0.0
        %1954 = vmatprep.subr.mxu0 0.0
        %1955 = vmatpush2.xpose.msra.mxu0 0.0
        %1956 = vmatprep.mubr.f32.mxu0 0.0
        %1957 = vmatmul.mubr.f32.gmra.mxu0 %v1888
        %v1958 = vpop.f32.mrf.mxu0
        %v1959 = vadd.f32 0.0, %v1958
        %v1960 = vpop.f32.mrf.mxu0
        %1961 = vdwg.mxu0
        %v1962 = vsel %vm1138, %v1959, -inf
        %1963 = vmax.xlane.f32.xlu0 %v1962
        %v1964 = vpop.xlane.xlu0 %1963
        %v1965 = vsub.f32 %v1959, %v1964
        %v1966 = vmul.f32 %v1965, 1.442695
        %v1967 = vpow.pop %v1966
        %v1968 = vsel %vm1138, %v1967, 0.0
        %1969 = vadd.xlane.f32.xlu0 %v1968
        %v1970 = vpop.xlane.xlu0 %1969
        %v1971 = vrcp.pop %v1970
        %v1972 = vmul.f32 %v1967, %v1971
        %1973 = vrot.lane.b32.xlu0 %v1053, 48
        %v1974 = vpop.permute.xlu0 %1973
        %v1977 = vsel %vm1138, %v1972, 0
        %1979 = vmatprep.subr.mxu0 0.0
        %1980 = vmatpush1.msra.mxu0 0.0
        %1981 = vmatprep.subr.mxu0 0.0
        %1982 = vmatpush1.msra.mxu0 0.0
        %1983 = vmatprep.subr.mxu0 0.0
        %1984 = vmatpush1.msra.mxu0 0.0
        %1985 = vmatprep.subr.mxu0 0.0
        %1986 = vmatpush1.msra.mxu0 0.0
        %1987 = vmatprep.subr.mxu0 0.0
        %1988 = vmatpush1.msra.mxu0 0.0
        %1989 = vmatprep.subr.mxu0 0.0
        %1990 = vmatpush1.msra.mxu0 0.0
        %1991 = vmatprep.subr.mxu0 0.0
        %1992 = vmatpush1.msra.mxu0 0.0
        %1993 = vmatprep.subr.mxu0 0.0
        %1994 = vmatpush1.msra.mxu0 0.0
        %1995 = vmatprep.subr.mxu0 0.0
        %1996 = vmatpush1.msra.mxu0 0.0
        %1997 = vmatprep.subr.mxu0 0.0
        %1998 = vmatpush1.msra.mxu0 0.0
        %1999 = vmatprep.subr.mxu0 0.0
        %2000 = vmatpush1.msra.mxu0 0.0
        %2001 = vmatprep.subr.mxu0 0.0
        %2002 = vmatpush1.msra.mxu0 0.0
        %2003 = vmatprep.subr.mxu0 0.0
        %2004 = vmatpush1.msra.mxu0 0.0
        %2005 = vmatprep.subr.mxu0 0.0
        %2006 = vmatpush1.msra.mxu0 0.0
        %2007 = vmatprep.subr.mxu0 0.0
        %2008 = vmatpush1.msra.mxu0 0.0
        %2009 = vmatprep.subr.mxu0 0.0
        %2010 = vmatpush1.msra.mxu0 %v1974
        %2011 = vmatprep.subr.mxu0 0.0
        %2012 = vmatpush2.msra.mxu0 0.0
        %2013 = vmatprep.subr.mxu0 0.0
        %2014 = vmatpush2.msra.mxu0 0.0
        %2015 = vmatprep.subr.mxu0 0.0
        %2016 = vmatpush2.msra.mxu0 0.0
        %2017 = vmatprep.subr.mxu0 0.0
        %2018 = vmatpush2.msra.mxu0 0.0
        %2019 = vmatprep.subr.mxu0 0.0
        %2020 = vmatpush2.msra.mxu0 0.0
        %2021 = vmatprep.subr.mxu0 0.0
        %2022 = vmatpush2.msra.mxu0 0.0
        %2023 = vmatprep.subr.mxu0 0.0
        %2024 = vmatpush2.msra.mxu0 0.0
        %2025 = vmatprep.subr.mxu0 0.0
        %2026 = vmatpush2.msra.mxu0 0.0
        %2027 = vmatprep.subr.mxu0 0.0
        %2028 = vmatpush2.msra.mxu0 0.0
        %2029 = vmatprep.subr.mxu0 0.0
        %2030 = vmatpush2.msra.mxu0 0.0
        %2031 = vmatprep.subr.mxu0 0.0
        %2032 = vmatpush2.msra.mxu0 0.0
        %2033 = vmatprep.subr.mxu0 0.0
        %2034 = vmatpush2.msra.mxu0 0.0
        %2035 = vmatprep.subr.mxu0 0.0
        %2036 = vmatpush2.msra.mxu0 0.0
        %2037 = vmatprep.subr.mxu0 0.0
        %2038 = vmatpush2.msra.mxu0 0.0
        %2039 = vmatprep.subr.mxu0 0.0
        %2040 = vmatpush2.msra.mxu0 0.0
        %2041 = vmatprep.subr.mxu0 0.0
        %2042 = vmatpush2.msra.mxu0 0.0
        %2043 = vmatprep.mubr.f32.mxu0 0.0
        %2044 = vmatmul.mubr.f32.gmra.mxu0 %v1977
        %v2045 = vpop.f32.mrf.mxu0
        %v2046 = vadd.f32 0.0, %v2045
        %v2047 = vpop.f32.mrf.mxu0
        %2048 = vdwg.mxu0
        %2049 = vrot.lane.b32.xlu0 %v877, 32
        %v2050 = vpop.permute.xlu0 %2049
        %2051 = vrot.lane.b32.xlu0 %v962, 32
        %v2052 = vpop.permute.xlu0 %2051
        %v2053 = vsel %vm1061, %v2050, 0
        %v2055 = vsel %vm1061, %v2052, 0
        %2057 = vmatprep.subr.mxu0 0.0
        %2058 = vmatpush1.xpose.msra.mxu0 0.0
        %2059 = vmatprep.subr.mxu0 0.0
        %2060 = vmatpush1.xpose.msra.mxu0 0.0
        %2061 = vmatprep.subr.mxu0 0.0
        %2062 = vmatpush1.xpose.msra.mxu0 0.0
        %2063 = vmatprep.subr.mxu0 0.0
        %2064 = vmatpush1.xpose.msra.mxu0 0.0
        %2065 = vmatprep.subr.mxu0 0.0
        %2066 = vmatpush1.xpose.msra.mxu0 0.0
        %2067 = vmatprep.subr.mxu0 0.0
        %2068 = vmatpush1.xpose.msra.mxu0 0.0
        %2069 = vmatprep.subr.mxu0 0.0
        %2070 = vmatpush1.xpose.msra.mxu0 0.0
        %2071 = vmatprep.subr.mxu0 0.0
        %2072 = vmatpush1.xpose.msra.mxu0 0.0
        %2073 = vmatprep.subr.mxu0 0.0
        %2074 = vmatpush1.xpose.msra.mxu0 0.0
        %2075 = vmatprep.subr.mxu0 0.0
        %2076 = vmatpush1.xpose.msra.mxu0 0.0
        %2077 = vmatprep.subr.mxu0 0.0
        %2078 = vmatpush1.xpose.msra.mxu0 0.0
        %2079 = vmatprep.subr.mxu0 0.0
        %2080 = vmatpush1.xpose.msra.mxu0 0.0
        %2081 = vmatprep.subr.mxu0 0.0
        %2082 = vmatpush1.xpose.msra.mxu0 0.0
        %2083 = vmatprep.subr.mxu0 0.0
        %2084 = vmatpush1.xpose.msra.mxu0 0.0
        %2085 = vmatprep.subr.mxu0 0.0
        %2086 = vmatpush1.xpose.msra.mxu0 0.0
        %2087 = vmatprep.subr.mxu0 0.0
        %2088 = vmatpush1.xpose.msra.mxu0 %v2055
        %2089 = vmatprep.subr.mxu0 0.0
        %2090 = vmatpush2.xpose.msra.mxu0 0.0
        %2091 = vmatprep.subr.mxu0 0.0
        %2092 = vmatpush2.xpose.msra.mxu0 0.0
        %2093 = vmatprep.subr.mxu0 0.0
        %2094 = vmatpush2.xpose.msra.mxu0 0.0
        %2095 = vmatprep.subr.mxu0 0.0
        %2096 = vmatpush2.xpose.msra.mxu0 0.0
        %2097 = vmatprep.subr.mxu0 0.0
        %2098 = vmatpush2.xpose.msra.mxu0 0.0
        %2099 = vmatprep.subr.mxu0 0.0
        %2100 = vmatpush2.xpose.msra.mxu0 0.0
        %2101 = vmatprep.subr.mxu0 0.0
        %2102 = vmatpush2.xpose.msra.mxu0 0.0
        %2103 = vmatprep.subr.mxu0 0.0
        %2104 = vmatpush2.xpose.msra.mxu0 0.0
        %2105 = vmatprep.subr.mxu0 0.0
        %2106 = vmatpush2.xpose.msra.mxu0 0.0
        %2107 = vmatprep.subr.mxu0 0.0
        %2108 = vmatpush2.xpose.msra.mxu0 0.0
        %2109 = vmatprep.subr.mxu0 0.0
        %2110 = vmatpush2.xpose.msra.mxu0 0.0
        %2111 = vmatprep.subr.mxu0 0.0
        %2112 = vmatpush2.xpose.msra.mxu0 0.0
        %2113 = vmatprep.subr.mxu0 0.0
        %2114 = vmatpush2.xpose.msra.mxu0 0.0
        %2115 = vmatprep.subr.mxu0 0.0
        %2116 = vmatpush2.xpose.msra.mxu0 0.0
        %2117 = vmatprep.subr.mxu0 0.0
        %2118 = vmatpush2.xpose.msra.mxu0 0.0
        %2119 = vmatprep.subr.mxu0 0.0
        %2120 = vmatpush2.xpose.msra.mxu0 0.0
        %2121 = vmatprep.mubr.f32.mxu0 0.0
        %2122 = vmatmul.mubr.f32.gmra.mxu0 %v2053
        %v2123 = vpop.f32.mrf.mxu0
        %v2124 = vadd.f32 0.0, %v2123
        %v2125 = vpop.f32.mrf.mxu0
        %2126 = vdwg.mxu0
        %v2127 = vsel %vm1138, %v2124, -inf
        %2128 = vmax.xlane.f32.xlu0 %v2127
        %v2129 = vpop.xlane.xlu0 %2128
        %v2130 = vsub.f32 %v2124, %v2129
        %v2131 = vmul.f32 %v2130, 1.442695
        %v2132 = vpow.pop %v2131
        %v2133 = vsel %vm1138, %v2132, 0.0
        %2134 = vadd.xlane.f32.xlu0 %v2133
        %v2135 = vpop.xlane.xlu0 %2134
        %v2136 = vrcp.pop %v2135
        %v2137 = vmul.f32 %v2132, %v2136
        %2138 = vrot.lane.b32.xlu0 %v1053, 32
        %v2139 = vpop.permute.xlu0 %2138
        %v2142 = vsel %vm1138, %v2137, 0
        %2144 = vmatprep.subr.mxu0 0.0
        %2145 = vmatpush1.msra.mxu0 0.0
        %2146 = vmatprep.subr.mxu0 0.0
        %2147 = vmatpush1.msra.mxu0 0.0
        %2148 = vmatprep.subr.mxu0 0.0
        %2149 = vmatpush1.msra.mxu0 0.0
        %2150 = vmatprep.subr.mxu0 0.0
        %2151 = vmatpush1.msra.mxu0 0.0
        %2152 = vmatprep.subr.mxu0 0.0
        %2153 = vmatpush1.msra.mxu0 0.0
        %2154 = vmatprep.subr.mxu0 0.0
        %2155 = vmatpush1.msra.mxu0 0.0
        %2156 = vmatprep.subr.mxu0 0.0
        %2157 = vmatpush1.msra.mxu0 0.0
        %2158 = vmatprep.subr.mxu0 0.0
        %2159 = vmatpush1.msra.mxu0 0.0
        %2160 = vmatprep.subr.mxu0 0.0
        %2161 = vmatpush1.msra.mxu0 0.0
        %2162 = vmatprep.subr.mxu0 0.0
        %2163 = vmatpush1.msra.mxu0 0.0
        %2164 = vmatprep.subr.mxu0 0.0
        %2165 = vmatpush1.msra.mxu0 0.0
        %2166 = vmatprep.subr.mxu0 0.0
        %2167 = vmatpush1.msra.mxu0 0.0
        %2168 = vmatprep.subr.mxu0 0.0
        %2169 = vmatpush1.msra.mxu0 0.0
        %2170 = vmatprep.subr.mxu0 0.0
        %2171 = vmatpush1.msra.mxu0 0.0
        %2172 = vmatprep.subr.mxu0 0.0
        %2173 = vmatpush1.msra.mxu0 0.0
        %2174 = vmatprep.subr.mxu0 0.0
        %2175 = vmatpush1.msra.mxu0 %v2139
        %2176 = vmatprep.subr.mxu0 0.0
        %2177 = vmatpush2.msra.mxu0 0.0
        %2178 = vmatprep.subr.mxu0 0.0
        %2179 = vmatpush2.msra.mxu0 0.0
        %2180 = vmatprep.subr.mxu0 0.0
        %2181 = vmatpush2.msra.mxu0 0.0
        %2182 = vmatprep.subr.mxu0 0.0
        %2183 = vmatpush2.msra.mxu0 0.0
        %2184 = vmatprep.subr.mxu0 0.0
        %2185 = vmatpush2.msra.mxu0 0.0
        %2186 = vmatprep.subr.mxu0 0.0
        %2187 = vmatpush2.msra.mxu0 0.0
        %2188 = vmatprep.subr.mxu0 0.0
        %2189 = vmatpush2.msra.mxu0 0.0
        %2190 = vmatprep.subr.mxu0 0.0
        %2191 = vmatpush2.msra.mxu0 0.0
        %2192 = vmatprep.subr.mxu0 0.0
        %2193 = vmatpush2.msra.mxu0 0.0
        %2194 = vmatprep.subr.mxu0 0.0
        %2195 = vmatpush2.msra.mxu0 0.0
        %2196 = vmatprep.subr.mxu0 0.0
        %2197 = vmatpush2.msra.mxu0 0.0
        %2198 = vmatprep.subr.mxu0 0.0
        %2199 = vmatpush2.msra.mxu0 0.0
        %2200 = vmatprep.subr.mxu0 0.0
        %2201 = vmatpush2.msra.mxu0 0.0
        %2202 = vmatprep.subr.mxu0 0.0
        %2203 = vmatpush2.msra.mxu0 0.0
        %2204 = vmatprep.subr.mxu0 0.0
        %2205 = vmatpush2.msra.mxu0 0.0
        %2206 = vmatprep.subr.mxu0 0.0
        %2207 = vmatpush2.msra.mxu0 0.0
        %2208 = vmatprep.mubr.f32.mxu0 0.0
        %2209 = vmatmul.mubr.f32.gmra.mxu0 %v2142
        %v2210 = vpop.f32.mrf.mxu0
        %v2211 = vadd.f32 0.0, %v2210
        %v2212 = vpop.f32.mrf.mxu0
        %2213 = vdwg.mxu0
        %2214 = vrot.lane.b32.xlu0 %v877, 16
        %v2215 = vpop.permute.xlu0 %2214
        %2216 = vrot.lane.b32.xlu0 %v962, 16
        %v2217 = vpop.permute.xlu0 %2216
        %v2218 = vsel %vm1061, %v2215, 0
        %v2220 = vsel %vm1061, %v2217, 0
        %2222 = vmatprep.subr.mxu0 0.0
        %2223 = vmatpush1.xpose.msra.mxu0 0.0
        %2224 = vmatprep.subr.mxu0 0.0
        %2225 = vmatpush1.xpose.msra.mxu0 0.0
        %2226 = vmatprep.subr.mxu0 0.0
        %2227 = vmatpush1.xpose.msra.mxu0 0.0
        %2228 = vmatprep.subr.mxu0 0.0
        %2229 = vmatpush1.xpose.msra.mxu0 0.0
        %2230 = vmatprep.subr.mxu0 0.0
        %2231 = vmatpush1.xpose.msra.mxu0 0.0
        %2232 = vmatprep.subr.mxu0 0.0
        %2233 = vmatpush1.xpose.msra.mxu0 0.0
        %2234 = vmatprep.subr.mxu0 0.0
        %2235 = vmatpush1.xpose.msra.mxu0 0.0
        %2236 = vmatprep.subr.mxu0 0.0
        %2237 = vmatpush1.xpose.msra.mxu0 0.0
        %2238 = vmatprep.subr.mxu0 0.0
        %2239 = vmatpush1.xpose.msra.mxu0 0.0
        %2240 = vmatprep.subr.mxu0 0.0
        %2241 = vmatpush1.xpose.msra.mxu0 0.0
        %2242 = vmatprep.subr.mxu0 0.0
        %2243 = vmatpush1.xpose.msra.mxu0 0.0
        %2244 = vmatprep.subr.mxu0 0.0
        %2245 = vmatpush1.xpose.msra.mxu0 0.0
        %2246 = vmatprep.subr.mxu0 0.0
        %2247 = vmatpush1.xpose.msra.mxu0 0.0
        %2248 = vmatprep.subr.mxu0 0.0
        %2249 = vmatpush1.xpose.msra.mxu0 0.0
        %2250 = vmatprep.subr.mxu0 0.0
        %2251 = vmatpush1.xpose.msra.mxu0 0.0
        %2252 = vmatprep.subr.mxu0 0.0
        %2253 = vmatpush1.xpose.msra.mxu0 %v2220
        %2254 = vmatprep.subr.mxu0 0.0
        %2255 = vmatpush2.xpose.msra.mxu0 0.0
        %2256 = vmatprep.subr.mxu0 0.0
        %2257 = vmatpush2.xpose.msra.mxu0 0.0
        %2258 = vmatprep.subr.mxu0 0.0
        %2259 = vmatpush2.xpose.msra.mxu0 0.0
        %2260 = vmatprep.subr.mxu0 0.0
        %2261 = vmatpush2.xpose.msra.mxu0 0.0
        %2262 = vmatprep.subr.mxu0 0.0
        %2263 = vmatpush2.xpose.msra.mxu0 0.0
        %2264 = vmatprep.subr.mxu0 0.0
        %2265 = vmatpush2.xpose.msra.mxu0 0.0
        %2266 = vmatprep.subr.mxu0 0.0
        %2267 = vmatpush2.xpose.msra.mxu0 0.0
        %2268 = vmatprep.subr.mxu0 0.0
        %2269 = vmatpush2.xpose.msra.mxu0 0.0
        %2270 = vmatprep.subr.mxu0 0.0
        %2271 = vmatpush2.xpose.msra.mxu0 0.0
        %2272 = vmatprep.subr.mxu0 0.0
        %2273 = vmatpush2.xpose.msra.mxu0 0.0
        %2274 = vmatprep.subr.mxu0 0.0
        %2275 = vmatpush2.xpose.msra.mxu0 0.0
        %2276 = vmatprep.subr.mxu0 0.0
        %2277 = vmatpush2.xpose.msra.mxu0 0.0
        %2278 = vmatprep.subr.mxu0 0.0
        %2279 = vmatpush2.xpose.msra.mxu0 0.0
        %2280 = vmatprep.subr.mxu0 0.0
        %2281 = vmatpush2.xpose.msra.mxu0 0.0
        %2282 = vmatprep.subr.mxu0 0.0
        %2283 = vmatpush2.xpose.msra.mxu0 0.0
        %2284 = vmatprep.subr.mxu0 0.0
        %2285 = vmatpush2.xpose.msra.mxu0 0.0
        %2286 = vmatprep.mubr.f32.mxu0 0.0
        %2287 = vmatmul.mubr.f32.gmra.mxu0 %v2218
        %v2288 = vpop.f32.mrf.mxu0
        %v2289 = vadd.f32 0.0, %v2288
        %v2290 = vpop.f32.mrf.mxu0
        %2291 = vdwg.mxu0
        %v2292 = vsel %vm1138, %v2289, -inf
        %2293 = vmax.xlane.f32.xlu0 %v2292
        %v2294 = vpop.xlane.xlu0 %2293
        %v2295 = vsub.f32 %v2289, %v2294
        %v2296 = vmul.f32 %v2295, 1.442695
        %v2297 = vpow.pop %v2296
        %v2298 = vsel %vm1138, %v2297, 0.0
        %2299 = vadd.xlane.f32.xlu0 %v2298
        %v2300 = vpop.xlane.xlu0 %2299
        %v2301 = vrcp.pop %v2300
        %v2302 = vmul.f32 %v2297, %v2301
        %2303 = vrot.lane.b32.xlu0 %v1053, 16
        %v2304 = vpop.permute.xlu0 %2303
        %v2307 = vsel %vm1138, %v2302, 0
        %2309 = vmatprep.subr.mxu0 0.0
        %2310 = vmatpush1.msra.mxu0 0.0
        %2311 = vmatprep.subr.mxu0 0.0
        %2312 = vmatpush1.msra.mxu0 0.0
        %2313 = vmatprep.subr.mxu0 0.0
        %2314 = vmatpush1.msra.mxu0 0.0
        %2315 = vmatprep.subr.mxu0 0.0
        %2316 = vmatpush1.msra.mxu0 0.0
        %2317 = vmatprep.subr.mxu0 0.0
        %2318 = vmatpush1.msra.mxu0 0.0
        %2319 = vmatprep.subr.mxu0 0.0
        %2320 = vmatpush1.msra.mxu0 0.0
        %2321 = vmatprep.subr.mxu0 0.0
        %2322 = vmatpush1.msra.mxu0 0.0
        %2323 = vmatprep.subr.mxu0 0.0
        %2324 = vmatpush1.msra.mxu0 0.0
        %2325 = vmatprep.subr.mxu0 0.0
        %2326 = vmatpush1.msra.mxu0 0.0
        %2327 = vmatprep.subr.mxu0 0.0
        %2328 = vmatpush1.msra.mxu0 0.0
        %2329 = vmatprep.subr.mxu0 0.0
        %2330 = vmatpush1.msra.mxu0 0.0
        %2331 = vmatprep.subr.mxu0 0.0
        %2332 = vmatpush1.msra.mxu0 0.0
        %2333 = vmatprep.subr.mxu0 0.0
        %2334 = vmatpush1.msra.mxu0 0.0
        %2335 = vmatprep.subr.mxu0 0.0
        %2336 = vmatpush1.msra.mxu0 0.0
        %2337 = vmatprep.subr.mxu0 0.0
        %2338 = vmatpush1.msra.mxu0 0.0
        %2339 = vmatprep.subr.mxu0 0.0
        %2340 = vmatpush1.msra.mxu0 %v2304
        %2341 = vmatprep.subr.mxu0 0.0
        %2342 = vmatpush2.msra.mxu0 0.0
        %2343 = vmatprep.subr.mxu0 0.0
        %2344 = vmatpush2.msra.mxu0 0.0
        %2345 = vmatprep.subr.mxu0 0.0
        %2346 = vmatpush2.msra.mxu0 0.0
        %2347 = vmatprep.subr.mxu0 0.0
        %2348 = vmatpush2.msra.mxu0 0.0
        %2349 = vmatprep.subr.mxu0 0.0
        %2350 = vmatpush2.msra.mxu0 0.0
        %2351 = vmatprep.subr.mxu0 0.0
        %2352 = vmatpush2.msra.mxu0 0.0
        %2353 = vmatprep.subr.mxu0 0.0
        %2354 = vmatpush2.msra.mxu0 0.0
        %2355 = vmatprep.subr.mxu0 0.0
        %2356 = vmatpush2.msra.mxu0 0.0
        %2357 = vmatprep.subr.mxu0 0.0
        %2358 = vmatpush2.msra.mxu0 0.0
        %2359 = vmatprep.subr.mxu0 0.0
        %2360 = vmatpush2.msra.mxu0 0.0
        %2361 = vmatprep.subr.mxu0 0.0
        %2362 = vmatpush2.msra.mxu0 0.0
        %2363 = vmatprep.subr.mxu0 0.0
        %2364 = vmatpush2.msra.mxu0 0.0
        %2365 = vmatprep.subr.mxu0 0.0
        %2366 = vmatpush2.msra.mxu0 0.0
        %2367 = vmatprep.subr.mxu0 0.0
        %2368 = vmatpush2.msra.mxu0 0.0
        %2369 = vmatprep.subr.mxu0 0.0
        %2370 = vmatpush2.msra.mxu0 0.0
        %2371 = vmatprep.subr.mxu0 0.0
        %2372 = vmatpush2.msra.mxu0 0.0
        %2373 = vmatprep.mubr.f32.mxu0 0.0
        %2374 = vmatmul.mubr.f32.gmra.mxu0 %v2307
        %v2375 = vpop.f32.mrf.mxu0
        %v2376 = vadd.f32 0.0, %v2375
        %v2377 = vpop.f32.mrf.mxu0
        %2378 = vdwg.mxu0
        %2380 = vrot.lane.b32.xlu0 %v1386, 16
        %v2381 = vpop.permute.xlu0 %2380
        %2384 = vrot.lane.b32.xlu0 %v1551, 32
        %v2385 = vpop.permute.xlu0 %2384
        %2388 = vrot.lane.b32.xlu0 %v1716, 48
        %v2389 = vpop.permute.xlu0 %2388
        %2392 = vrot.lane.b32.xlu0 %v1881, 64
        %v2393 = vpop.permute.xlu0 %2392
        %2396 = vrot.lane.b32.xlu0 %v2046, 80
        %v2397 = vpop.permute.xlu0 %2396
        %2400 = vrot.lane.b32.xlu0 %v2211, 96
        %v2401 = vpop.permute.xlu0 %2400
        %2404 = vrot.lane.b32.xlu0 %v2376, 112
        %v2405 = vpop.permute.xlu0 %2404
        %v2407 = vsel %vm1061, %v1220, %v2381
        %vm2408 = vcmask 261120
        %v2409 = vsel %vm2408, %v2407, %v2385
        %vm2410 = vcmask 392192
        %v2411 = vsel %vm2410, %v2409, %v2389
        %vm2412 = vcmask 523264
        %v2413 = vsel %vm2412, %v2411, %v2393
        %vm2414 = vcmask 654336
        %v2415 = vsel %vm2414, %v2413, %v2397
        %vm2416 = vcmask 785408
        %v2417 = vsel %vm2416, %v2415, %v2401
        %vm2418 = vcmask 916480
        %v2419 = vsel %vm2418, %v2417, %v2405
        %v2421 = vsel %vm1061, %v878, 0
        %v2424 = vsel %vm1061, %v967, 0
        %2426 = vmatprep.subr.mxu0 0.0
        %2427 = vmatpush1.xpose.msra.mxu0 0.0
        %2428 = vmatprep.subr.mxu0 0.0
        %2429 = vmatpush1.xpose.msra.mxu0 0.0
        %2430 = vmatprep.subr.mxu0 0.0
        %2431 = vmatpush1.xpose.msra.mxu0 0.0
        %2432 = vmatprep.subr.mxu0 0.0
        %2433 = vmatpush1.xpose.msra.mxu0 0.0
        %2434 = vmatprep.subr.mxu0 0.0
        %2435 = vmatpush1.xpose.msra.mxu0 0.0
        %2436 = vmatprep.subr.mxu0 0.0
        %2437 = vmatpush1.xpose.msra.mxu0 0.0
        %2438 = vmatprep.subr.mxu0 0.0
        %2439 = vmatpush1.xpose.msra.mxu0 0.0
        %2440 = vmatprep.subr.mxu0 0.0
        %2441 = vmatpush1.xpose.msra.mxu0 0.0
        %2442 = vmatprep.subr.mxu0 0.0
        %2443 = vmatpush1.xpose.msra.mxu0 0.0
        %2444 = vmatprep.subr.mxu0 0.0
        %2445 = vmatpush1.xpose.msra.mxu0 0.0
        %2446 = vmatprep.subr.mxu0 0.0
        %2447 = vmatpush1.xpose.msra.mxu0 0.0
        %2448 = vmatprep.subr.mxu0 0.0
        %2449 = vmatpush1.xpose.msra.mxu0 0.0
        %2450 = vmatprep.subr.mxu0 0.0
        %2451 = vmatpush1.xpose.msra.mxu0 0.0
        %2452 = vmatprep.subr.mxu0 0.0
        %2453 = vmatpush1.xpose.msra.mxu0 0.0
        %2454 = vmatprep.subr.mxu0 0.0
        %2455 = vmatpush1.xpose.msra.mxu0 0.0
        %2456 = vmatprep.subr.mxu0 0.0
        %2457 = vmatpush1.xpose.msra.mxu0 %v2424
        %2458 = vmatprep.subr.mxu0 0.0
        %2459 = vmatpush2.xpose.msra.mxu0 0.0
        %2460 = vmatprep.subr.mxu0 0.0
        %2461 = vmatpush2.xpose.msra.mxu0 0.0
        %2462 = vmatprep.subr.mxu0 0.0
        %2463 = vmatpush2.xpose.msra.mxu0 0.0
        %2464 = vmatprep.subr.mxu0 0.0
        %2465 = vmatpush2.xpose.msra.mxu0 0.0
        %2466 = vmatprep.subr.mxu0 0.0
        %2467 = vmatpush2.xpose.msra.mxu0 0.0
        %2468 = vmatprep.subr.mxu0 0.0
        %2469 = vmatpush2.xpose.msra.mxu0 0.0
        %2470 = vmatprep.subr.mxu0 0.0
        %2471 = vmatpush2.xpose.msra.mxu0 0.0
        %2472 = vmatprep.subr.mxu0 0.0
        %2473 = vmatpush2.xpose.msra.mxu0 0.0
        %2474 = vmatprep.subr.mxu0 0.0
        %2475 = vmatpush2.xpose.msra.mxu0 0.0
        %2476 = vmatprep.subr.mxu0 0.0
        %2477 = vmatpush2.xpose.msra.mxu0 0.0
        %2478 = vmatprep.subr.mxu0 0.0
        %2479 = vmatpush2.xpose.msra.mxu0 0.0
        %2480 = vmatprep.subr.mxu0 0.0
        %2481 = vmatpush2.xpose.msra.mxu0 0.0
        %2482 = vmatprep.subr.mxu0 0.0
        %2483 = vmatpush2.xpose.msra.mxu0 0.0
        %2484 = vmatprep.subr.mxu0 0.0
        %2485 = vmatpush2.xpose.msra.mxu0 0.0
        %2486 = vmatprep.subr.mxu0 0.0
        %2487 = vmatpush2.xpose.msra.mxu0 0.0
        %2488 = vmatprep.subr.mxu0 0.0
        %2489 = vmatpush2.xpose.msra.mxu0 0.0
        %2490 = vmatprep.mubr.f32.mxu0 0.0
        %2491 = vmatmul.mubr.f32.gmra.mxu0 %v2421
        %v2492 = vpop.f32.mrf.mxu0
        %v2493 = vadd.f32 0.0, %v2492
        %v2494 = vpop.f32.mrf.mxu0
        %2495 = vdwg.mxu0
        %v2496 = vsel %vm1138, %v2493, -inf
        %2497 = vmax.xlane.f32.xlu0 %v2496
        %v2498 = vpop.xlane.xlu0 %2497
        %v2499 = vsub.f32 %v2493, %v2498
        %v2500 = vmul.f32 %v2499, 1.442695
        %v2501 = vpow.pop %v2500
        %v2502 = vsel %vm1138, %v2501, 0.0
        %2503 = vadd.xlane.f32.xlu0 %v2502
        %v2504 = vpop.xlane.xlu0 %2503
        %v2505 = vrcp.pop %v2504
        %v2506 = vmul.f32 %v2501, %v2505
        %v2508 = vsel %vm1138, %v2506, 0
        %2510 = vmatprep.subr.mxu0 0.0
        %2511 = vmatpush1.msra.mxu0 0.0
        %2512 = vmatprep.subr.mxu0 0.0
        %2513 = vmatpush1.msra.mxu0 0.0
        %2514 = vmatprep.subr.mxu0 0.0
        %2515 = vmatpush1.msra.mxu0 0.0
        %2516 = vmatprep.subr.mxu0 0.0
        %2517 = vmatpush1.msra.mxu0 0.0
        %2518 = vmatprep.subr.mxu0 0.0
        %2519 = vmatpush1.msra.mxu0 0.0
        %2520 = vmatprep.subr.mxu0 0.0
        %2521 = vmatpush1.msra.mxu0 0.0
        %2522 = vmatprep.subr.mxu0 0.0
        %2523 = vmatpush1.msra.mxu0 0.0
        %2524 = vmatprep.subr.mxu0 0.0
        %2525 = vmatpush1.msra.mxu0 0.0
        %2526 = vmatprep.subr.mxu0 0.0
        %2527 = vmatpush1.msra.mxu0 0.0
        %2528 = vmatprep.subr.mxu0 0.0
        %2529 = vmatpush1.msra.mxu0 0.0
        %2530 = vmatprep.subr.mxu0 0.0
        %2531 = vmatpush1.msra.mxu0 0.0
        %2532 = vmatprep.subr.mxu0 0.0
        %2533 = vmatpush1.msra.mxu0 0.0
        %2534 = vmatprep.subr.mxu0 0.0
        %2535 = vmatpush1.msra.mxu0 0.0
        %2536 = vmatprep.subr.mxu0 0.0
        %2537 = vmatpush1.msra.mxu0 0.0
        %2538 = vmatprep.subr.mxu0 0.0
        %2539 = vmatpush1.msra.mxu0 0.0
        %2540 = vmatprep.subr.mxu0 0.0
        %2541 = vmatpush1.msra.mxu0 %v1058
        %2542 = vmatprep.subr.mxu0 0.0
        %2543 = vmatpush2.msra.mxu0 0.0
        %2544 = vmatprep.subr.mxu0 0.0
        %2545 = vmatpush2.msra.mxu0 0.0
        %2546 = vmatprep.subr.mxu0 0.0
        %2547 = vmatpush2.msra.mxu0 0.0
        %2548 = vmatprep.subr.mxu0 0.0
        %2549 = vmatpush2.msra.mxu0 0.0
        %2550 = vmatprep.subr.mxu0 0.0
        %2551 = vmatpush2.msra.mxu0 0.0
        %2552 = vmatprep.subr.mxu0 0.0
        %2553 = vmatpush2.msra.mxu0 0.0
        %2554 = vmatprep.subr.mxu0 0.0
        %2555 = vmatpush2.msra.mxu0 0.0
        %2556 = vmatprep.subr.mxu0 0.0
        %2557 = vmatpush2.msra.mxu0 0.0
        %2558 = vmatprep.subr.mxu0 0.0
        %2559 = vmatpush2.msra.mxu0 0.0
        %2560 = vmatprep.subr.mxu0 0.0
        %2561 = vmatpush2.msra.mxu0 0.0
        %2562 = vmatprep.subr.mxu0 0.0
        %2563 = vmatpush2.msra.mxu0 0.0
        %2564 = vmatprep.subr.mxu0 0.0
        %2565 = vmatpush2.msra.mxu0 0.0
        %2566 = vmatprep.subr.mxu0 0.0
        %2567 = vmatpush2.msra.mxu0 0.0
        %2568 = vmatprep.subr.mxu0 0.0
        %2569 = vmatpush2.msra.mxu0 0.0
        %2570 = vmatprep.subr.mxu0 0.0
        %2571 = vmatpush2.msra.mxu0 0.0
        %2572 = vmatprep.subr.mxu0 0.0
        %2573 = vmatpush2.msra.mxu0 0.0
        %2574 = vmatprep.mubr.f32.mxu0 0.0
        %2575 = vmatmul.mubr.f32.gmra.mxu0 %v2508
        %v2576 = vpop.f32.mrf.mxu0
        %v2577 = vadd.f32 0.0, %v2576
        %v2578 = vpop.f32.mrf.mxu0
        %2579 = vdwg.mxu0
        %2580 = vrot.lane.b32.xlu0 %v878, 112
        %v2581 = vpop.permute.xlu0 %2580
        %2582 = vrot.lane.b32.xlu0 %v967, 112
        %v2583 = vpop.permute.xlu0 %2582
        %v2584 = vsel %vm1061, %v2581, 0
        %v2586 = vsel %vm1061, %v2583, 0
        %2588 = vmatprep.subr.mxu0 0.0
        %2589 = vmatpush1.xpose.msra.mxu0 0.0
        %2590 = vmatprep.subr.mxu0 0.0
        %2591 = vmatpush1.xpose.msra.mxu0 0.0
        %2592 = vmatprep.subr.mxu0 0.0
        %2593 = vmatpush1.xpose.msra.mxu0 0.0
        %2594 = vmatprep.subr.mxu0 0.0
        %2595 = vmatpush1.xpose.msra.mxu0 0.0
        %2596 = vmatprep.subr.mxu0 0.0
        %2597 = vmatpush1.xpose.msra.mxu0 0.0
        %2598 = vmatprep.subr.mxu0 0.0
        %2599 = vmatpush1.xpose.msra.mxu0 0.0
        %2600 = vmatprep.subr.mxu0 0.0
        %2601 = vmatpush1.xpose.msra.mxu0 0.0
        %2602 = vmatprep.subr.mxu0 0.0
        %2603 = vmatpush1.xpose.msra.mxu0 0.0
        %2604 = vmatprep.subr.mxu0 0.0
        %2605 = vmatpush1.xpose.msra.mxu0 0.0
        %2606 = vmatprep.subr.mxu0 0.0
        %2607 = vmatpush1.xpose.msra.mxu0 0.0
        %2608 = vmatprep.subr.mxu0 0.0
        %2609 = vmatpush1.xpose.msra.mxu0 0.0
        %2610 = vmatprep.subr.mxu0 0.0
        %2611 = vmatpush1.xpose.msra.mxu0 0.0
        %2612 = vmatprep.subr.mxu0 0.0
        %2613 = vmatpush1.xpose.msra.mxu0 0.0
        %2614 = vmatprep.subr.mxu0 0.0
        %2615 = vmatpush1.xpose.msra.mxu0 0.0
        %2616 = vmatprep.subr.mxu0 0.0
        %2617 = vmatpush1.xpose.msra.mxu0 0.0
        %2618 = vmatprep.subr.mxu0 0.0
        %2619 = vmatpush1.xpose.msra.mxu0 %v2586
        %2620 = vmatprep.subr.mxu0 0.0
        %2621 = vmatpush2.xpose.msra.mxu0 0.0
        %2622 = vmatprep.subr.mxu0 0.0
        %2623 = vmatpush2.xpose.msra.mxu0 0.0
        %2624 = vmatprep.subr.mxu0 0.0
        %2625 = vmatpush2.xpose.msra.mxu0 0.0
        %2626 = vmatprep.subr.mxu0 0.0
        %2627 = vmatpush2.xpose.msra.mxu0 0.0
        %2628 = vmatprep.subr.mxu0 0.0
        %2629 = vmatpush2.xpose.msra.mxu0 0.0
        %2630 = vmatprep.subr.mxu0 0.0
        %2631 = vmatpush2.xpose.msra.mxu0 0.0
        %2632 = vmatprep.subr.mxu0 0.0
        %2633 = vmatpush2.xpose.msra.mxu0 0.0
        %2634 = vmatprep.subr.mxu0 0.0
        %2635 = vmatpush2.xpose.msra.mxu0 0.0
        %2636 = vmatprep.subr.mxu0 0.0
        %2637 = vmatpush2.xpose.msra.mxu0 0.0
        %2638 = vmatprep.subr.mxu0 0.0
        %2639 = vmatpush2.xpose.msra.mxu0 0.0
        %2640 = vmatprep.subr.mxu0 0.0
        %2641 = vmatpush2.xpose.msra.mxu0 0.0
        %2642 = vmatprep.subr.mxu0 0.0
        %2643 = vmatpush2.xpose.msra.mxu0 0.0
        %2644 = vmatprep.subr.mxu0 0.0
        %2645 = vmatpush2.xpose.msra.mxu0 0.0
        %2646 = vmatprep.subr.mxu0 0.0
        %2647 = vmatpush2.xpose.msra.mxu0 0.0
        %2648 = vmatprep.subr.mxu0 0.0
        %2649 = vmatpush2.xpose.msra.mxu0 0.0
        %2650 = vmatprep.subr.mxu0 0.0
        %2651 = vmatpush2.xpose.msra.mxu0 0.0
        %2652 = vmatprep.mubr.f32.mxu0 0.0
        %2653 = vmatmul.mubr.f32.gmra.mxu0 %v2584
        %v2654 = vpop.f32.mrf.mxu0
        %v2655 = vadd.f32 0.0, %v2654
        %v2656 = vpop.f32.mrf.mxu0
        %2657 = vdwg.mxu0
        %v2658 = vsel %vm1138, %v2655, -inf
        %2659 = vmax.xlane.f32.xlu0 %v2658
        %v2660 = vpop.xlane.xlu0 %2659
        %v2661 = vsub.f32 %v2655, %v2660
        %v2662 = vmul.f32 %v2661, 1.442695
        %v2663 = vpow.pop %v2662
        %v2664 = vsel %vm1138, %v2663, 0.0
        %2665 = vadd.xlane.f32.xlu0 %v2664
        %v2666 = vpop.xlane.xlu0 %2665
        %v2667 = vrcp.pop %v2666
        %v2668 = vmul.f32 %v2663, %v2667
        %2670 = vrot.lane.b32.xlu0 %v1058, 112
        %v2671 = vpop.permute.xlu0 %2670
        %v2674 = vsel %vm1138, %v2668, 0
        %2676 = vmatprep.subr.mxu0 0.0
        %2677 = vmatpush1.msra.mxu0 0.0
        %2678 = vmatprep.subr.mxu0 0.0
        %2679 = vmatpush1.msra.mxu0 0.0
        %2680 = vmatprep.subr.mxu0 0.0
        %2681 = vmatpush1.msra.mxu0 0.0
        %2682 = vmatprep.subr.mxu0 0.0
        %2683 = vmatpush1.msra.mxu0 0.0
        %2684 = vmatprep.subr.mxu0 0.0
        %2685 = vmatpush1.msra.mxu0 0.0
        %2686 = vmatprep.subr.mxu0 0.0
        %2687 = vmatpush1.msra.mxu0 0.0
        %2688 = vmatprep.subr.mxu0 0.0
        %2689 = vmatpush1.msra.mxu0 0.0
        %2690 = vmatprep.subr.mxu0 0.0
        %2691 = vmatpush1.msra.mxu0 0.0
        %2692 = vmatprep.subr.mxu0 0.0
        %2693 = vmatpush1.msra.mxu0 0.0
        %2694 = vmatprep.subr.mxu0 0.0
        %2695 = vmatpush1.msra.mxu0 0.0
        %2696 = vmatprep.subr.mxu0 0.0
        %2697 = vmatpush1.msra.mxu0 0.0
        %2698 = vmatprep.subr.mxu0 0.0
        %2699 = vmatpush1.msra.mxu0 0.0
        %2700 = vmatprep.subr.mxu0 0.0
        %2701 = vmatpush1.msra.mxu0 0.0
        %2702 = vmatprep.subr.mxu0 0.0
        %2703 = vmatpush1.msra.mxu0 0.0
        %2704 = vmatprep.subr.mxu0 0.0
        %2705 = vmatpush1.msra.mxu0 0.0
        %2706 = vmatprep.subr.mxu0 0.0
        %2707 = vmatpush1.msra.mxu0 %v2671
        %2708 = vmatprep.subr.mxu0 0.0
        %2709 = vmatpush2.msra.mxu0 0.0
        %2710 = vmatprep.subr.mxu0 0.0
        %2711 = vmatpush2.msra.mxu0 0.0
        %2712 = vmatprep.subr.mxu0 0.0
        %2713 = vmatpush2.msra.mxu0 0.0
        %2714 = vmatprep.subr.mxu0 0.0
        %2715 = vmatpush2.msra.mxu0 0.0
        %2716 = vmatprep.subr.mxu0 0.0
        %2717 = vmatpush2.msra.mxu0 0.0
        %2718 = vmatprep.subr.mxu0 0.0
        %2719 = vmatpush2.msra.mxu0 0.0
        %2720 = vmatprep.subr.mxu0 0.0
        %2721 = vmatpush2.msra.mxu0 0.0
        %2722 = vmatprep.subr.mxu0 0.0
        %2723 = vmatpush2.msra.mxu0 0.0
        %2724 = vmatprep.subr.mxu0 0.0
        %2725 = vmatpush2.msra.mxu0 0.0
        %2726 = vmatprep.subr.mxu0 0.0
        %2727 = vmatpush2.msra.mxu0 0.0
        %2728 = vmatprep.subr.mxu0 0.0
        %2729 = vmatpush2.msra.mxu0 0.0
        %2730 = vmatprep.subr.mxu0 0.0
        %2731 = vmatpush2.msra.mxu0 0.0
        %2732 = vmatprep.subr.mxu0 0.0
        %2733 = vmatpush2.msra.mxu0 0.0
        %2734 = vmatprep.subr.mxu0 0.0
        %2735 = vmatpush2.msra.mxu0 0.0
        %2736 = vmatprep.subr.mxu0 0.0
        %2737 = vmatpush2.msra.mxu0 0.0
        %2738 = vmatprep.subr.mxu0 0.0
        %2739 = vmatpush2.msra.mxu0 0.0
        %2740 = vmatprep.mubr.f32.mxu0 0.0
        %2741 = vmatmul.mubr.f32.gmra.mxu0 %v2674
        %v2742 = vpop.f32.mrf.mxu0
        %v2743 = vadd.f32 0.0, %v2742
        %v2744 = vpop.f32.mrf.mxu0
        %2745 = vdwg.mxu0
        %2746 = vrot.lane.b32.xlu0 %v878, 96
        %v2747 = vpop.permute.xlu0 %2746
        %2748 = vrot.lane.b32.xlu0 %v967, 96
        %v2749 = vpop.permute.xlu0 %2748
        %v2750 = vsel %vm1061, %v2747, 0
        %v2752 = vsel %vm1061, %v2749, 0
        %2754 = vmatprep.subr.mxu0 0.0
        %2755 = vmatpush1.xpose.msra.mxu0 0.0
        %2756 = vmatprep.subr.mxu0 0.0
        %2757 = vmatpush1.xpose.msra.mxu0 0.0
        %2758 = vmatprep.subr.mxu0 0.0
        %2759 = vmatpush1.xpose.msra.mxu0 0.0
        %2760 = vmatprep.subr.mxu0 0.0
        %2761 = vmatpush1.xpose.msra.mxu0 0.0
        %2762 = vmatprep.subr.mxu0 0.0
        %2763 = vmatpush1.xpose.msra.mxu0 0.0
        %2764 = vmatprep.subr.mxu0 0.0
        %2765 = vmatpush1.xpose.msra.mxu0 0.0
        %2766 = vmatprep.subr.mxu0 0.0
        %2767 = vmatpush1.xpose.msra.mxu0 0.0
        %2768 = vmatprep.subr.mxu0 0.0
        %2769 = vmatpush1.xpose.msra.mxu0 0.0
        %2770 = vmatprep.subr.mxu0 0.0
        %2771 = vmatpush1.xpose.msra.mxu0 0.0
        %2772 = vmatprep.subr.mxu0 0.0
        %2773 = vmatpush1.xpose.msra.mxu0 0.0
        %2774 = vmatprep.subr.mxu0 0.0
        %2775 = vmatpush1.xpose.msra.mxu0 0.0
        %2776 = vmatprep.subr.mxu0 0.0
        %2777 = vmatpush1.xpose.msra.mxu0 0.0
        %2778 = vmatprep.subr.mxu0 0.0
        %2779 = vmatpush1.xpose.msra.mxu0 0.0
        %2780 = vmatprep.subr.mxu0 0.0
        %2781 = vmatpush1.xpose.msra.mxu0 0.0
        %2782 = vmatprep.subr.mxu0 0.0
        %2783 = vmatpush1.xpose.msra.mxu0 0.0
        %2784 = vmatprep.subr.mxu0 0.0
        %2785 = vmatpush1.xpose.msra.mxu0 %v2752
        %2786 = vmatprep.subr.mxu0 0.0
        %2787 = vmatpush2.xpose.msra.mxu0 0.0
        %2788 = vmatprep.subr.mxu0 0.0
        %2789 = vmatpush2.xpose.msra.mxu0 0.0
        %2790 = vmatprep.subr.mxu0 0.0
        %2791 = vmatpush2.xpose.msra.mxu0 0.0
        %2792 = vmatprep.subr.mxu0 0.0
        %2793 = vmatpush2.xpose.msra.mxu0 0.0
        %2794 = vmatprep.subr.mxu0 0.0
        %2795 = vmatpush2.xpose.msra.mxu0 0.0
        %2796 = vmatprep.subr.mxu0 0.0
        %2797 = vmatpush2.xpose.msra.mxu0 0.0
        %2798 = vmatprep.subr.mxu0 0.0
        %2799 = vmatpush2.xpose.msra.mxu0 0.0
        %2800 = vmatprep.subr.mxu0 0.0
        %2801 = vmatpush2.xpose.msra.mxu0 0.0
        %2802 = vmatprep.subr.mxu0 0.0
        %2803 = vmatpush2.xpose.msra.mxu0 0.0
        %2804 = vmatprep.subr.mxu0 0.0
        %2805 = vmatpush2.xpose.msra.mxu0 0.0
        %2806 = vmatprep.subr.mxu0 0.0
        %2807 = vmatpush2.xpose.msra.mxu0 0.0
        %2808 = vmatprep.subr.mxu0 0.0
        %2809 = vmatpush2.xpose.msra.mxu0 0.0
        %2810 = vmatprep.subr.mxu0 0.0
        %2811 = vmatpush2.xpose.msra.mxu0 0.0
        %2812 = vmatprep.subr.mxu0 0.0
        %2813 = vmatpush2.xpose.msra.mxu0 0.0
        %2814 = vmatprep.subr.mxu0 0.0
        %2815 = vmatpush2.xpose.msra.mxu0 0.0
        %2816 = vmatprep.subr.mxu0 0.0
        %2817 = vmatpush2.xpose.msra.mxu0 0.0
        %2818 = vmatprep.mubr.f32.mxu0 0.0
        %2819 = vmatmul.mubr.f32.gmra.mxu0 %v2750
        %v2820 = vpop.f32.mrf.mxu0
        %v2821 = vadd.f32 0.0, %v2820
        %v2822 = vpop.f32.mrf.mxu0
        %2823 = vdwg.mxu0
        %v2824 = vsel %vm1138, %v2821, -inf
        %2825 = vmax.xlane.f32.xlu0 %v2824
        %v2826 = vpop.xlane.xlu0 %2825
        %v2827 = vsub.f32 %v2821, %v2826
        %v2828 = vmul.f32 %v2827, 1.442695
        %v2829 = vpow.pop %v2828
        %v2830 = vsel %vm1138, %v2829, 0.0
        %2831 = vadd.xlane.f32.xlu0 %v2830
        %v2832 = vpop.xlane.xlu0 %2831
        %v2833 = vrcp.pop %v2832
        %v2834 = vmul.f32 %v2829, %v2833
        %2835 = vrot.lane.b32.xlu0 %v1058, 96
        %v2836 = vpop.permute.xlu0 %2835
        %v2839 = vsel %vm1138, %v2834, 0
        %2841 = vmatprep.subr.mxu0 0.0
        %2842 = vmatpush1.msra.mxu0 0.0
        %2843 = vmatprep.subr.mxu0 0.0
        %2844 = vmatpush1.msra.mxu0 0.0
        %2845 = vmatprep.subr.mxu0 0.0
        %2846 = vmatpush1.msra.mxu0 0.0
        %2847 = vmatprep.subr.mxu0 0.0
        %2848 = vmatpush1.msra.mxu0 0.0
        %2849 = vmatprep.subr.mxu0 0.0
        %2850 = vmatpush1.msra.mxu0 0.0
        %2851 = vmatprep.subr.mxu0 0.0
        %2852 = vmatpush1.msra.mxu0 0.0
        %2853 = vmatprep.subr.mxu0 0.0
        %2854 = vmatpush1.msra.mxu0 0.0
        %2855 = vmatprep.subr.mxu0 0.0
        %2856 = vmatpush1.msra.mxu0 0.0
        %2857 = vmatprep.subr.mxu0 0.0
        %2858 = vmatpush1.msra.mxu0 0.0
        %2859 = vmatprep.subr.mxu0 0.0
        %2860 = vmatpush1.msra.mxu0 0.0
        %2861 = vmatprep.subr.mxu0 0.0
        %2862 = vmatpush1.msra.mxu0 0.0
        %2863 = vmatprep.subr.mxu0 0.0
        %2864 = vmatpush1.msra.mxu0 0.0
        %2865 = vmatprep.subr.mxu0 0.0
        %2866 = vmatpush1.msra.mxu0 0.0
        %2867 = vmatprep.subr.mxu0 0.0
        %2868 = vmatpush1.msra.mxu0 0.0
        %2869 = vmatprep.subr.mxu0 0.0
        %2870 = vmatpush1.msra.mxu0 0.0
        %2871 = vmatprep.subr.mxu0 0.0
        %2872 = vmatpush1.msra.mxu0 %v2836
        %2873 = vmatprep.subr.mxu0 0.0
        %2874 = vmatpush2.msra.mxu0 0.0
        %2875 = vmatprep.subr.mxu0 0.0
        %2876 = vmatpush2.msra.mxu0 0.0
        %2877 = vmatprep.subr.mxu0 0.0
        %2878 = vmatpush2.msra.mxu0 0.0
        %2879 = vmatprep.subr.mxu0 0.0
        %2880 = vmatpush2.msra.mxu0 0.0
        %2881 = vmatprep.subr.mxu0 0.0
        %2882 = vmatpush2.msra.mxu0 0.0
        %2883 = vmatprep.subr.mxu0 0.0
        %2884 = vmatpush2.msra.mxu0 0.0
        %2885 = vmatprep.subr.mxu0 0.0
        %2886 = vmatpush2.msra.mxu0 0.0
        %2887 = vmatprep.subr.mxu0 0.0
        %2888 = vmatpush2.msra.mxu0 0.0
        %2889 = vmatprep.subr.mxu0 0.0
        %2890 = vmatpush2.msra.mxu0 0.0
        %2891 = vmatprep.subr.mxu0 0.0
        %2892 = vmatpush2.msra.mxu0 0.0
        %2893 = vmatprep.subr.mxu0 0.0
        %2894 = vmatpush2.msra.mxu0 0.0
        %2895 = vmatprep.subr.mxu0 0.0
        %2896 = vmatpush2.msra.mxu0 0.0
        %2897 = vmatprep.subr.mxu0 0.0
        %2898 = vmatpush2.msra.mxu0 0.0
        %2899 = vmatprep.subr.mxu0 0.0
        %2900 = vmatpush2.msra.mxu0 0.0
        %2901 = vmatprep.subr.mxu0 0.0
        %2902 = vmatpush2.msra.mxu0 0.0
        %2903 = vmatprep.subr.mxu0 0.0
        %2904 = vmatpush2.msra.mxu0 0.0
        %2905 = vmatprep.mubr.f32.mxu0 0.0
        %2906 = vmatmul.mubr.f32.gmra.mxu0 %v2839
        %v2907 = vpop.f32.mrf.mxu0
        %v2908 = vadd.f32 0.0, %v2907
        %v2909 = vpop.f32.mrf.mxu0
        %2910 = vdwg.mxu0
        %2911 = vrot.lane.b32.xlu0 %v878, 80
        %v2912 = vpop.permute.xlu0 %2911
        %2913 = vrot.lane.b32.xlu0 %v967, 80
        %v2914 = vpop.permute.xlu0 %2913
        %v2915 = vsel %vm1061, %v2912, 0
        %v2917 = vsel %vm1061, %v2914, 0
        %2919 = vmatprep.subr.mxu0 0.0
        %2920 = vmatpush1.xpose.msra.mxu0 0.0
        %2921 = vmatprep.subr.mxu0 0.0
        %2922 = vmatpush1.xpose.msra.mxu0 0.0
        %2923 = vmatprep.subr.mxu0 0.0
        %2924 = vmatpush1.xpose.msra.mxu0 0.0
        %2925 = vmatprep.subr.mxu0 0.0
        %2926 = vmatpush1.xpose.msra.mxu0 0.0
        %2927 = vmatprep.subr.mxu0 0.0
        %2928 = vmatpush1.xpose.msra.mxu0 0.0
        %2929 = vmatprep.subr.mxu0 0.0
        %2930 = vmatpush1.xpose.msra.mxu0 0.0
        %2931 = vmatprep.subr.mxu0 0.0
        %2932 = vmatpush1.xpose.msra.mxu0 0.0
        %2933 = vmatprep.subr.mxu0 0.0
        %2934 = vmatpush1.xpose.msra.mxu0 0.0
        %2935 = vmatprep.subr.mxu0 0.0
        %2936 = vmatpush1.xpose.msra.mxu0 0.0
        %2937 = vmatprep.subr.mxu0 0.0
        %2938 = vmatpush1.xpose.msra.mxu0 0.0
        %2939 = vmatprep.subr.mxu0 0.0
        %2940 = vmatpush1.xpose.msra.mxu0 0.0
        %2941 = vmatprep.subr.mxu0 0.0
        %2942 = vmatpush1.xpose.msra.mxu0 0.0
        %2943 = vmatprep.subr.mxu0 0.0
        %2944 = vmatpush1.xpose.msra.mxu0 0.0
        %2945 = vmatprep.subr.mxu0 0.0
        %2946 = vmatpush1.xpose.msra.mxu0 0.0
        %2947 = vmatprep.subr.mxu0 0.0
        %2948 = vmatpush1.xpose.msra.mxu0 0.0
        %2949 = vmatprep.subr.mxu0 0.0
        %2950 = vmatpush1.xpose.msra.mxu0 %v2917
        %2951 = vmatprep.subr.mxu0 0.0
        %2952 = vmatpush2.xpose.msra.mxu0 0.0
        %2953 = vmatprep.subr.mxu0 0.0
        %2954 = vmatpush2.xpose.msra.mxu0 0.0
        %2955 = vmatprep.subr.mxu0 0.0
        %2956 = vmatpush2.xpose.msra.mxu0 0.0
        %2957 = vmatprep.subr.mxu0 0.0
        %2958 = vmatpush2.xpose.msra.mxu0 0.0
        %2959 = vmatprep.subr.mxu0 0.0
        %2960 = vmatpush2.xpose.msra.mxu0 0.0
        %2961 = vmatprep.subr.mxu0 0.0
        %2962 = vmatpush2.xpose.msra.mxu0 0.0
        %2963 = vmatprep.subr.mxu0 0.0
        %2964 = vmatpush2.xpose.msra.mxu0 0.0
        %2965 = vmatprep.subr.mxu0 0.0
        %2966 = vmatpush2.xpose.msra.mxu0 0.0
        %2967 = vmatprep.subr.mxu0 0.0
        %2968 = vmatpush2.xpose.msra.mxu0 0.0
        %2969 = vmatprep.subr.mxu0 0.0
        %2970 = vmatpush2.xpose.msra.mxu0 0.0
        %2971 = vmatprep.subr.mxu0 0.0
        %2972 = vmatpush2.xpose.msra.mxu0 0.0
        %2973 = vmatprep.subr.mxu0 0.0
        %2974 = vmatpush2.xpose.msra.mxu0 0.0
        %2975 = vmatprep.subr.mxu0 0.0
        %2976 = vmatpush2.xpose.msra.mxu0 0.0
        %2977 = vmatprep.subr.mxu0 0.0
        %2978 = vmatpush2.xpose.msra.mxu0 0.0
        %2979 = vmatprep.subr.mxu0 0.0
        %2980 = vmatpush2.xpose.msra.mxu0 0.0
        %2981 = vmatprep.subr.mxu0 0.0
        %2982 = vmatpush2.xpose.msra.mxu0 0.0
        %2983 = vmatprep.mubr.f32.mxu0 0.0
        %2984 = vmatmul.mubr.f32.gmra.mxu0 %v2915
        %v2985 = vpop.f32.mrf.mxu0
        %v2986 = vadd.f32 0.0, %v2985
        %v2987 = vpop.f32.mrf.mxu0
        %2988 = vdwg.mxu0
        %v2989 = vsel %vm1138, %v2986, -inf
        %2990 = vmax.xlane.f32.xlu0 %v2989
        %v2991 = vpop.xlane.xlu0 %2990
        %v2992 = vsub.f32 %v2986, %v2991
        %v2993 = vmul.f32 %v2992, 1.442695
        %v2994 = vpow.pop %v2993
        %v2995 = vsel %vm1138, %v2994, 0.0
        %2996 = vadd.xlane.f32.xlu0 %v2995
        %v2997 = vpop.xlane.xlu0 %2996
        %v2998 = vrcp.pop %v2997
        %v2999 = vmul.f32 %v2994, %v2998
        %3000 = vrot.lane.b32.xlu0 %v1058, 80
        %v3001 = vpop.permute.xlu0 %3000
        %v3004 = vsel %vm1138, %v2999, 0
        %3006 = vmatprep.subr.mxu0 0.0
        %3007 = vmatpush1.msra.mxu0 0.0
        %3008 = vmatprep.subr.mxu0 0.0
        %3009 = vmatpush1.msra.mxu0 0.0
        %3010 = vmatprep.subr.mxu0 0.0
        %3011 = vmatpush1.msra.mxu0 0.0
        %3012 = vmatprep.subr.mxu0 0.0
        %3013 = vmatpush1.msra.mxu0 0.0
        %3014 = vmatprep.subr.mxu0 0.0
        %3015 = vmatpush1.msra.mxu0 0.0
        %3016 = vmatprep.subr.mxu0 0.0
        %3017 = vmatpush1.msra.mxu0 0.0
        %3018 = vmatprep.subr.mxu0 0.0
        %3019 = vmatpush1.msra.mxu0 0.0
        %3020 = vmatprep.subr.mxu0 0.0
        %3021 = vmatpush1.msra.mxu0 0.0
        %3022 = vmatprep.subr.mxu0 0.0
        %3023 = vmatpush1.msra.mxu0 0.0
        %3024 = vmatprep.subr.mxu0 0.0
        %3025 = vmatpush1.msra.mxu0 0.0
        %3026 = vmatprep.subr.mxu0 0.0
        %3027 = vmatpush1.msra.mxu0 0.0
        %3028 = vmatprep.subr.mxu0 0.0
        %3029 = vmatpush1.msra.mxu0 0.0
        %3030 = vmatprep.subr.mxu0 0.0
        %3031 = vmatpush1.msra.mxu0 0.0
        %3032 = vmatprep.subr.mxu0 0.0
        %3033 = vmatpush1.msra.mxu0 0.0
        %3034 = vmatprep.subr.mxu0 0.0
        %3035 = vmatpush1.msra.mxu0 0.0
        %3036 = vmatprep.subr.mxu0 0.0
        %3037 = vmatpush1.msra.mxu0 %v3001
        %3038 = vmatprep.subr.mxu0 0.0
        %3039 = vmatpush2.msra.mxu0 0.0
        %3040 = vmatprep.subr.mxu0 0.0
        %3041 = vmatpush2.msra.mxu0 0.0
        %3042 = vmatprep.subr.mxu0 0.0
        %3043 = vmatpush2.msra.mxu0 0.0
        %3044 = vmatprep.subr.mxu0 0.0
        %3045 = vmatpush2.msra.mxu0 0.0
        %3046 = vmatprep.subr.mxu0 0.0
        %3047 = vmatpush2.msra.mxu0 0.0
        %3048 = vmatprep.subr.mxu0 0.0
        %3049 = vmatpush2.msra.mxu0 0.0
        %3050 = vmatprep.subr.mxu0 0.0
        %3051 = vmatpush2.msra.mxu0 0.0
        %3052 = vmatprep.subr.mxu0 0.0
        %3053 = vmatpush2.msra.mxu0 0.0
        %3054 = vmatprep.subr.mxu0 0.0
        %3055 = vmatpush2.msra.mxu0 0.0
        %3056 = vmatprep.subr.mxu0 0.0
        %3057 = vmatpush2.msra.mxu0 0.0
        %3058 = vmatprep.subr.mxu0 0.0
        %3059 = vmatpush2.msra.mxu0 0.0
        %3060 = vmatprep.subr.mxu0 0.0
        %3061 = vmatpush2.msra.mxu0 0.0
        %3062 = vmatprep.subr.mxu0 0.0
        %3063 = vmatpush2.msra.mxu0 0.0
        %3064 = vmatprep.subr.mxu0 0.0
        %3065 = vmatpush2.msra.mxu0 0.0
        %3066 = vmatprep.subr.mxu0 0.0
        %3067 = vmatpush2.msra.mxu0 0.0
        %3068 = vmatprep.subr.mxu0 0.0
        %3069 = vmatpush2.msra.mxu0 0.0
        %3070 = vmatprep.mubr.f32.mxu0 0.0
        %3071 = vmatmul.mubr.f32.gmra.mxu0 %v3004
        %v3072 = vpop.f32.mrf.mxu0
        %v3073 = vadd.f32 0.0, %v3072
        %v3074 = vpop.f32.mrf.mxu0
        %3075 = vdwg.mxu0
        %3076 = vrot.lane.b32.xlu0 %v878, 64
        %v3077 = vpop.permute.xlu0 %3076
        %3078 = vrot.lane.b32.xlu0 %v967, 64
        %v3079 = vpop.permute.xlu0 %3078
        %v3080 = vsel %vm1061, %v3077, 0
        %v3082 = vsel %vm1061, %v3079, 0
        %3084 = vmatprep.subr.mxu0 0.0
        %3085 = vmatpush1.xpose.msra.mxu0 0.0
        %3086 = vmatprep.subr.mxu0 0.0
        %3087 = vmatpush1.xpose.msra.mxu0 0.0
        %3088 = vmatprep.subr.mxu0 0.0
        %3089 = vmatpush1.xpose.msra.mxu0 0.0
        %3090 = vmatprep.subr.mxu0 0.0
        %3091 = vmatpush1.xpose.msra.mxu0 0.0
        %3092 = vmatprep.subr.mxu0 0.0
        %3093 = vmatpush1.xpose.msra.mxu0 0.0
        %3094 = vmatprep.subr.mxu0 0.0
        %3095 = vmatpush1.xpose.msra.mxu0 0.0
        %3096 = vmatprep.subr.mxu0 0.0
        %3097 = vmatpush1.xpose.msra.mxu0 0.0
        %3098 = vmatprep.subr.mxu0 0.0
        %3099 = vmatpush1.xpose.msra.mxu0 0.0
        %3100 = vmatprep.subr.mxu0 0.0
        %3101 = vmatpush1.xpose.msra.mxu0 0.0
        %3102 = vmatprep.subr.mxu0 0.0
        %3103 = vmatpush1.xpose.msra.mxu0 0.0
        %3104 = vmatprep.subr.mxu0 0.0
        %3105 = vmatpush1.xpose.msra.mxu0 0.0
        %3106 = vmatprep.subr.mxu0 0.0
        %3107 = vmatpush1.xpose.msra.mxu0 0.0
        %3108 = vmatprep.subr.mxu0 0.0
        %3109 = vmatpush1.xpose.msra.mxu0 0.0
        %3110 = vmatprep.subr.mxu0 0.0
        %3111 = vmatpush1.xpose.msra.mxu0 0.0
        %3112 = vmatprep.subr.mxu0 0.0
        %3113 = vmatpush1.xpose.msra.mxu0 0.0
        %3114 = vmatprep.subr.mxu0 0.0
        %3115 = vmatpush1.xpose.msra.mxu0 %v3082
        %3116 = vmatprep.subr.mxu0 0.0
        %3117 = vmatpush2.xpose.msra.mxu0 0.0
        %3118 = vmatprep.subr.mxu0 0.0
        %3119 = vmatpush2.xpose.msra.mxu0 0.0
        %3120 = vmatprep.subr.mxu0 0.0
        %3121 = vmatpush2.xpose.msra.mxu0 0.0
        %3122 = vmatprep.subr.mxu0 0.0
        %3123 = vmatpush2.xpose.msra.mxu0 0.0
        %3124 = vmatprep.subr.mxu0 0.0
        %3125 = vmatpush2.xpose.msra.mxu0 0.0
        %3126 = vmatprep.subr.mxu0 0.0
        %3127 = vmatpush2.xpose.msra.mxu0 0.0
        %3128 = vmatprep.subr.mxu0 0.0
        %3129 = vmatpush2.xpose.msra.mxu0 0.0
        %3130 = vmatprep.subr.mxu0 0.0
        %3131 = vmatpush2.xpose.msra.mxu0 0.0
        %3132 = vmatprep.subr.mxu0 0.0
        %3133 = vmatpush2.xpose.msra.mxu0 0.0
        %3134 = vmatprep.subr.mxu0 0.0
        %3135 = vmatpush2.xpose.msra.mxu0 0.0
        %3136 = vmatprep.subr.mxu0 0.0
        %3137 = vmatpush2.xpose.msra.mxu0 0.0
        %3138 = vmatprep.subr.mxu0 0.0
        %3139 = vmatpush2.xpose.msra.mxu0 0.0
        %3140 = vmatprep.subr.mxu0 0.0
        %3141 = vmatpush2.xpose.msra.mxu0 0.0
        %3142 = vmatprep.subr.mxu0 0.0
        %3143 = vmatpush2.xpose.msra.mxu0 0.0
        %3144 = vmatprep.subr.mxu0 0.0
        %3145 = vmatpush2.xpose.msra.mxu0 0.0
        %3146 = vmatprep.subr.mxu0 0.0
        %3147 = vmatpush2.xpose.msra.mxu0 0.0
        %3148 = vmatprep.mubr.f32.mxu0 0.0
        %3149 = vmatmul.mubr.f32.gmra.mxu0 %v3080
        %v3150 = vpop.f32.mrf.mxu0
        %v3151 = vadd.f32 0.0, %v3150
        %v3152 = vpop.f32.mrf.mxu0
        %3153 = vdwg.mxu0
        %v3154 = vsel %vm1138, %v3151, -inf
        %3155 = vmax.xlane.f32.xlu0 %v3154
        %v3156 = vpop.xlane.xlu0 %3155
        %v3157 = vsub.f32 %v3151, %v3156
        %v3158 = vmul.f32 %v3157, 1.442695
        %v3159 = vpow.pop %v3158
        %v3160 = vsel %vm1138, %v3159, 0.0
        %3161 = vadd.xlane.f32.xlu0 %v3160
        %v3162 = vpop.xlane.xlu0 %3161
        %v3163 = vrcp.pop %v3162
        %v3164 = vmul.f32 %v3159, %v3163
        %3165 = vrot.lane.b32.xlu0 %v1058, 64
        %v3166 = vpop.permute.xlu0 %3165
        %v3169 = vsel %vm1138, %v3164, 0
        %3171 = vmatprep.subr.mxu0 0.0
        %3172 = vmatpush1.msra.mxu0 0.0
        %3173 = vmatprep.subr.mxu0 0.0
        %3174 = vmatpush1.msra.mxu0 0.0
        %3175 = vmatprep.subr.mxu0 0.0
        %3176 = vmatpush1.msra.mxu0 0.0
        %3177 = vmatprep.subr.mxu0 0.0
        %3178 = vmatpush1.msra.mxu0 0.0
        %3179 = vmatprep.subr.mxu0 0.0
        %3180 = vmatpush1.msra.mxu0 0.0
        %3181 = vmatprep.subr.mxu0 0.0
        %3182 = vmatpush1.msra.mxu0 0.0
        %3183 = vmatprep.subr.mxu0 0.0
        %3184 = vmatpush1.msra.mxu0 0.0
        %3185 = vmatprep.subr.mxu0 0.0
        %3186 = vmatpush1.msra.mxu0 0.0
        %3187 = vmatprep.subr.mxu0 0.0
        %3188 = vmatpush1.msra.mxu0 0.0
        %3189 = vmatprep.subr.mxu0 0.0
        %3190 = vmatpush1.msra.mxu0 0.0
        %3191 = vmatprep.subr.mxu0 0.0
        %3192 = vmatpush1.msra.mxu0 0.0
        %3193 = vmatprep.subr.mxu0 0.0
        %3194 = vmatpush1.msra.mxu0 0.0
        %3195 = vmatprep.subr.mxu0 0.0
        %3196 = vmatpush1.msra.mxu0 0.0
        %3197 = vmatprep.subr.mxu0 0.0
        %3198 = vmatpush1.msra.mxu0 0.0
        %3199 = vmatprep.subr.mxu0 0.0
        %3200 = vmatpush1.msra.mxu0 0.0
        %3201 = vmatprep.subr.mxu0 0.0
        %3202 = vmatpush1.msra.mxu0 %v3166
        %3203 = vmatprep.subr.mxu0 0.0
        %3204 = vmatpush2.msra.mxu0 0.0
        %3205 = vmatprep.subr.mxu0 0.0
        %3206 = vmatpush2.msra.mxu0 0.0
        %3207 = vmatprep.subr.mxu0 0.0
        %3208 = vmatpush2.msra.mxu0 0.0
        %3209 = vmatprep.subr.mxu0 0.0
        %3210 = vmatpush2.msra.mxu0 0.0
        %3211 = vmatprep.subr.mxu0 0.0
        %3212 = vmatpush2.msra.mxu0 0.0
        %3213 = vmatprep.subr.mxu0 0.0
        %3214 = vmatpush2.msra.mxu0 0.0
        %3215 = vmatprep.subr.mxu0 0.0
        %3216 = vmatpush2.msra.mxu0 0.0
        %3217 = vmatprep.subr.mxu0 0.0
        %3218 = vmatpush2.msra.mxu0 0.0
        %3219 = vmatprep.subr.mxu0 0.0
        %3220 = vmatpush2.msra.mxu0 0.0
        %3221 = vmatprep.subr.mxu0 0.0
        %3222 = vmatpush2.msra.mxu0 0.0
        %3223 = vmatprep.subr.mxu0 0.0
        %3224 = vmatpush2.msra.mxu0 0.0
        %3225 = vmatprep.subr.mxu0 0.0
        %3226 = vmatpush2.msra.mxu0 0.0
        %3227 = vmatprep.subr.mxu0 0.0
        %3228 = vmatpush2.msra.mxu0 0.0
        %3229 = vmatprep.subr.mxu0 0.0
        %3230 = vmatpush2.msra.mxu0 0.0
        %3231 = vmatprep.subr.mxu0 0.0
        %3232 = vmatpush2.msra.mxu0 0.0
        %3233 = vmatprep.subr.mxu0 0.0
        %3234 = vmatpush2.msra.mxu0 0.0
        %3235 = vmatprep.mubr.f32.mxu0 0.0
        %3236 = vmatmul.mubr.f32.gmra.mxu0 %v3169
        %v3237 = vpop.f32.mrf.mxu0
        %v3238 = vadd.f32 0.0, %v3237
        %v3239 = vpop.f32.mrf.mxu0
        %3240 = vdwg.mxu0
        %3241 = vrot.lane.b32.xlu0 %v878, 48
        %v3242 = vpop.permute.xlu0 %3241
        %3243 = vrot.lane.b32.xlu0 %v967, 48
        %v3244 = vpop.permute.xlu0 %3243
        %v3245 = vsel %vm1061, %v3242, 0
        %v3247 = vsel %vm1061, %v3244, 0
        %3249 = vmatprep.subr.mxu0 0.0
        %3250 = vmatpush1.xpose.msra.mxu0 0.0
        %3251 = vmatprep.subr.mxu0 0.0
        %3252 = vmatpush1.xpose.msra.mxu0 0.0
        %3253 = vmatprep.subr.mxu0 0.0
        %3254 = vmatpush1.xpose.msra.mxu0 0.0
        %3255 = vmatprep.subr.mxu0 0.0
        %3256 = vmatpush1.xpose.msra.mxu0 0.0
        %3257 = vmatprep.subr.mxu0 0.0
        %3258 = vmatpush1.xpose.msra.mxu0 0.0
        %3259 = vmatprep.subr.mxu0 0.0
        %3260 = vmatpush1.xpose.msra.mxu0 0.0
        %3261 = vmatprep.subr.mxu0 0.0
        %3262 = vmatpush1.xpose.msra.mxu0 0.0
        %3263 = vmatprep.subr.mxu0 0.0
        %3264 = vmatpush1.xpose.msra.mxu0 0.0
        %3265 = vmatprep.subr.mxu0 0.0
        %3266 = vmatpush1.xpose.msra.mxu0 0.0
        %3267 = vmatprep.subr.mxu0 0.0
        %3268 = vmatpush1.xpose.msra.mxu0 0.0
        %3269 = vmatprep.subr.mxu0 0.0
        %3270 = vmatpush1.xpose.msra.mxu0 0.0
        %3271 = vmatprep.subr.mxu0 0.0
        %3272 = vmatpush1.xpose.msra.mxu0 0.0
        %3273 = vmatprep.subr.mxu0 0.0
        %3274 = vmatpush1.xpose.msra.mxu0 0.0
        %3275 = vmatprep.subr.mxu0 0.0
        %3276 = vmatpush1.xpose.msra.mxu0 0.0
        %3277 = vmatprep.subr.mxu0 0.0
        %3278 = vmatpush1.xpose.msra.mxu0 0.0
        %3279 = vmatprep.subr.mxu0 0.0
        %3280 = vmatpush1.xpose.msra.mxu0 %v3247
        %3281 = vmatprep.subr.mxu0 0.0
        %3282 = vmatpush2.xpose.msra.mxu0 0.0
        %3283 = vmatprep.subr.mxu0 0.0
        %3284 = vmatpush2.xpose.msra.mxu0 0.0
        %3285 = vmatprep.subr.mxu0 0.0
        %3286 = vmatpush2.xpose.msra.mxu0 0.0
        %3287 = vmatprep.subr.mxu0 0.0
        %3288 = vmatpush2.xpose.msra.mxu0 0.0
        %3289 = vmatprep.subr.mxu0 0.0
        %3290 = vmatpush2.xpose.msra.mxu0 0.0
        %3291 = vmatprep.subr.mxu0 0.0
        %3292 = vmatpush2.xpose.msra.mxu0 0.0
        %3293 = vmatprep.subr.mxu0 0.0
        %3294 = vmatpush2.xpose.msra.mxu0 0.0
        %3295 = vmatprep.subr.mxu0 0.0
        %3296 = vmatpush2.xpose.msra.mxu0 0.0
        %3297 = vmatprep.subr.mxu0 0.0
        %3298 = vmatpush2.xpose.msra.mxu0 0.0
        %3299 = vmatprep.subr.mxu0 0.0
        %3300 = vmatpush2.xpose.msra.mxu0 0.0
        %3301 = vmatprep.subr.mxu0 0.0
        %3302 = vmatpush2.xpose.msra.mxu0 0.0
        %3303 = vmatprep.subr.mxu0 0.0
        %3304 = vmatpush2.xpose.msra.mxu0 0.0
        %3305 = vmatprep.subr.mxu0 0.0
        %3306 = vmatpush2.xpose.msra.mxu0 0.0
        %3307 = vmatprep.subr.mxu0 0.0
        %3308 = vmatpush2.xpose.msra.mxu0 0.0
        %3309 = vmatprep.subr.mxu0 0.0
        %3310 = vmatpush2.xpose.msra.mxu0 0.0
        %3311 = vmatprep.subr.mxu0 0.0
        %3312 = vmatpush2.xpose.msra.mxu0 0.0
        %3313 = vmatprep.mubr.f32.mxu0 0.0
        %3314 = vmatmul.mubr.f32.gmra.mxu0 %v3245
        %v3315 = vpop.f32.mrf.mxu0
        %v3316 = vadd.f32 0.0, %v3315
        %v3317 = vpop.f32.mrf.mxu0
        %3318 = vdwg.mxu0
        %v3319 = vsel %vm1138, %v3316, -inf
        %3320 = vmax.xlane.f32.xlu0 %v3319
        %v3321 = vpop.xlane.xlu0 %3320
        %v3322 = vsub.f32 %v3316, %v3321
        %v3323 = vmul.f32 %v3322, 1.442695
        %v3324 = vpow.pop %v3323
        %v3325 = vsel %vm1138, %v3324, 0.0
        %3326 = vadd.xlane.f32.xlu0 %v3325
        %v3327 = vpop.xlane.xlu0 %3326
        %v3328 = vrcp.pop %v3327
        %v3329 = vmul.f32 %v3324, %v3328
        %3330 = vrot.lane.b32.xlu0 %v1058, 48
        %v3331 = vpop.permute.xlu0 %3330
        %v3334 = vsel %vm1138, %v3329, 0
        %3336 = vmatprep.subr.mxu0 0.0
        %3337 = vmatpush1.msra.mxu0 0.0
        %3338 = vmatprep.subr.mxu0 0.0
        %3339 = vmatpush1.msra.mxu0 0.0
        %3340 = vmatprep.subr.mxu0 0.0
        %3341 = vmatpush1.msra.mxu0 0.0
        %3342 = vmatprep.subr.mxu0 0.0
        %3343 = vmatpush1.msra.mxu0 0.0
        %3344 = vmatprep.subr.mxu0 0.0
        %3345 = vmatpush1.msra.mxu0 0.0
        %3346 = vmatprep.subr.mxu0 0.0
        %3347 = vmatpush1.msra.mxu0 0.0
        %3348 = vmatprep.subr.mxu0 0.0
        %3349 = vmatpush1.msra.mxu0 0.0
        %3350 = vmatprep.subr.mxu0 0.0
        %3351 = vmatpush1.msra.mxu0 0.0
        %3352 = vmatprep.subr.mxu0 0.0
        %3353 = vmatpush1.msra.mxu0 0.0
        %3354 = vmatprep.subr.mxu0 0.0
        %3355 = vmatpush1.msra.mxu0 0.0
        %3356 = vmatprep.subr.mxu0 0.0
        %3357 = vmatpush1.msra.mxu0 0.0
        %3358 = vmatprep.subr.mxu0 0.0
        %3359 = vmatpush1.msra.mxu0 0.0
        %3360 = vmatprep.subr.mxu0 0.0
        %3361 = vmatpush1.msra.mxu0 0.0
        %3362 = vmatprep.subr.mxu0 0.0
        %3363 = vmatpush1.msra.mxu0 0.0
        %3364 = vmatprep.subr.mxu0 0.0
        %3365 = vmatpush1.msra.mxu0 0.0
        %3366 = vmatprep.subr.mxu0 0.0
        %3367 = vmatpush1.msra.mxu0 %v3331
        %3368 = vmatprep.subr.mxu0 0.0
        %3369 = vmatpush2.msra.mxu0 0.0
        %3370 = vmatprep.subr.mxu0 0.0
        %3371 = vmatpush2.msra.mxu0 0.0
        %3372 = vmatprep.subr.mxu0 0.0
        %3373 = vmatpush2.msra.mxu0 0.0
        %3374 = vmatprep.subr.mxu0 0.0
        %3375 = vmatpush2.msra.mxu0 0.0
        %3376 = vmatprep.subr.mxu0 0.0
        %3377 = vmatpush2.msra.mxu0 0.0
        %3378 = vmatprep.subr.mxu0 0.0
        %3379 = vmatpush2.msra.mxu0 0.0
        %3380 = vmatprep.subr.mxu0 0.0
        %3381 = vmatpush2.msra.mxu0 0.0
        %3382 = vmatprep.subr.mxu0 0.0
        %3383 = vmatpush2.msra.mxu0 0.0
        %3384 = vmatprep.subr.mxu0 0.0
        %3385 = vmatpush2.msra.mxu0 0.0
        %3386 = vmatprep.subr.mxu0 0.0
        %3387 = vmatpush2.msra.mxu0 0.0
        %3388 = vmatprep.subr.mxu0 0.0
        %3389 = vmatpush2.msra.mxu0 0.0
        %3390 = vmatprep.subr.mxu0 0.0
        %3391 = vmatpush2.msra.mxu0 0.0
        %3392 = vmatprep.subr.mxu0 0.0
        %3393 = vmatpush2.msra.mxu0 0.0
        %3394 = vmatprep.subr.mxu0 0.0
        %3395 = vmatpush2.msra.mxu0 0.0
        %3396 = vmatprep.subr.mxu0 0.0
        %3397 = vmatpush2.msra.mxu0 0.0
        %3398 = vmatprep.subr.mxu0 0.0
        %3399 = vmatpush2.msra.mxu0 0.0
        %3400 = vmatprep.mubr.f32.mxu0 0.0
        %3401 = vmatmul.mubr.f32.gmra.mxu0 %v3334
        %v3402 = vpop.f32.mrf.mxu0
        %v3403 = vadd.f32 0.0, %v3402
        %v3404 = vpop.f32.mrf.mxu0
        %3405 = vdwg.mxu0
        %3406 = vrot.lane.b32.xlu0 %v878, 32
        %v3407 = vpop.permute.xlu0 %3406
        %3408 = vrot.lane.b32.xlu0 %v967, 32
        %v3409 = vpop.permute.xlu0 %3408
        %v3410 = vsel %vm1061, %v3407, 0
        %v3412 = vsel %vm1061, %v3409, 0
        %3414 = vmatprep.subr.mxu0 0.0
        %3415 = vmatpush1.xpose.msra.mxu0 0.0
        %3416 = vmatprep.subr.mxu0 0.0
        %3417 = vmatpush1.xpose.msra.mxu0 0.0
        %3418 = vmatprep.subr.mxu0 0.0
        %3419 = vmatpush1.xpose.msra.mxu0 0.0
        %3420 = vmatprep.subr.mxu0 0.0
        %3421 = vmatpush1.xpose.msra.mxu0 0.0
        %3422 = vmatprep.subr.mxu0 0.0
        %3423 = vmatpush1.xpose.msra.mxu0 0.0
        %3424 = vmatprep.subr.mxu0 0.0
        %3425 = vmatpush1.xpose.msra.mxu0 0.0
        %3426 = vmatprep.subr.mxu0 0.0
        %3427 = vmatpush1.xpose.msra.mxu0 0.0
        %3428 = vmatprep.subr.mxu0 0.0
        %3429 = vmatpush1.xpose.msra.mxu0 0.0
        %3430 = vmatprep.subr.mxu0 0.0
        %3431 = vmatpush1.xpose.msra.mxu0 0.0
        %3432 = vmatprep.subr.mxu0 0.0
        %3433 = vmatpush1.xpose.msra.mxu0 0.0
        %3434 = vmatprep.subr.mxu0 0.0
        %3435 = vmatpush1.xpose.msra.mxu0 0.0
        %3436 = vmatprep.subr.mxu0 0.0
        %3437 = vmatpush1.xpose.msra.mxu0 0.0
        %3438 = vmatprep.subr.mxu0 0.0
        %3439 = vmatpush1.xpose.msra.mxu0 0.0
        %3440 = vmatprep.subr.mxu0 0.0
        %3441 = vmatpush1.xpose.msra.mxu0 0.0
        %3442 = vmatprep.subr.mxu0 0.0
        %3443 = vmatpush1.xpose.msra.mxu0 0.0
        %3444 = vmatprep.subr.mxu0 0.0
        %3445 = vmatpush1.xpose.msra.mxu0 %v3412
        %3446 = vmatprep.subr.mxu0 0.0
        %3447 = vmatpush2.xpose.msra.mxu0 0.0
        %3448 = vmatprep.subr.mxu0 0.0
        %3449 = vmatpush2.xpose.msra.mxu0 0.0
        %3450 = vmatprep.subr.mxu0 0.0
        %3451 = vmatpush2.xpose.msra.mxu0 0.0
        %3452 = vmatprep.subr.mxu0 0.0
        %3453 = vmatpush2.xpose.msra.mxu0 0.0
        %3454 = vmatprep.subr.mxu0 0.0
        %3455 = vmatpush2.xpose.msra.mxu0 0.0
        %3456 = vmatprep.subr.mxu0 0.0
        %3457 = vmatpush2.xpose.msra.mxu0 0.0
        %3458 = vmatprep.subr.mxu0 0.0
        %3459 = vmatpush2.xpose.msra.mxu0 0.0
        %3460 = vmatprep.subr.mxu0 0.0
        %3461 = vmatpush2.xpose.msra.mxu0 0.0
        %3462 = vmatprep.subr.mxu0 0.0
        %3463 = vmatpush2.xpose.msra.mxu0 0.0
        %3464 = vmatprep.subr.mxu0 0.0
        %3465 = vmatpush2.xpose.msra.mxu0 0.0
        %3466 = vmatprep.subr.mxu0 0.0
        %3467 = vmatpush2.xpose.msra.mxu0 0.0
        %3468 = vmatprep.subr.mxu0 0.0
        %3469 = vmatpush2.xpose.msra.mxu0 0.0
        %3470 = vmatprep.subr.mxu0 0.0
        %3471 = vmatpush2.xpose.msra.mxu0 0.0
        %3472 = vmatprep.subr.mxu0 0.0
        %3473 = vmatpush2.xpose.msra.mxu0 0.0
        %3474 = vmatprep.subr.mxu0 0.0
        %3475 = vmatpush2.xpose.msra.mxu0 0.0
        %3476 = vmatprep.subr.mxu0 0.0
        %3477 = vmatpush2.xpose.msra.mxu0 0.0
        %3478 = vmatprep.mubr.f32.mxu0 0.0
        %3479 = vmatmul.mubr.f32.gmra.mxu0 %v3410
        %v3480 = vpop.f32.mrf.mxu0
        %v3481 = vadd.f32 0.0, %v3480
        %v3482 = vpop.f32.mrf.mxu0
        %3483 = vdwg.mxu0
        %v3484 = vsel %vm1138, %v3481, -inf
        %3485 = vmax.xlane.f32.xlu0 %v3484
        %v3486 = vpop.xlane.xlu0 %3485
        %v3487 = vsub.f32 %v3481, %v3486
        %v3488 = vmul.f32 %v3487, 1.442695
        %v3489 = vpow.pop %v3488
        %v3490 = vsel %vm1138, %v3489, 0.0
        %3491 = vadd.xlane.f32.xlu0 %v3490
        %v3492 = vpop.xlane.xlu0 %3491
        %v3493 = vrcp.pop %v3492
        %v3494 = vmul.f32 %v3489, %v3493
        %3495 = vrot.lane.b32.xlu0 %v1058, 32
        %v3496 = vpop.permute.xlu0 %3495
        %v3499 = vsel %vm1138, %v3494, 0
        %3501 = vmatprep.subr.mxu0 0.0
        %3502 = vmatpush1.msra.mxu0 0.0
        %3503 = vmatprep.subr.mxu0 0.0
        %3504 = vmatpush1.msra.mxu0 0.0
        %3505 = vmatprep.subr.mxu0 0.0
        %3506 = vmatpush1.msra.mxu0 0.0
        %3507 = vmatprep.subr.mxu0 0.0
        %3508 = vmatpush1.msra.mxu0 0.0
        %3509 = vmatprep.subr.mxu0 0.0
        %3510 = vmatpush1.msra.mxu0 0.0
        %3511 = vmatprep.subr.mxu0 0.0
        %3512 = vmatpush1.msra.mxu0 0.0
        %3513 = vmatprep.subr.mxu0 0.0
        %3514 = vmatpush1.msra.mxu0 0.0
        %3515 = vmatprep.subr.mxu0 0.0
        %3516 = vmatpush1.msra.mxu0 0.0
        %3517 = vmatprep.subr.mxu0 0.0
        %3518 = vmatpush1.msra.mxu0 0.0
        %3519 = vmatprep.subr.mxu0 0.0
        %3520 = vmatpush1.msra.mxu0 0.0
        %3521 = vmatprep.subr.mxu0 0.0
        %3522 = vmatpush1.msra.mxu0 0.0
        %3523 = vmatprep.subr.mxu0 0.0
        %3524 = vmatpush1.msra.mxu0 0.0
        %3525 = vmatprep.subr.mxu0 0.0
        %3526 = vmatpush1.msra.mxu0 0.0
        %3527 = vmatprep.subr.mxu0 0.0
        %3528 = vmatpush1.msra.mxu0 0.0
        %3529 = vmatprep.subr.mxu0 0.0
        %3530 = vmatpush1.msra.mxu0 0.0
        %3531 = vmatprep.subr.mxu0 0.0
        %3532 = vmatpush1.msra.mxu0 %v3496
        %3533 = vmatprep.subr.mxu0 0.0
        %3534 = vmatpush2.msra.mxu0 0.0
        %3535 = vmatprep.subr.mxu0 0.0
        %3536 = vmatpush2.msra.mxu0 0.0
        %3537 = vmatprep.subr.mxu0 0.0
        %3538 = vmatpush2.msra.mxu0 0.0
        %3539 = vmatprep.subr.mxu0 0.0
        %3540 = vmatpush2.msra.mxu0 0.0
        %3541 = vmatprep.subr.mxu0 0.0
        %3542 = vmatpush2.msra.mxu0 0.0
        %3543 = vmatprep.subr.mxu0 0.0
        %3544 = vmatpush2.msra.mxu0 0.0
        %3545 = vmatprep.subr.mxu0 0.0
        %3546 = vmatpush2.msra.mxu0 0.0
        %3547 = vmatprep.subr.mxu0 0.0
        %3548 = vmatpush2.msra.mxu0 0.0
        %3549 = vmatprep.subr.mxu0 0.0
        %3550 = vmatpush2.msra.mxu0 0.0
        %3551 = vmatprep.subr.mxu0 0.0
        %3552 = vmatpush2.msra.mxu0 0.0
        %3553 = vmatprep.subr.mxu0 0.0
        %3554 = vmatpush2.msra.mxu0 0.0
        %3555 = vmatprep.subr.mxu0 0.0
        %3556 = vmatpush2.msra.mxu0 0.0
        %3557 = vmatprep.subr.mxu0 0.0
        %3558 = vmatpush2.msra.mxu0 0.0
        %3559 = vmatprep.subr.mxu0 0.0
        %3560 = vmatpush2.msra.mxu0 0.0
        %3561 = vmatprep.subr.mxu0 0.0
        %3562 = vmatpush2.msra.mxu0 0.0
        %3563 = vmatprep.subr.mxu0 0.0
        %3564 = vmatpush2.msra.mxu0 0.0
        %3565 = vmatprep.mubr.f32.mxu0 0.0
        %3566 = vmatmul.mubr.f32.gmra.mxu0 %v3499
        %v3567 = vpop.f32.mrf.mxu0
        %v3568 = vadd.f32 0.0, %v3567
        %v3569 = vpop.f32.mrf.mxu0
        %3570 = vdwg.mxu0
        %3571 = vrot.lane.b32.xlu0 %v878, 16
        %v3572 = vpop.permute.xlu0 %3571
        %3573 = vrot.lane.b32.xlu0 %v967, 16
        %v3574 = vpop.permute.xlu0 %3573
        %v3575 = vsel %vm1061, %v3572, 0
        %v3577 = vsel %vm1061, %v3574, 0
        %3579 = vmatprep.subr.mxu0 0.0
        %3580 = vmatpush1.xpose.msra.mxu0 0.0
        %3581 = vmatprep.subr.mxu0 0.0
        %3582 = vmatpush1.xpose.msra.mxu0 0.0
        %3583 = vmatprep.subr.mxu0 0.0
        %3584 = vmatpush1.xpose.msra.mxu0 0.0
        %3585 = vmatprep.subr.mxu0 0.0
        %3586 = vmatpush1.xpose.msra.mxu0 0.0
        %3587 = vmatprep.subr.mxu0 0.0
        %3588 = vmatpush1.xpose.msra.mxu0 0.0
        %3589 = vmatprep.subr.mxu0 0.0
        %3590 = vmatpush1.xpose.msra.mxu0 0.0
        %3591 = vmatprep.subr.mxu0 0.0
        %3592 = vmatpush1.xpose.msra.mxu0 0.0
        %3593 = vmatprep.subr.mxu0 0.0
        %3594 = vmatpush1.xpose.msra.mxu0 0.0
        %3595 = vmatprep.subr.mxu0 0.0
        %3596 = vmatpush1.xpose.msra.mxu0 0.0
        %3597 = vmatprep.subr.mxu0 0.0
        %3598 = vmatpush1.xpose.msra.mxu0 0.0
        %3599 = vmatprep.subr.mxu0 0.0
        %3600 = vmatpush1.xpose.msra.mxu0 0.0
        %3601 = vmatprep.subr.mxu0 0.0
        %3602 = vmatpush1.xpose.msra.mxu0 0.0
        %3603 = vmatprep.subr.mxu0 0.0
        %3604 = vmatpush1.xpose.msra.mxu0 0.0
        %3605 = vmatprep.subr.mxu0 0.0
        %3606 = vmatpush1.xpose.msra.mxu0 0.0
        %3607 = vmatprep.subr.mxu0 0.0
        %3608 = vmatpush1.xpose.msra.mxu0 0.0
        %3609 = vmatprep.subr.mxu0 0.0
        %3610 = vmatpush1.xpose.msra.mxu0 %v3577
        %3611 = vmatprep.subr.mxu0 0.0
        %3612 = vmatpush2.xpose.msra.mxu0 0.0
        %3613 = vmatprep.subr.mxu0 0.0
        %3614 = vmatpush2.xpose.msra.mxu0 0.0
        %3615 = vmatprep.subr.mxu0 0.0
        %3616 = vmatpush2.xpose.msra.mxu0 0.0
        %3617 = vmatprep.subr.mxu0 0.0
        %3618 = vmatpush2.xpose.msra.mxu0 0.0
        %3619 = vmatprep.subr.mxu0 0.0
        %3620 = vmatpush2.xpose.msra.mxu0 0.0
        %3621 = vmatprep.subr.mxu0 0.0
        %3622 = vmatpush2.xpose.msra.mxu0 0.0
        %3623 = vmatprep.subr.mxu0 0.0
        %3624 = vmatpush2.xpose.msra.mxu0 0.0
        %3625 = vmatprep.subr.mxu0 0.0
        %3626 = vmatpush2.xpose.msra.mxu0 0.0
        %3627 = vmatprep.subr.mxu0 0.0
        %3628 = vmatpush2.xpose.msra.mxu0 0.0
        %3629 = vmatprep.subr.mxu0 0.0
        %3630 = vmatpush2.xpose.msra.mxu0 0.0
        %3631 = vmatprep.subr.mxu0 0.0
        %3632 = vmatpush2.xpose.msra.mxu0 0.0
        %3633 = vmatprep.subr.mxu0 0.0
        %3634 = vmatpush2.xpose.msra.mxu0 0.0
        %3635 = vmatprep.subr.mxu0 0.0
        %3636 = vmatpush2.xpose.msra.mxu0 0.0
        %3637 = vmatprep.subr.mxu0 0.0
        %3638 = vmatpush2.xpose.msra.mxu0 0.0
        %3639 = vmatprep.subr.mxu0 0.0
        %3640 = vmatpush2.xpose.msra.mxu0 0.0
        %3641 = vmatprep.subr.mxu0 0.0
        %3642 = vmatpush2.xpose.msra.mxu0 0.0
        %3643 = vmatprep.mubr.f32.mxu0 0.0
        %3644 = vmatmul.mubr.f32.gmra.mxu0 %v3575
        %v3645 = vpop.f32.mrf.mxu0
        %v3646 = vadd.f32 0.0, %v3645
        %v3647 = vpop.f32.mrf.mxu0
        %3648 = vdwg.mxu0
        %v3649 = vsel %vm1138, %v3646, -inf
        %3650 = vmax.xlane.f32.xlu0 %v3649
        %v3651 = vpop.xlane.xlu0 %3650
        %v3652 = vsub.f32 %v3646, %v3651
        %v3653 = vmul.f32 %v3652, 1.442695
        %v3654 = vpow.pop %v3653
        %v3655 = vsel %vm1138, %v3654, 0.0
        %3656 = vadd.xlane.f32.xlu0 %v3655
        %v3657 = vpop.xlane.xlu0 %3656
        %v3658 = vrcp.pop %v3657
        %v3659 = vmul.f32 %v3654, %v3658
        %3660 = vrot.lane.b32.xlu0 %v1058, 16
        %v3661 = vpop.permute.xlu0 %3660
        %v3664 = vsel %vm1138, %v3659, 0
        %3666 = vmatprep.subr.mxu0 0.0
        %3667 = vmatpush1.msra.mxu0 0.0
        %3668 = vmatprep.subr.mxu0 0.0
        %3669 = vmatpush1.msra.mxu0 0.0
        %3670 = vmatprep.subr.mxu0 0.0
        %3671 = vmatpush1.msra.mxu0 0.0
        %3672 = vmatprep.subr.mxu0 0.0
        %3673 = vmatpush1.msra.mxu0 0.0
        %3674 = vmatprep.subr.mxu0 0.0
        %3675 = vmatpush1.msra.mxu0 0.0
        %3676 = vmatprep.subr.mxu0 0.0
        %3677 = vmatpush1.msra.mxu0 0.0
        %3678 = vmatprep.subr.mxu0 0.0
        %3679 = vmatpush1.msra.mxu0 0.0
        %3680 = vmatprep.subr.mxu0 0.0
        %3681 = vmatpush1.msra.mxu0 0.0
        %3682 = vmatprep.subr.mxu0 0.0
        %3683 = vmatpush1.msra.mxu0 0.0
        %3684 = vmatprep.subr.mxu0 0.0
        %3685 = vmatpush1.msra.mxu0 0.0
        %3686 = vmatprep.subr.mxu0 0.0
        %3687 = vmatpush1.msra.mxu0 0.0
        %3688 = vmatprep.subr.mxu0 0.0
        %3689 = vmatpush1.msra.mxu0 0.0
        %3690 = vmatprep.subr.mxu0 0.0
        %3691 = vmatpush1.msra.mxu0 0.0
        %3692 = vmatprep.subr.mxu0 0.0
        %3693 = vmatpush1.msra.mxu0 0.0
        %3694 = vmatprep.subr.mxu0 0.0
        %3695 = vmatpush1.msra.mxu0 0.0
        %3696 = vmatprep.subr.mxu0 0.0
        %3697 = vmatpush1.msra.mxu0 %v3661
        %3698 = vmatprep.subr.mxu0 0.0
        %3699 = vmatpush2.msra.mxu0 0.0
        %3700 = vmatprep.subr.mxu0 0.0
        %3701 = vmatpush2.msra.mxu0 0.0
        %3702 = vmatprep.subr.mxu0 0.0
        %3703 = vmatpush2.msra.mxu0 0.0
        %3704 = vmatprep.subr.mxu0 0.0
        %3705 = vmatpush2.msra.mxu0 0.0
        %3706 = vmatprep.subr.mxu0 0.0
        %3707 = vmatpush2.msra.mxu0 0.0
        %3708 = vmatprep.subr.mxu0 0.0
        %3709 = vmatpush2.msra.mxu0 0.0
        %3710 = vmatprep.subr.mxu0 0.0
        %3711 = vmatpush2.msra.mxu0 0.0
        %3712 = vmatprep.subr.mxu0 0.0
        %3713 = vmatpush2.msra.mxu0 0.0
        %3714 = vmatprep.subr.mxu0 0.0
        %3715 = vmatpush2.msra.mxu0 0.0
        %3716 = vmatprep.subr.mxu0 0.0
        %3717 = vmatpush2.msra.mxu0 0.0
        %3718 = vmatprep.subr.mxu0 0.0
        %3719 = vmatpush2.msra.mxu0 0.0
        %3720 = vmatprep.subr.mxu0 0.0
        %3721 = vmatpush2.msra.mxu0 0.0
        %3722 = vmatprep.subr.mxu0 0.0
        %3723 = vmatpush2.msra.mxu0 0.0
        %3724 = vmatprep.subr.mxu0 0.0
        %3725 = vmatpush2.msra.mxu0 0.0
        %3726 = vmatprep.subr.mxu0 0.0
        %3727 = vmatpush2.msra.mxu0 0.0
        %3728 = vmatprep.subr.mxu0 0.0
        %3729 = vmatpush2.msra.mxu0 0.0
        %3730 = vmatprep.mubr.f32.mxu0 0.0
        %3731 = vmatmul.mubr.f32.gmra.mxu0 %v3664
        %v3732 = vpop.f32.mrf.mxu0
        %v3733 = vadd.f32 0.0, %v3732
        %v3734 = vpop.f32.mrf.mxu0
        %3735 = vdwg.mxu0
        %3737 = vrot.lane.b32.xlu0 %v2743, 16
        %v3738 = vpop.permute.xlu0 %3737
        %3741 = vrot.lane.b32.xlu0 %v2908, 32
        %v3742 = vpop.permute.xlu0 %3741
        %3745 = vrot.lane.b32.xlu0 %v3073, 48
        %v3746 = vpop.permute.xlu0 %3745
        %3749 = vrot.lane.b32.xlu0 %v3238, 64
        %v3750 = vpop.permute.xlu0 %3749
        %3753 = vrot.lane.b32.xlu0 %v3403, 80
        %v3754 = vpop.permute.xlu0 %3753
        %3757 = vrot.lane.b32.xlu0 %v3568, 96
        %v3758 = vpop.permute.xlu0 %3757
        %3761 = vrot.lane.b32.xlu0 %v3733, 112
        %v3762 = vpop.permute.xlu0 %3761
        %v3764 = vsel %vm1061, %v2577, %v3738
        %v3765 = vsel %vm2408, %v3764, %v3742
        %v3766 = vsel %vm2410, %v3765, %v3746
        %v3767 = vsel %vm2412, %v3766, %v3750
        %v3768 = vsel %vm2414, %v3767, %v3754
        %v3769 = vsel %vm2416, %v3768, %v3758
        %v3770 = vsel %vm2418, %v3769, %v3762
        %v3771 = vld [vmem:[%s653] sm:$0xff]
        %v3772 = vld [vmem:[%s653 + $0x8] sm:$0xff]
        %v3773 = vld [vmem:[%s653 + $0x10] sm:$0xff]
        %v3774 = vld [vmem:[%s653 + $0x18] sm:$0xff]
        %v3775 = vld [vmem:[%s653 + $0x20] sm:$0xff]
        %v3776 = vld [vmem:[%s653 + $0x28] sm:$0xff]
        %v3777 = vld [vmem:[%s653 + $0x30] sm:$0xff]
        %v3778 = vld [vmem:[%s653 + $0x38] sm:$0xff]
        %v3779 = vld [vmem:[%s653 + $0x40] sm:$0xff]
        %v3780 = vld [vmem:[%s653 + $0x48] sm:$0xff]
        %v3781 = vld [vmem:[%s653 + $0x50] sm:$0xff]
        %v3782 = vld [vmem:[%s653 + $0x58] sm:$0xff]
        %v3783 = vld [vmem:[%s653 + $0x60] sm:$0xff]
        %v3784 = vld [vmem:[%s653 + $0x68] sm:$0xff]
        %v3785 = vld [vmem:[%s653 + $0x70] sm:$0xff]
        %v3786 = vld [vmem:[%s653 + $0x78] sm:$0xff]
        %3787 = vmatprep.subr.mxu0 0.0
        %3788 = vmatpush1.msra.mxu0 %v3786
        %3789 = vmatprep.subr.mxu0 0.0
        %3790 = vmatpush1.msra.mxu0 %v3785
        %3791 = vmatprep.subr.mxu0 0.0
        %3792 = vmatpush1.msra.mxu0 %v3784
        %3793 = vmatprep.subr.mxu0 0.0
        %3794 = vmatpush1.msra.mxu0 %v3783
        %3795 = vmatprep.subr.mxu0 0.0
        %3796 = vmatpush1.msra.mxu0 %v3782
        %3797 = vmatprep.subr.mxu0 0.0
        %3798 = vmatpush1.msra.mxu0 %v3781
        %3799 = vmatprep.subr.mxu0 0.0
        %3800 = vmatpush1.msra.mxu0 %v3780
        %3801 = vmatprep.subr.mxu0 0.0
        %3802 = vmatpush1.msra.mxu0 %v3779
        %3803 = vmatprep.subr.mxu0 0.0
        %3804 = vmatpush1.msra.mxu0 %v3778
        %3805 = vmatprep.subr.mxu0 0.0
        %3806 = vmatpush1.msra.mxu0 %v3777
        %3807 = vmatprep.subr.mxu0 0.0
        %3808 = vmatpush1.msra.mxu0 %v3776
        %3809 = vmatprep.subr.mxu0 0.0
        %3810 = vmatpush1.msra.mxu0 %v3775
        %3811 = vmatprep.subr.mxu0 0.0
        %3812 = vmatpush1.msra.mxu0 %v3774
        %3813 = vmatprep.subr.mxu0 0.0
        %3814 = vmatpush1.msra.mxu0 %v3773
        %3815 = vmatprep.subr.mxu0 0.0
        %3816 = vmatpush1.msra.mxu0 %v3772
        %3817 = vmatprep.subr.mxu0 0.0
        %3818 = vmatpush1.msra.mxu0 %v3771
        %3819 = vmatprep.subr.mxu0 0.0
        %3820 = vmatpush2.msra.mxu0 0.0
        %3821 = vmatprep.subr.mxu0 0.0
        %3822 = vmatpush2.msra.mxu0 0.0
        %3823 = vmatprep.subr.mxu0 0.0
        %3824 = vmatpush2.msra.mxu0 0.0
        %3825 = vmatprep.subr.mxu0 0.0
        %3826 = vmatpush2.msra.mxu0 0.0
        %3827 = vmatprep.subr.mxu0 0.0
        %3828 = vmatpush2.msra.mxu0 0.0
        %3829 = vmatprep.subr.mxu0 0.0
        %3830 = vmatpush2.msra.mxu0 0.0
        %3831 = vmatprep.subr.mxu0 0.0
        %3832 = vmatpush2.msra.mxu0 0.0
        %3833 = vmatprep.subr.mxu0 0.0
        %3834 = vmatpush2.msra.mxu0 0.0
        %3835 = vmatprep.subr.mxu0 0.0
        %3836 = vmatpush2.msra.mxu0 0.0
        %3837 = vmatprep.subr.mxu0 0.0
        %3838 = vmatpush2.msra.mxu0 0.0
        %3839 = vmatprep.subr.mxu0 0.0
        %3840 = vmatpush2.msra.mxu0 0.0
        %3841 = vmatprep.subr.mxu0 0.0
        %3842 = vmatpush2.msra.mxu0 0.0
        %3843 = vmatprep.subr.mxu0 0.0
        %3844 = vmatpush2.msra.mxu0 0.0
        %3845 = vmatprep.subr.mxu0 0.0
        %3846 = vmatpush2.msra.mxu0 0.0
        %3847 = vmatprep.subr.mxu0 0.0
        %3848 = vmatpush2.msra.mxu0 0.0
        %3849 = vmatprep.subr.mxu0 0.0
        %3850 = vmatpush2.msra.mxu0 0.0
        %3851 = vmatprep.mubr.f32.mxu0 0.0
        %3852 = vmatmul.mubr.f32.gmra.mxu0 %v2419
        %v3853 = vpop.f32.mrf.mxu0
        %v3854 = vadd.f32 %v782, %v3853
        %v3855 = vpop.f32.mrf.mxu0
        %3856 = vmatprep.mubr.f32.mxu0 0.0
        %3857 = vmatmul.mubr.f32.gmra.mxu0 %v3770
        %v3858 = vpop.f32.mrf.mxu0
        %v3859 = vadd.f32 %v783, %v3858
        %v3860 = vpop.f32.mrf.mxu0
        %3861 = vdwg.mxu0
        %v3862 = vld [vmem:[%s763] sm:$0x1]
        %v3863 = vld [vmem:[%s766] sm:$0x1]
        %3864 = vadd.xlane.f32.xlu0 %v3854
        %v3865 = vpop.xlane.xlu0 %3864
        %3866 = vadd.xlane.f32.xlu0 %v3859
        %v3867 = vpop.xlane.xlu0 %3866
        %v3868 = vrcp.pop 128.0
        %v3869 = vmul.f32 %v3865, %v3868
        %v3870 = vmul.f32 %v3867, %v3868
        %v3871 = vsub.f32 %v3854, %v3869
        %v3872 = vsub.f32 %v3859, %v3870
        %v3873 = vmul.f32 %v3871, %v3871
        %v3874 = vmul.f32 %v3872, %v3872
        %3875 = vadd.xlane.f32.xlu0 %v3873
        %v3876 = vpop.xlane.xlu0 %3875
        %3877 = vadd.xlane.f32.xlu0 %v3874
        %v3878 = vpop.xlane.xlu0 %3877
        %v3879 = vmul.f32 %v3876, %v3868
        %v3880 = vmul.f32 %v3878, %v3868
        %v3881 = vadd.f32 %v3879, 1e-06
        %v3882 = vadd.f32 %v3880, 1e-06
        %v3883 = vrsqrt.pop %v3881
        %v3884 = vrsqrt.pop %v3882
        %v3885 = vmul.f32 %v3871, %v3883
        %v3886 = vmul.f32 %v3872, %v3884
        %v3888 = vlaneseq
        %v3889 = vshrl.u32 %v3888, 7
        %v3890 = vsub.s32 0, %v3889
        %v3891 = vrot.slane %v3862, %v3890
        %v3893 = vmul.f32 %v3885, %v3891
        %v3894 = vmul.f32 %v3886, %v3891
        %v3896 = vlaneseq
        %v3897 = vshrl.u32 %v3896, 7
        %v3898 = vsub.s32 0, %v3897
        %v3899 = vrot.slane %v3863, %v3898
        %v3901 = vadd.f32 %v3893, %v3899
        %v3902 = vadd.f32 %v3894, %v3899
        %v3903 = vld [vmem:[%s662] sm:$0xff]
        %v3904 = vld [vmem:[%s662 + $0x8] sm:$0xff]
        %v3905 = vld [vmem:[%s662 + $0x10] sm:$0xff]
        %v3906 = vld [vmem:[%s662 + $0x18] sm:$0xff]
        %v3907 = vld [vmem:[%s662 + $0x20] sm:$0xff]
        %v3908 = vld [vmem:[%s662 + $0x28] sm:$0xff]
        %v3909 = vld [vmem:[%s662 + $0x30] sm:$0xff]
        %v3910 = vld [vmem:[%s662 + $0x38] sm:$0xff]
        %v3911 = vld [vmem:[%s662 + $0x40] sm:$0xff]
        %v3912 = vld [vmem:[%s662 + $0x48] sm:$0xff]
        %v3913 = vld [vmem:[%s662 + $0x50] sm:$0xff]
        %v3914 = vld [vmem:[%s662 + $0x58] sm:$0xff]
        %v3915 = vld [vmem:[%s662 + $0x60] sm:$0xff]
        %v3916 = vld [vmem:[%s662 + $0x68] sm:$0xff]
        %v3917 = vld [vmem:[%s662 + $0x70] sm:$0xff]
        %v3918 = vld [vmem:[%s662 + $0x78] sm:$0xff]
        %v3919 = vld [vmem:[%s662 + $0x80] sm:$0xff]
        %v3920 = vld [vmem:[%s662 + $0x88] sm:$0xff]
        %v3921 = vld [vmem:[%s662 + $0x90] sm:$0xff]
        %v3922 = vld [vmem:[%s662 + $0x98] sm:$0xff]
        %v3923 = vld [vmem:[%s662 + $0xa0] sm:$0xff]
        %v3924 = vld [vmem:[%s662 + $0xa8] sm:$0xff]
        %v3925 = vld [vmem:[%s662 + $0xb0] sm:$0xff]
        %v3926 = vld [vmem:[%s662 + $0xb8] sm:$0xff]
        %v3927 = vld [vmem:[%s662 + $0xc0] sm:$0xff]
        %v3928 = vld [vmem:[%s662 + $0xc8] sm:$0xff]
        %v3929 = vld [vmem:[%s662 + $0xd0] sm:$0xff]
        %v3930 = vld [vmem:[%s662 + $0xd8] sm:$0xff]
        %v3931 = vld [vmem:[%s662 + $0xe0] sm:$0xff]
        %v3932 = vld [vmem:[%s662 + $0xe8] sm:$0xff]
        %v3933 = vld [vmem:[%s662 + $0xf0] sm:$0xff]
        %v3934 = vld [vmem:[%s662 + $0xf8] sm:$0xff]
        %3935 = vmatprep.subr.mxu0 %v3934
        %3936 = vmatpush1.msra.mxu0 %v3933
        %3937 = vmatprep.subr.mxu0 %v3932
        %3938 = vmatpush1.msra.mxu0 %v3931
        %3939 = vmatprep.subr.mxu0 %v3930
        %3940 = vmatpush1.msra.mxu0 %v3929
        %3941 = vmatprep.subr.mxu0 %v3928
        %3942 = vmatpush1.msra.mxu0 %v3927
        %3943 = vmatprep.subr.mxu0 %v3926
        %3944 = vmatpush1.msra.mxu0 %v3925
        %3945 = vmatprep.subr.mxu0 %v3924
        %3946 = vmatpush1.msra.mxu0 %v3923
        %3947 = vmatprep.subr.mxu0 %v3922
        %3948 = vmatpush1.msra.mxu0 %v3921
        %3949 = vmatprep.subr.mxu0 %v3920
        %3950 = vmatpush1.msra.mxu0 %v3919
        %3951 = vmatprep.subr.mxu0 %v3918
        %3952 = vmatpush1.msra.mxu0 %v3917
        %3953 = vmatprep.subr.mxu0 %v3916
        %3954 = vmatpush1.msra.mxu0 %v3915
        %3955 = vmatprep.subr.mxu0 %v3914
        %3956 = vmatpush1.msra.mxu0 %v3913
        %3957 = vmatprep.subr.mxu0 %v3912
        %3958 = vmatpush1.msra.mxu0 %v3911
        %3959 = vmatprep.subr.mxu0 %v3910
        %3960 = vmatpush1.msra.mxu0 %v3909
        %3961 = vmatprep.subr.mxu0 %v3908
        %3962 = vmatpush1.msra.mxu0 %v3907
        %3963 = vmatprep.subr.mxu0 %v3906
        %3964 = vmatpush1.msra.mxu0 %v3905
        %3965 = vmatprep.subr.mxu0 %v3904
        %3966 = vmatpush1.msra.mxu0 %v3903
        %3967 = vmatprep.subr.mxu0 0.0
        %3968 = vmatpush2.msra.mxu0 0.0
        %3969 = vmatprep.subr.mxu0 0.0
        %3970 = vmatpush2.msra.mxu0 0.0
        %3971 = vmatprep.subr.mxu0 0.0
        %3972 = vmatpush2.msra.mxu0 0.0
        %3973 = vmatprep.subr.mxu0 0.0
        %3974 = vmatpush2.msra.mxu0 0.0
        %3975 = vmatprep.subr.mxu0 0.0
        %3976 = vmatpush2.msra.mxu0 0.0
        %3977 = vmatprep.subr.mxu0 0.0
        %3978 = vmatpush2.msra.mxu0 0.0
        %3979 = vmatprep.subr.mxu0 0.0
        %3980 = vmatpush2.msra.mxu0 0.0
        %3981 = vmatprep.subr.mxu0 0.0
        %3982 = vmatpush2.msra.mxu0 0.0
        %3983 = vmatprep.subr.mxu0 0.0
        %3984 = vmatpush2.msra.mxu0 0.0
        %3985 = vmatprep.subr.mxu0 0.0
        %3986 = vmatpush2.msra.mxu0 0.0
        %3987 = vmatprep.subr.mxu0 0.0
        %3988 = vmatpush2.msra.mxu0 0.0
        %3989 = vmatprep.subr.mxu0 0.0
        %3990 = vmatpush2.msra.mxu0 0.0
        %3991 = vmatprep.subr.mxu0 0.0
        %3992 = vmatpush2.msra.mxu0 0.0
        %3993 = vmatprep.subr.mxu0 0.0
        %3994 = vmatpush2.msra.mxu0 0.0
        %3995 = vmatprep.subr.mxu0 0.0
        %3996 = vmatpush2.msra.mxu0 0.0
        %3997 = vmatprep.subr.mxu0 0.0
        %3998 = vmatpush2.msra.mxu0 0.0
        %3999 = vmatprep.mubr.f32.mxu0 0.0
        %4000 = vmatmul.mubr.f32.gmra.mxu0 %v3901
        %v4001 = vpop.f32.mrf.mxu0
        %v4002 = vadd.f32 0.0, %v4001
        %v4003 = vpop.f32.mrf.mxu0
        %v4004 = vadd.f32 0.0, %v4003
        %4005 = vmatprep.mubr.f32.mxu0 0.0
        %4006 = vmatmul.mubr.f32.gmra.mxu0 %v3902
        %v4007 = vpop.f32.mrf.mxu0
        %v4008 = vadd.f32 0.0, %v4007
        %v4009 = vpop.f32.mrf.mxu0
        %v4010 = vadd.f32 0.0, %v4009
        %4011 = vdwg.mxu0
        %p4012 = scmp.eq.s32.totalorder %s46, 1
        // Predicated region
        $region105: #{tpu_custom_call.1} parent=67 // pred_check
          %p4013 = pneg %p4012
        $region106: #{tpu_custom_call.1} parent=67 // pred_check_branch
          %4015 = sbr.rel (%p4013) target = $region108
        $region107: #{tpu_custom_call.1} parent=67 // pred_region
          %v4016 = vtanh.pop %v4002
          %v4017 = vtanh.pop %v4004
          %v4018 = vtanh.pop %v4008
          %v4019 = vtanh.pop %v4010
          %4020 = vst [vmem:[#allocation2] sm:$0xff] %v4016
          %4021 = vst [vmem:[#allocation2 + $0x8] sm:$0xff] %v4017
          %4022 = vst [vmem:[#allocation2 + $0x10] sm:$0xff] %v4018
          %4023 = vst [vmem:[#allocation2 + $0x18] sm:$0xff] %v4019
        $region108: #{tpu_custom_call.1} parent=67 // pred_fallthru
          _
        %p4024 = scmp.ne.s32.totalorder %s46, 1
        // Predicated region
        $region109: #{tpu_custom_call.1} parent=67 // pred_check
          %p4025 = pneg %p4024
        $region110: #{tpu_custom_call.1} parent=67 // pred_check_branch
          %4027 = sbr.rel (%p4025) target = $region112
        $region111: #{tpu_custom_call.1} parent=67 // pred_region
          %v4028 = vmax.f32 %v4002, 0.0
          %v4029 = vmax.f32 %v4004, 0.0
          %v4030 = vmax.f32 %v4008, 0.0
          %v4031 = vmax.f32 %v4010, 0.0
          %4032 = vst [vmem:[#allocation2] sm:$0xff] %v4028
          %4033 = vst [vmem:[#allocation2 + $0x8] sm:$0xff] %v4029
          %4034 = vst [vmem:[#allocation2 + $0x10] sm:$0xff] %v4030
          %4035 = vst [vmem:[#allocation2 + $0x18] sm:$0xff] %v4031
        $region112: #{tpu_custom_call.1} parent=67 // pred_fallthru
          _
        %v4036 = vld [vmem:[#allocation2] sm:$0xff]
        %v4037 = vld [vmem:[#allocation2 + $0x8] sm:$0xff]
        %v4038 = vld [vmem:[#allocation2 + $0x10] sm:$0xff]
        %v4039 = vld [vmem:[#allocation2 + $0x18] sm:$0xff]
        %v4040 = vld [vmem:[%s671] sm:$0xff]
        %v4041 = vld [vmem:[%s671 + $0x8] sm:$0xff]
        %v4042 = vld [vmem:[%s671 + $0x10] sm:$0xff]
        %v4043 = vld [vmem:[%s671 + $0x18] sm:$0xff]
        %v4044 = vld [vmem:[%s671 + $0x20] sm:$0xff]
        %v4045 = vld [vmem:[%s671 + $0x28] sm:$0xff]
        %v4046 = vld [vmem:[%s671 + $0x30] sm:$0xff]
        %v4047 = vld [vmem:[%s671 + $0x38] sm:$0xff]
        %v4048 = vld [vmem:[%s671 + $0x40] sm:$0xff]
        %v4049 = vld [vmem:[%s671 + $0x48] sm:$0xff]
        %v4050 = vld [vmem:[%s671 + $0x50] sm:$0xff]
        %v4051 = vld [vmem:[%s671 + $0x58] sm:$0xff]
        %v4052 = vld [vmem:[%s671 + $0x60] sm:$0xff]
        %v4053 = vld [vmem:[%s671 + $0x68] sm:$0xff]
        %v4054 = vld [vmem:[%s671 + $0x70] sm:$0xff]
        %v4055 = vld [vmem:[%s671 + $0x78] sm:$0xff]
        %v4056 = vld [vmem:[%s671 + $0x80] sm:$0xff]
        %v4057 = vld [vmem:[%s671 + $0x88] sm:$0xff]
        %v4058 = vld [vmem:[%s671 + $0x90] sm:$0xff]
        %v4059 = vld [vmem:[%s671 + $0x98] sm:$0xff]
        %v4060 = vld [vmem:[%s671 + $0xa0] sm:$0xff]
        %v4061 = vld [vmem:[%s671 + $0xa8] sm:$0xff]
        %v4062 = vld [vmem:[%s671 + $0xb0] sm:$0xff]
        %v4063 = vld [vmem:[%s671 + $0xb8] sm:$0xff]
        %v4064 = vld [vmem:[%s671 + $0xc0] sm:$0xff]
        %v4065 = vld [vmem:[%s671 + $0xc8] sm:$0xff]
        %v4066 = vld [vmem:[%s671 + $0xd0] sm:$0xff]
        %v4067 = vld [vmem:[%s671 + $0xd8] sm:$0xff]
        %v4068 = vld [vmem:[%s671 + $0xe0] sm:$0xff]
        %v4069 = vld [vmem:[%s671 + $0xe8] sm:$0xff]
        %v4070 = vld [vmem:[%s671 + $0xf0] sm:$0xff]
        %v4071 = vld [vmem:[%s671 + $0xf8] sm:$0xff]
        %4072 = vmatprep.subr.mxu0 0.0
        %4073 = vmatpush1.msra.mxu0 %v4055
        %4074 = vmatprep.subr.mxu0 0.0
        %4075 = vmatpush1.msra.mxu0 %v4054
        %4076 = vmatprep.subr.mxu0 0.0
        %4077 = vmatpush1.msra.mxu0 %v4053
        %4078 = vmatprep.subr.mxu0 0.0
        %4079 = vmatpush1.msra.mxu0 %v4052
        %4080 = vmatprep.subr.mxu0 0.0
        %4081 = vmatpush1.msra.mxu0 %v4051
        %4082 = vmatprep.subr.mxu0 0.0
        %4083 = vmatpush1.msra.mxu0 %v4050
        %4084 = vmatprep.subr.mxu0 0.0
        %4085 = vmatpush1.msra.mxu0 %v4049
        %4086 = vmatprep.subr.mxu0 0.0
        %4087 = vmatpush1.msra.mxu0 %v4048
        %4088 = vmatprep.subr.mxu0 0.0
        %4089 = vmatpush1.msra.mxu0 %v4047
        %4090 = vmatprep.subr.mxu0 0.0
        %4091 = vmatpush1.msra.mxu0 %v4046
        %4092 = vmatprep.subr.mxu0 0.0
        %4093 = vmatpush1.msra.mxu0 %v4045
        %4094 = vmatprep.subr.mxu0 0.0
        %4095 = vmatpush1.msra.mxu0 %v4044
        %4096 = vmatprep.subr.mxu0 0.0
        %4097 = vmatpush1.msra.mxu0 %v4043
        %4098 = vmatprep.subr.mxu0 0.0
        %4099 = vmatpush1.msra.mxu0 %v4042
        %4100 = vmatprep.subr.mxu0 0.0
        %4101 = vmatpush1.msra.mxu0 %v4041
        %4102 = vmatprep.subr.mxu0 0.0
        %4103 = vmatpush1.msra.mxu0 %v4040
        %4104 = vmatprep.subr.mxu0 0.0
        %4105 = vmatpush2.msra.mxu0 %v4071
        %4106 = vmatprep.subr.mxu0 0.0
        %4107 = vmatpush2.msra.mxu0 %v4070
        %4108 = vmatprep.subr.mxu0 0.0
        %4109 = vmatpush2.msra.mxu0 %v4069
        %4110 = vmatprep.subr.mxu0 0.0
        %4111 = vmatpush2.msra.mxu0 %v4068
        %4112 = vmatprep.subr.mxu0 0.0
        %4113 = vmatpush2.msra.mxu0 %v4067
        %4114 = vmatprep.subr.mxu0 0.0
        %4115 = vmatpush2.msra.mxu0 %v4066
        %4116 = vmatprep.subr.mxu0 0.0
        %4117 = vmatpush2.msra.mxu0 %v4065
        %4118 = vmatprep.subr.mxu0 0.0
        %4119 = vmatpush2.msra.mxu0 %v4064
        %4120 = vmatprep.subr.mxu0 0.0
        %4121 = vmatpush2.msra.mxu0 %v4063
        %4122 = vmatprep.subr.mxu0 0.0
        %4123 = vmatpush2.msra.mxu0 %v4062
        %4124 = vmatprep.subr.mxu0 0.0
        %4125 = vmatpush2.msra.mxu0 %v4061
        %4126 = vmatprep.subr.mxu0 0.0
        %4127 = vmatpush2.msra.mxu0 %v4060
        %4128 = vmatprep.subr.mxu0 0.0
        %4129 = vmatpush2.msra.mxu0 %v4059
        %4130 = vmatprep.subr.mxu0 0.0
        %4131 = vmatpush2.msra.mxu0 %v4058
        %4132 = vmatprep.subr.mxu0 0.0
        %4133 = vmatpush2.msra.mxu0 %v4057
        %4134 = vmatprep.subr.mxu0 0.0
        %4135 = vmatpush2.msra.mxu0 %v4056
        %4136 = vmatprep.mubr.f32.mxu0 %v4037
        %4137 = vmatmul.mubr.f32.gmra.mxu0 %v4036
        %v4138 = vpop.f32.mrf.mxu0
        %v4139 = vadd.f32 %v3901, %v4138
        %v4140 = vpop.f32.mrf.mxu0
        %4141 = vmatprep.mubr.f32.mxu0 %v4039
        %4142 = vmatmul.mubr.f32.gmra.mxu0 %v4038
        %v4143 = vpop.f32.mrf.mxu0
        %v4144 = vadd.f32 %v3902, %v4143
        %v4145 = vpop.f32.mrf.mxu0
        %4146 = vdwg.mxu0
        %v4147 = vld [vmem:[%s769] sm:$0x1]
        %v4148 = vld [vmem:[%s772] sm:$0x1]
        %4149 = vadd.xlane.f32.xlu0 %v4139
        %v4150 = vpop.xlane.xlu0 %4149
        %4151 = vadd.xlane.f32.xlu0 %v4144
        %v4152 = vpop.xlane.xlu0 %4151
        %v4153 = vmul.f32 %v4150, %v3868
        %v4154 = vmul.f32 %v4152, %v3868
        %v4155 = vsub.f32 %v4139, %v4153
        %v4156 = vsub.f32 %v4144, %v4154
        %v4157 = vmul.f32 %v4155, %v4155
        %v4158 = vmul.f32 %v4156, %v4156
        %4159 = vadd.xlane.f32.xlu0 %v4157
        %v4160 = vpop.xlane.xlu0 %4159
        %4161 = vadd.xlane.f32.xlu0 %v4158
        %v4162 = vpop.xlane.xlu0 %4161
        %v4163 = vmul.f32 %v4160, %v3868
        %v4164 = vmul.f32 %v4162, %v3868
        %v4165 = vadd.f32 %v4163, 1e-06
        %v4166 = vadd.f32 %v4164, 1e-06
        %v4167 = vrsqrt.pop %v4165
        %v4168 = vrsqrt.pop %v4166
        %v4169 = vmul.f32 %v4155, %v4167
        %v4170 = vmul.f32 %v4156, %v4168
        %v4172 = vlaneseq
        %v4173 = vshrl.u32 %v4172, 7
        %v4174 = vsub.s32 0, %v4173
        %v4175 = vrot.slane %v4147, %v4174
        %v4177 = vmul.f32 %v4169, %v4175
        %v4178 = vmul.f32 %v4170, %v4175
        %v4180 = vlaneseq
        %v4181 = vshrl.u32 %v4180, 7
        %v4182 = vsub.s32 0, %v4181
        %v4183 = vrot.slane %v4148, %v4182
        %v4185 = vadd.f32 %v4177, %v4183
        %v4186 = vadd.f32 %v4178, %v4183
        %4187 = vst [vmem:[%s758] sm:$0xff] %v4185
        %4188 = vst [vmem:[%s758 + $0x8] sm:$0xff] %v4186
        %s4189 = sand.u32 %s373, 1
        %s4190 = scalar_lea.sflag [#allocation5], %s4189
        %s4191 = sand.u32 %s373, 1
        %s4192 = smul.addr %s4191, 16
        %s4193 = scalar_lea.vmem [#allocation17], %s4192
        // Predicated region
        $region113: #{tpu_custom_call.1} parent=67 // pred_check
          %p4194 = pneg %p383
        $region114: #{tpu_custom_call.1} parent=67 // pred_check_branch
          %4196 = sbr.rel (%p4194) target = $region116
        $region115: #{tpu_custom_call.1} parent=67 // pred_region
          %s4197 = smul.u32 2, %s45
          %s4199 = ssub.s32 256, 256
          %4200 = vsyncadd %s4190, %s4199
          %s4201 = smul.addr %s4197, 128
          %s4202 = scalar_lea.hbm %s12, %s4201
          %s4203 = sshll.u32 %s4193, 4
          %s4204 = int_to_ptr.vmem [resolvable:$true] %s4203
          %4209 = dma.vmem_to_hbm [thread:$0]  %s4204, 256, %s4202, %s4190, 128, 128, 8
        $region116: #{tpu_custom_call.1} parent=67 // pred_fallthru
          _
      $region68: #{tpu_custom_call.1} parent=5 // pred_fallthru
        _
      %p4210 = scmp.le.s32.totalorder 2, %s36
      // Predicated region
      $region117: #{tpu_custom_call.1} parent=5 // pred_check
        %p4211 = pneg %p4210
      $region118: #{tpu_custom_call.1} parent=5 // pred_check_branch
        %4213 = sbr.rel (%p4211) target = $region120
      $region119: #{tpu_custom_call.1} parent=5 // pred_region
        %s4214 = ssub.s32 %s36, 2
        // Predicated region
        $region121: #{tpu_custom_call.1} parent=119 // pred_check
          %p4215 = pneg %p389
        $region122: #{tpu_custom_call.1} parent=119 // pred_check_branch
          %4217 = sbr.rel (%p4215) target = $region124
        $region123: #{tpu_custom_call.1} parent=119 // pred_region
          %s4218 = sand.u32 %s374, 1
          %s4219 = scalar_lea.sflag [#allocation5], %s4218
          %s4220 = sand.u32 %s374, 1
          %s4221 = smul.addr %s4220, 16
          %s4222 = scalar_lea.vmem [#allocation17], %s4221
          %4223 = dma.done %s4219, 256
        $region124: #{tpu_custom_call.1} parent=119 // pred_fallthru
          _
      $region120: #{tpu_custom_call.1} parent=5 // pred_fallthru
        _
    $region6: #{tpu_custom_call.1} parent=1 // loop_footer
      %s40 = sadd.s32 1, %s36
    $region7: #{tpu_custom_call.1} parent=1 // loop_footer_branch
      %35 = sbr.rel target = $region3
    $region8: #{tpu_custom_call.1} parent=1 // loop_exit
      _
    %4224 = vsyncpa [#allocation4], 1
    %s4225 = scalar_lea.sflag [#allocation4], 1
    %4226 = vsyncpa %s4225, 1
    %4227 = vsyncpa [#allocation7], 1
    %s4228 = scalar_lea.sflag [#allocation7], 1
    %4229 = vsyncpa %s4228, 1
    %4230 = vsyncpa [#allocation10], 1
    %s4231 = scalar_lea.sflag [#allocation10], 1
    %4232 = vsyncpa %s4231, 1
    %4233 = vsyncpa [#allocation13], 1
    %s4234 = scalar_lea.sflag [#allocation13], 1
    %4235 = vsyncpa %s4234, 1
    %4236 = vsyncpa [#allocation16], 1
    %s4237 = scalar_lea.sflag [#allocation16], 1
    %4238 = vsyncpa %s4237, 1
    %4239 = vsyncpa [#allocation5], 1
    %s4240 = scalar_lea.sflag [#allocation5], 1
    %4241 = vsyncpa %s4240, 1

</llo_original>
